<compile_context>
chip_gen: v7x
topology: tpu7x:2x2x1
jax: 0.10.0
libtpu: 0.0.40
codegen_flags: <defaults>
</compile_context>

<pallas_src>
import jax
import jax.numpy as jnp
from jax import lax
from jax.experimental import pallas as pl
from jax.experimental.pallas import tpu as pltpu

EPS = 1e-5
CIN = 50      # conv1 input channels
CMID = 100    # conv output channels
KSZ = 10      # conv kernel size
L_IN = 224    # input length (fixed: gives 600 flattened features for fc_*1)
L1 = 54       # stage-1 pooled length: ((224-10)//2+1)//2
L2 = 6        # stage-2 pooled length: ((54-10)//4+1)//2
NF1 = 256
NF2 = 64


def _bn_train(h, gamma, beta):
    """BatchNorm1d training-mode forward (biased variance), f32."""
    mean = jnp.mean(h, axis=0, keepdims=True)
    var = jnp.mean((h - mean) ** 2, axis=0, keepdims=True)
    return (h - mean) * lax.rsqrt(var + EPS) * gamma + beta


# ----------------------------------------------------------------------------
# Kernel 1: Conv1d(50->100,k=10,s=2) + bias + ReLU + MaxPool1d(2,2), per branch.
#
#   x_ref : (1, 56*B, 200) bf16   rows = q*B + b  (q = input position // 4)
#                                 lanes = j*50 + c (j = input position % 4)
#   w_ref : (1, 6, 200, 100) bf16 groups [even_a0, odd_a0, even_a1, odd_a1,
#                                 even_a2, odd_a2]; lane-block j of group holds
#                                 the conv tap k = 4a + j (- 2 for odd) or 0.
#   b_ref : (1, 1, 100) f32
#   o_ref : (1, 54*B, 100) bf16   rows = p*B + b  (p = pooled output position)
#
# For shift a the slice x[a*B : a*B + 54*B] lines up so that slice-row t maps
# directly to output-row t -> 6 clean (54B, 200)@(200, 100) GEMMs, no im2col.
# max(relu(even), relu(odd)) == relu(max(even, odd) + bias) since bias shared.
# ----------------------------------------------------------------------------
def _stage1_kernel(x_ref, w_ref, b_ref, o_ref):
    n = o_ref.shape[1]
    batch = n // L1
    x = x_ref[0]                                        # (56*B, 200) bf16
    acc_e = jnp.zeros((n, CMID), jnp.float32)
    acc_o = jnp.zeros((n, CMID), jnp.float32)
    for a in range(3):
        lhs = x[a * batch:a * batch + n, :]
        acc_e = acc_e + jnp.dot(lhs, w_ref[0, 2 * a],
                                preferred_element_type=jnp.float32)
        acc_o = acc_o + jnp.dot(lhs, w_ref[0, 2 * a + 1],
                                preferred_element_type=jnp.float32)
    s1 = jnp.maximum(jnp.maximum(acc_e, acc_o) + b_ref[0], 0.0)
    o_ref[0] = s1.astype(o_ref.dtype)


def stage1_call(x_cat, w1g, b1, batch):
    two, qb, ck = x_cat.shape
    n = L1 * batch
    return pl.pallas_call(
        _stage1_kernel,
        out_shape=jax.ShapeDtypeStruct((two, n, CMID), jnp.bfloat16),
        grid=(two,),
        in_specs=[
            pl.BlockSpec((1, qb, ck), lambda r: (r, 0, 0)),
            pl.BlockSpec((1, 6, 4 * CIN, CMID), lambda r: (r, 0, 0, 0)),
            pl.BlockSpec((1, 1, CMID), lambda r: (r, 0, 0)),
        ],
        out_specs=pl.BlockSpec((1, n, CMID), lambda r: (r, 0, 0)),
        compiler_params=pltpu.CompilerParams(
            dimension_semantics=("parallel",)),
        cost_estimate=pl.CostEstimate(
            flops=2 * two * 6 * n * (4 * CIN) * CMID,
            transcendentals=0,
            bytes_accessed=2 * (two * qb * ck + two * 6 * 4 * CIN * CMID
                                + two * n * CMID) + 4 * two * CMID,
        ),
    )(x_cat, w1g, b1)


# ----------------------------------------------------------------------------
# Kernel 2: Conv1d(100->100,k=10,s=4) + ReLU + MaxPool  +  the whole FC tail
# (fc_*1 -> ReLU -> BN -> fc_*2 -> ReLU -> BN -> fc3-half), per branch.
#
#   p2_ref : (1, 2*6*B, 1000) bf16  stage-2 patches, rows = eps*6B + l*B + b,
#                                   lanes = k*100 + c   (built in the wrapper,
#                                   ~100 KB -- stage-2 im2col is cheap)
#   w2_ref : (1, 1000, 100) bf16    conv2 weights, rows k*100 + c
#   w1f_ref: (1, 600, 256)  bf16    fc_*1 weights, rows permuted to l*100 + c
#                                   (channel-major torch.flatten folded in)
#   w3_ref : (1, 64, 4)     bf16    fc3 half (rows :64 for STI, 64: for AMP)
#   o_ref  : (1, B, 4)      f32     per-branch fc3 partial product
# ----------------------------------------------------------------------------
def _stage2_fc_kernel(p2_ref, w2_ref, b2_ref,
                      w1f_ref, b1f_ref, g1_ref, be1_ref,
                      w2f_ref, b2f_ref, g2_ref, be2_ref,
                      w3_ref, o_ref):
    batch = o_ref.shape[1]
    m = L2 * batch

    # conv2 (even & odd pool halves in one GEMM) + bias + ReLU + MaxPool
    y = jnp.dot(p2_ref[0], w2_ref[0], preferred_element_type=jnp.float32)
    s2 = jnp.maximum(jnp.maximum(y[:m], y[m:]) + b2_ref[0], 0.0)   # (6B, 100)
    s2 = s2.astype(jnp.bfloat16)

    # fc_*1 as a sum over the 6 positions (rows l*B..l*B+B are contiguous)
    h1 = jnp.zeros((batch, NF1), jnp.float32)
    for l in range(L2):
        h1 = h1 + jnp.dot(s2[l * batch:(l + 1) * batch],
                          w1f_ref[0, pl.ds(l * CMID, CMID), :],
                          preferred_element_type=jnp.float32)
    z1 = _bn_train(jnp.maximum(h1 + b1f_ref[0], 0.0), g1_ref[0], be1_ref[0])

    h2 = jnp.dot(z1.astype(jnp.bfloat16), w2f_ref[0],
                 preferred_element_type=jnp.float32) + b2f_ref[0]
    z2 = _bn_train(jnp.maximum(h2, 0.0), g2_ref[0], be2_ref[0])

    # half of fc3 (the concat is realized by summing both halves outside)
    o_ref[0] = jnp.dot(z2.astype(jnp.bfloat16), w3_ref[0],
                       preferred_element_type=jnp.float32)


def stage2_fc_call(p2, prm, batch):
    two = p2.shape[0]
    vec = lambda n: pl.BlockSpec((1, 1, n), lambda r: (r, 0, 0))
    return pl.pallas_call(
        _stage2_fc_kernel,
        out_shape=jax.ShapeDtypeStruct((two, batch, 4), jnp.float32),
        grid=(two,),
        in_specs=[
            pl.BlockSpec((1, 2 * L2 * batch, KSZ * CMID), lambda r: (r, 0, 0)),
            pl.BlockSpec((1, KSZ * CMID, CMID), lambda r: (r, 0, 0)),
            vec(CMID),
            pl.BlockSpec((1, L2 * CMID, NF1), lambda r: (r, 0, 0)),
            vec(NF1), vec(NF1), vec(NF1),
            pl.BlockSpec((1, NF1, NF2), lambda r: (r, 0, 0)),
            vec(NF2), vec(NF2), vec(NF2),
            pl.BlockSpec((1, NF2, 4), lambda r: (r, 0, 0)),
        ],
        out_specs=pl.BlockSpec((1, batch, 4), lambda r: (r, 0, 0)),
        compiler_params=pltpu.CompilerParams(
            dimension_semantics=("parallel",)),
        cost_estimate=pl.CostEstimate(
            flops=2 * two * (2 * L2 * batch * KSZ * CMID * CMID
                             + batch * (L2 * CMID * NF1 + NF1 * NF2 + NF2 * 4)),
            transcendentals=two * (NF1 + NF2),
            bytes_accessed=2 * two * (2 * L2 * batch * KSZ * CMID
                                      + KSZ * CMID * CMID + L2 * CMID * NF1
                                      + NF1 * NF2 + NF2 * 4)
                           + 4 * two * (CMID + 3 * NF1 + 3 * NF2 + batch * 4),
        ),
    )(p2, prm["conv2_w"], prm["conv2_b"],
      prm["fc1_w"], prm["fc1_b"], prm["bn1_g"], prm["bn1_b"],
      prm["fc2_w"], prm["fc2_b"], prm["bn2_g"], prm["bn2_b"],
      prm["fc3_w"])


# ----------------------------------------------------------------------------
# Forward
# ----------------------------------------------------------------------------
def teacher_forward(params, STI, AMP):
    B = STI.shape[0]

    # Input layout prep (one tiny XLA fusion over ~360 KB):
    # channels-last, de-interleave position by 4 into lane-packed phases,
    # position-major rows, bf16.  x_cat[br, q*B+b, j*50+c] = x[br, b, c, 4q+j]
    x = jnp.stack([STI, AMP], axis=0)                 # (2, B, 50, 224)
    x = jnp.transpose(x, (0, 3, 1, 2))                # (2, 224, B, 50)
    x = x.reshape(2, L_IN // 4, 4, B, CIN)            # (2, q, j, b, c)
    x = jnp.transpose(x, (0, 1, 3, 2, 4))             # (2, q, b, j, c)
    x_cat = x.reshape(2, (L_IN // 4) * B, 4 * CIN).astype(jnp.bfloat16)

    # Stage 1 (fused conv1+bias+ReLU+pool), output rows p*B+b, bf16.
    s1 = stage1_call(x_cat, params["conv1_w"], params["conv1_b"], B)

    # Stage-2 im2col in the wrapper (tiny, ~100 KB of bf16):
    # P2[br, eps*6B + p*B + b, k*100 + c] = s1[br, (8p + 4*eps + k)*B + b, c]
    s1r = s1.reshape(2, L1, B, CMID)
    idx = (8 * jnp.arange(L2)[:, None, None]
           + 4 * jnp.arange(2)[None, :, None]
           + jnp.arange(KSZ)[None, None, :])          # (6, 2, 10), values 0..53
    g = s1r[:, idx]                                   # (2, 6, 2, 10, B, 100)
    p2 = jnp.transpose(g, (0, 2, 1, 4, 3, 5)).reshape(
        2, 2 * L2 * B, KSZ * CMID)

    # Stage 2 + FC tail (fused); per-branch fc3 half-products, (2, B, 4).
    partial = stage2_fc_call(p2, params, B)

    # Final combine (4x4 numbers): fc3 bias + BatchNorm1d(4).
    h3 = partial[0] + partial[1] + params["fc3_b"]
    mean = jnp.mean(h3, axis=0, keepdims=True)
    var = jnp.mean((h3 - mean) ** 2, axis=0, keepdims=True)
    return (h3 - mean) * lax.rsqrt(var + EPS) * params["bn3_g"] + params["bn3_b"]


# ----------------------------------------------------------------------------
# Deterministic synthetic parameters (raw PyTorch-style shapes) + one-time
# preparation into the kernel GEMM layouts (done outside the jitted forward).
# ----------------------------------------------------------------------------
def init_params(key):
    ks = jax.random.split(key, 20)

    def nrm(k, shape, scale):
        return scale * jax.random.normal(k, shape, dtype=jnp.float32)

    p = {}
    p["w_s1"] = nrm(ks[0], (100, 50, 10), 0.05);  p["b_s1"] = nrm(ks[1], (100,), 0.05)
    p["w_a1"] = nrm(ks[2], (100, 50, 10), 0.05);  p["b_a1"] = nrm(ks[3], (100,), 0.05)
    p["w_s2"] = nrm(ks[4], (100, 100, 10), 0.03); p["b_s2"] = nrm(ks[5], (100,), 0.03)
    p["w_a2"] = nrm(ks[6], (100, 100, 10), 0.03); p["b_a2"] = nrm(ks[7], (100,), 0.03)

    p["fc_s1_w"] = nrm(ks[8], (600, 256), 0.04);  p["fc_s1_b"] = nrm(ks[9], (256,), 0.04)
    p["fc_a1_w"] = nrm(ks[10], (600, 256), 0.04); p["fc_a1_b"] = nrm(ks[11], (256,), 0.04)
    p["fc_s2_w"] = nrm(ks[12], (256, 64), 0.06);  p["fc_s2_b"] = nrm(ks[13], (64,), 0.06)
    p["fc_a2_w"] = nrm(ks[14], (256, 64), 0.06);  p["fc_a2_b"] = nrm(ks[15], (64,), 0.06)
    p["fc3_w"]   = nrm(ks[16], (128, 4), 0.09);   p["fc3_b"]   = nrm(ks[17], (4,), 0.09)

    # BatchNorm1d default init: weight=1, bias=0
    p["bn_s1_g"] = jnp.ones((256,), jnp.float32); p["bn_s1_b"] = jnp.zeros((256,), jnp.float32)
    p["bn_a1_g"] = jnp.ones((256,), jnp.float32); p["bn_a1_b"] = jnp.zeros((256,), jnp.float32)
    p["bn_s2_g"] = jnp.ones((64,), jnp.float32);  p["bn_s2_b"] = jnp.zeros((64,), jnp.float32)
    p["bn_a2_g"] = jnp.ones((64,), jnp.float32);  p["bn_a2_b"] = jnp.zeros((64,), jnp.float32)
    p["bn3_g"]   = jnp.ones((4,), jnp.float32);   p["bn3_b"]   = jnp.zeros((4,), jnp.float32)
    return p


def prepare_params(p):
    """One-time transform to kernel layouts: conv1 -> 6 shift-GEMM groups,
    conv2 -> (1000,100) GEMM matrix, fc_*1 rows permuted to match the
    channel-major torch.flatten, everything MXU-facing cast to bf16."""

    def conv1_groups(w_oik):                          # (100, 50, 10)
        gs = []
        for a in range(3):
            for off in (0, 2):                        # even (off=0), odd (off=2)
                blk = jnp.zeros((4, CIN, CMID), jnp.float32)
                for j in range(4):
                    k = 4 * a + j - off
                    if 0 <= k < KSZ:
                        blk = blk.at[j].set(w_oik[:, :, k].T)
                gs.append(blk.reshape(4 * CIN, CMID))
        return jnp.stack(gs)                          # (6, 200, 100)

    def conv2_gemm(w_oik):                            # (100, 100, 10)
        return jnp.transpose(w_oik, (2, 1, 0)).reshape(KSZ * CMID, CMID)

    def fc1_perm(w):                                  # (600,256), torch row = c*6+l
        return jnp.transpose(w.reshape(CMID, L2, NF1), (1, 0, 2)).reshape(
            L2 * CMID, NF1)                           # kernel row = l*100+c

    bf = lambda a: a.astype(jnp.bfloat16)
    q = {}
    q["conv1_w"] = bf(jnp.stack([conv1_groups(p["w_s1"]), conv1_groups(p["w_a1"])]))
    q["conv1_b"] = jnp.stack([p["b_s1"], p["b_a1"]])[:, None, :]
    q["conv2_w"] = bf(jnp.stack([conv2_gemm(p["w_s2"]), conv2_gemm(p["w_a2"])]))
    q["conv2_b"] = jnp.stack([p["b_s2"], p["b_a2"]])[:, None, :]

    q["fc1_w"] = bf(jnp.stack([fc1_perm(p["fc_s1_w"]), fc1_perm(p["fc_a1_w"])]))
    q["fc1_b"] = jnp.stack([p["fc_s1_b"], p["fc_a1_b"]])[:, None, :]
    q["bn1_g"] = jnp.stack([p["bn_s1_g"], p["bn_a1_g"]])[:, None, :]
    q["bn1_b"] = jnp.stack([p["bn_s1_b"], p["bn_a1_b"]])[:, None, :]

    q["fc2_w"] = bf(jnp.stack([p["fc_s2_w"], p["fc_a2_w"]]))
    q["fc2_b"] = jnp.stack([p["fc_s2_b"], p["fc_a2_b"]])[:, None, :]
    q["bn2_g"] = jnp.stack([p["bn_s2_g"], p["bn_a2_g"]])[:, None, :]
    q["bn2_b"] = jnp.stack([p["bn_s2_b"], p["bn_a2_b"]])[:, None, :]

    q["fc3_w"] = bf(jnp.stack([p["fc3_w"][:64], p["fc3_w"][64:]]))   # (2, 64, 4)
    q["fc3_b"] = p["fc3_b"]
    q["bn3_g"] = p["bn3_g"]
    q["bn3_b"] = p["bn3_b"]
    return q


if __name__ == "__main__":
    key = jax.random.PRNGKey(0)
    kp, k1, k2 = jax.random.split(key, 3)
    params = prepare_params(init_params(kp))

    # L must be 224 so the flattened conv features equal 600 (fc_s1 in-dim).
    B, C, L = 4, 50, 224
    STI = jax.random.normal(k1, (B, C, L), dtype=jnp.float32)
    AMP = jax.random.normal(k2, (B, C, L), dtype=jnp.float32)

    fwd = jax.jit(teacher_forward)
    out = jax.block_until_ready(fwd(params, STI, AMP))
    assert out.shape == (B, 4) and out.dtype == jnp.float32
    assert bool(jnp.all(jnp.isfinite(out)))
    print("KERNEL_OK")
</pallas_src>

<mosaic_0001>
module attributes {stable_mosaic.version = 11 : i64} {
  func.func @_stage1_kernel(%arg0: i32, %arg1: memref<1x224x200xbf16, #tpu.memory_space<vmem>>, %arg2: memref<1x6x200x100xbf16, #tpu.memory_space<vmem>>, %arg3: memref<1x1x100xf32, #tpu.memory_space<vmem>>, %arg4: memref<1x216x100xbf16, #tpu.memory_space<vmem>>) attributes {dimension_semantics = [#tpu.dimension_semantics<parallel>], iteration_bounds = array<i64: 2>, scalar_prefetch = 0 : i64, scratch_operands = 0 : i64, tpu.core_type = #tpu.core_type<tc>, window_params = [{transform_indices = @transform_0, window_bounds = array<i64: 1, 224, 200>}, {transform_indices = @transform_1, window_bounds = array<i64: 1, 6, 200, 100>}, {transform_indices = @transform_2, window_bounds = array<i64: 1, 1, 100>}, {transform_indices = @transform_3, window_bounds = array<i64: 1, 216, 100>}]} {
    %c0 = arith.constant 0 : index
    %c0_0 = arith.constant 0 : index
    %c0_1 = arith.constant 0 : index
    %0 = vector.load %arg1[%c0, %c0_0, %c0_1] : memref<1x224x200xbf16, #tpu.memory_space<vmem>>, vector<1x224x200xbf16>
    %1 = vector.shape_cast %0 : vector<1x224x200xbf16> to vector<224x200xbf16>
    %cst = arith.constant 0.000000e+00 : f32
    %2 = vector.broadcast %cst : f32 to vector<216x100xf32>
    %cst_2 = arith.constant 0.000000e+00 : f32
    %3 = vector.broadcast %cst_2 : f32 to vector<216x100xf32>
    %4 = vector.extract_strided_slice %1 {offsets = [0, 0], sizes = [216, 200], strides = [1, 1]} : vector<224x200xbf16> to vector<216x200xbf16>
    %c0_3 = arith.constant 0 : index
    %c0_4 = arith.constant 0 : index
    %c0_5 = arith.constant 0 : index
    %c0_6 = arith.constant 0 : index
    %5 = vector.load %arg2[%c0_3, %c0_4, %c0_5, %c0_6] : memref<1x6x200x100xbf16, #tpu.memory_space<vmem>>, vector<1x1x200x100xbf16>
    %6 = vector.shape_cast %5 : vector<1x1x200x100xbf16> to vector<200x100xbf16>
    %cst_7 = arith.constant dense<0.000000e+00> : vector<216x100xf32>
    %7 = tpu.matmul %4, %6, %cst_7 {dimension_numbers = #tpu.dot_dimension_numbers<[1], [0], [0], [1], [0, 0, 1, 1], [], []>} : vector<216x200xbf16>, vector<200x100xbf16>, vector<216x100xf32> -> vector<216x100xf32>
    %8 = arith.addf %2, %7 : vector<216x100xf32>
    %c0_8 = arith.constant 0 : index
    %c1 = arith.constant 1 : index
    %c0_9 = arith.constant 0 : index
    %c0_10 = arith.constant 0 : index
    %9 = vector.load %arg2[%c0_8, %c1, %c0_9, %c0_10] : memref<1x6x200x100xbf16, #tpu.memory_space<vmem>>, vector<1x1x200x100xbf16>
    %10 = vector.shape_cast %9 : vector<1x1x200x100xbf16> to vector<200x100xbf16>
    %cst_11 = arith.constant dense<0.000000e+00> : vector<216x100xf32>
    %11 = tpu.matmul %4, %10, %cst_11 {dimension_numbers = #tpu.dot_dimension_numbers<[1], [0], [0], [1], [0, 0, 1, 1], [], []>} : vector<216x200xbf16>, vector<200x100xbf16>, vector<216x100xf32> -> vector<216x100xf32>
    %12 = arith.addf %3, %11 : vector<216x100xf32>
    %13 = vector.extract_strided_slice %1 {offsets = [4, 0], sizes = [216, 200], strides = [1, 1]} : vector<224x200xbf16> to vector<216x200xbf16>
    %c0_12 = arith.constant 0 : index
    %c2 = arith.constant 2 : index
    %c0_13 = arith.constant 0 : index
    %c0_14 = arith.constant 0 : index
    %14 = vector.load %arg2[%c0_12, %c2, %c0_13, %c0_14] : memref<1x6x200x100xbf16, #tpu.memory_space<vmem>>, vector<1x1x200x100xbf16>
    %15 = vector.shape_cast %14 : vector<1x1x200x100xbf16> to vector<200x100xbf16>
    %cst_15 = arith.constant dense<0.000000e+00> : vector<216x100xf32>
    %16 = tpu.matmul %13, %15, %cst_15 {dimension_numbers = #tpu.dot_dimension_numbers<[1], [0], [0], [1], [0, 0, 1, 1], [], []>} : vector<216x200xbf16>, vector<200x100xbf16>, vector<216x100xf32> -> vector<216x100xf32>
    %17 = arith.addf %8, %16 : vector<216x100xf32>
    %c0_16 = arith.constant 0 : index
    %c3 = arith.constant 3 : index
    %c0_17 = arith.constant 0 : index
    %c0_18 = arith.constant 0 : index
    %18 = vector.load %arg2[%c0_16, %c3, %c0_17, %c0_18] : memref<1x6x200x100xbf16, #tpu.memory_space<vmem>>, vector<1x1x200x100xbf16>
    %19 = vector.shape_cast %18 : vector<1x1x200x100xbf16> to vector<200x100xbf16>
    %cst_19 = arith.constant dense<0.000000e+00> : vector<216x100xf32>
    %20 = tpu.matmul %13, %19, %cst_19 {dimension_numbers = #tpu.dot_dimension_numbers<[1], [0], [0], [1], [0, 0, 1, 1], [], []>} : vector<216x200xbf16>, vector<200x100xbf16>, vector<216x100xf32> -> vector<216x100xf32>
    %21 = arith.addf %12, %20 : vector<216x100xf32>
    %22 = vector.extract_strided_slice %1 {offsets = [8, 0], sizes = [216, 200], strides = [1, 1]} : vector<224x200xbf16> to vector<216x200xbf16>
    %c0_20 = arith.constant 0 : index
    %c4 = arith.constant 4 : index
    %c0_21 = arith.constant 0 : index
    %c0_22 = arith.constant 0 : index
    %23 = vector.load %arg2[%c0_20, %c4, %c0_21, %c0_22] : memref<1x6x200x100xbf16, #tpu.memory_space<vmem>>, vector<1x1x200x100xbf16>
    %24 = vector.shape_cast %23 : vector<1x1x200x100xbf16> to vector<200x100xbf16>
    %cst_23 = arith.constant dense<0.000000e+00> : vector<216x100xf32>
    %25 = tpu.matmul %22, %24, %cst_23 {dimension_numbers = #tpu.dot_dimension_numbers<[1], [0], [0], [1], [0, 0, 1, 1], [], []>} : vector<216x200xbf16>, vector<200x100xbf16>, vector<216x100xf32> -> vector<216x100xf32>
    %26 = arith.addf %17, %25 : vector<216x100xf32>
    %c0_24 = arith.constant 0 : index
    %c5 = arith.constant 5 : index
    %c0_25 = arith.constant 0 : index
    %c0_26 = arith.constant 0 : index
    %27 = vector.load %arg2[%c0_24, %c5, %c0_25, %c0_26] : memref<1x6x200x100xbf16, #tpu.memory_space<vmem>>, vector<1x1x200x100xbf16>
    %28 = vector.shape_cast %27 : vector<1x1x200x100xbf16> to vector<200x100xbf16>
    %cst_27 = arith.constant dense<0.000000e+00> : vector<216x100xf32>
    %29 = tpu.matmul %22, %28, %cst_27 {dimension_numbers = #tpu.dot_dimension_numbers<[1], [0], [0], [1], [0, 0, 1, 1], [], []>} : vector<216x200xbf16>, vector<200x100xbf16>, vector<216x100xf32> -> vector<216x100xf32>
    %30 = arith.addf %21, %29 : vector<216x100xf32>
    %31 = arith.maximumf %26, %30 : vector<216x100xf32>
    %c0_28 = arith.constant 0 : index
    %c0_29 = arith.constant 0 : index
    %c0_30 = arith.constant 0 : index
    %32 = vector.load %arg3[%c0_28, %c0_29, %c0_30] : memref<1x1x100xf32, #tpu.memory_space<vmem>>, vector<1x1x100xf32>
    %33 = vector.shape_cast %32 : vector<1x1x100xf32> to vector<1x100xf32>
    %34 = vector.broadcast %33 : vector<1x100xf32> to vector<216x100xf32>
    %35 = arith.addf %31, %34 : vector<216x100xf32>
    %cst_31 = arith.constant 0.000000e+00 : f32
    %36 = vector.broadcast %cst_31 : f32 to vector<216x100xf32>
    %37 = arith.maximumf %35, %36 : vector<216x100xf32>
    %38 = arith.truncf %37 : vector<216x100xf32> to vector<216x100xbf16>
    %c0_32 = arith.constant 0 : index
    %c0_33 = arith.constant 0 : index
    %c0_34 = arith.constant 0 : index
    %39 = vector.load %arg4[%c0_32, %c0_33, %c0_34] : memref<1x216x100xbf16, #tpu.memory_space<vmem>>, vector<1x216x100xbf16>
    %40 = vector.shape_cast %39 : vector<1x216x100xbf16> to vector<216x100xbf16>
    %41 = vector.shape_cast %38 : vector<216x100xbf16> to vector<1x216x100xbf16>
    tpu.vector_store %arg4[%c0_32, %c0_33, %c0_34], %41 {strides = array<i32>} : memref<1x216x100xbf16, #tpu.memory_space<vmem>>, vector<1x216x100xbf16>,
    return
  }
  func.func @transform_0(%arg0: i32) -> (i32, i32, i32) {
    %c0_i32 = arith.constant 0 : i32
    %c0_i32_0 = arith.constant 0 : i32
    %c0_i32_1 = arith.constant 0 : i32
    return %arg0, %c0_i32, %c0_i32_0 : i32, i32, i32
  }
  func.func @transform_1(%arg0: i32) -> (i32, i32, i32, i32) {
    %c0_i32 = arith.constant 0 : i32
    %c0_i32_0 = arith.constant 0 : i32
    %c0_i32_1 = arith.constant 0 : i32
    %c0_i32_2 = arith.constant 0 : i32
    return %arg0, %c0_i32, %c0_i32_0, %c0_i32_1 : i32, i32, i32, i32
  }
  func.func @transform_2(%arg0: i32) -> (i32, i32, i32) {
    %c0_i32 = arith.constant 0 : i32
    %c0_i32_0 = arith.constant 0 : i32
    %c0_i32_1 = arith.constant 0 : i32
    return %arg0, %c0_i32, %c0_i32_0 : i32, i32, i32
  }
  func.func @transform_3(%arg0: i32) -> (i32, i32, i32) {
    %c0_i32 = arith.constant 0 : i32
    %c0_i32_0 = arith.constant 0 : i32
    %c0_i32_1 = arith.constant 0 : i32
    return %arg0, %c0_i32, %c0_i32_0 : i32, i32, i32
  }
}

module attributes {stable_mosaic.version = 11 : i64} {
  func.func @_stage2_fc_kernel(%arg0: i32, %arg1: memref<1x48x1000xbf16, #tpu.memory_space<vmem>>, %arg2: memref<1x1000x100xbf16, #tpu.memory_space<vmem>>, %arg3: memref<1x1x100xf32, #tpu.memory_space<vmem>>, %arg4: memref<1x600x256xbf16, #tpu.memory_space<vmem>>, %arg5: memref<1x1x256xf32, #tpu.memory_space<vmem>>, %arg6: memref<1x1x256xf32, #tpu.memory_space<vmem>>, %arg7: memref<1x1x256xf32, #tpu.memory_space<vmem>>, %arg8: memref<1x256x64xbf16, #tpu.memory_space<vmem>>, %arg9: memref<1x1x64xf32, #tpu.memory_space<vmem>>, %arg10: memref<1x1x64xf32, #tpu.memory_space<vmem>>, %arg11: memref<1x1x64xf32, #tpu.memory_space<vmem>>, %arg12: memref<1x64x4xbf16, #tpu.memory_space<vmem>>, %arg13: memref<1x4x4xf32, #tpu.memory_space<vmem>>) attributes {dimension_semantics = [#tpu.dimension_semantics<parallel>], iteration_bounds = array<i64: 2>, scalar_prefetch = 0 : i64, scratch_operands = 0 : i64, tpu.core_type = #tpu.core_type<tc>, window_params = [{transform_indices = @transform_0, window_bounds = array<i64: 1, 48, 1000>}, {transform_indices = @transform_1, window_bounds = array<i64: 1, 1000, 100>}, {transform_indices = @transform_2, window_bounds = array<i64: 1, 1, 100>}, {transform_indices = @transform_3, window_bounds = array<i64: 1, 600, 256>}, {transform_indices = @transform_4, window_bounds = array<i64: 1, 1, 256>}, {transform_indices = @transform_5, window_bounds = array<i64: 1, 1, 256>}, {transform_indices = @transform_6, window_bounds = array<i64: 1, 1, 256>}, {transform_indices = @transform_7, window_bounds = array<i64: 1, 256, 64>}, {transform_indices = @transform_8, window_bounds = array<i64: 1, 1, 64>}, {transform_indices = @transform_9, window_bounds = array<i64: 1, 1, 64>}, {transform_indices = @transform_10, window_bounds = array<i64: 1, 1, 64>}, {transform_indices = @transform_11, window_bounds = array<i64: 1, 64, 4>}, {transform_indices = @transform_12, window_bounds = array<i64: 1, 4, 4>}]} {
    %c0 = arith.constant 0 : index
    %c0_0 = arith.constant 0 : index
    %c0_1 = arith.constant 0 : index
    %0 = vector.load %arg1[%c0, %c0_0, %c0_1] : memref<1x48x1000xbf16, #tpu.memory_space<vmem>>, vector<1x48x1000xbf16>
    %1 = vector.shape_cast %0 : vector<1x48x1000xbf16> to vector<48x1000xbf16>
    %c0_2 = arith.constant 0 : index
    %c0_3 = arith.constant 0 : index
    %c0_4 = arith.constant 0 : index
    %2 = vector.load %arg2[%c0_2, %c0_3, %c0_4] : memref<1x1000x100xbf16, #tpu.memory_space<vmem>>, vector<1x1000x100xbf16>
    %3 = vector.shape_cast %2 : vector<1x1000x100xbf16> to vector<1000x100xbf16>
    %cst = arith.constant dense<0.000000e+00> : vector<48x100xf32>
    %4 = tpu.matmul %1, %3, %cst {dimension_numbers = #tpu.dot_dimension_numbers<[1], [0], [0], [1], [0, 0, 1, 1], [], []>} : vector<48x1000xbf16>, vector<1000x100xbf16>, vector<48x100xf32> -> vector<48x100xf32>
    %5 = vector.extract_strided_slice %4 {offsets = [0, 0], sizes = [24, 100], strides = [1, 1]} : vector<48x100xf32> to vector<24x100xf32>
    %6 = vector.extract_strided_slice %4 {offsets = [24, 0], sizes = [24, 100], strides = [1, 1]} : vector<48x100xf32> to vector<24x100xf32>
    %7 = arith.maximumf %5, %6 : vector<24x100xf32>
    %c0_5 = arith.constant 0 : index
    %c0_6 = arith.constant 0 : index
    %c0_7 = arith.constant 0 : index
    %8 = vector.load %arg3[%c0_5, %c0_6, %c0_7] : memref<1x1x100xf32, #tpu.memory_space<vmem>>, vector<1x1x100xf32>
    %9 = vector.shape_cast %8 : vector<1x1x100xf32> to vector<1x100xf32>
    %10 = vector.broadcast %9 : vector<1x100xf32> to vector<24x100xf32>
    %11 = arith.addf %7, %10 : vector<24x100xf32>
    %cst_8 = arith.constant 0.000000e+00 : f32
    %12 = vector.broadcast %cst_8 : f32 to vector<24x100xf32>
    %13 = arith.maximumf %11, %12 : vector<24x100xf32>
    %14 = arith.truncf %13 : vector<24x100xf32> to vector<24x100xbf16>
    %cst_9 = arith.constant 0.000000e+00 : f32
    %15 = vector.broadcast %cst_9 : f32 to vector<4x256xf32>
    %16 = vector.extract_strided_slice %14 {offsets = [0, 0], sizes = [4, 100], strides = [1, 1]} : vector<24x100xbf16> to vector<4x100xbf16>
    %c0_10 = arith.constant 0 : index
    %c0_11 = arith.constant 0 : index
    %c0_12 = arith.constant 0 : index
    %17 = vector.load %arg4[%c0_10, %c0_11, %c0_12] : memref<1x600x256xbf16, #tpu.memory_space<vmem>>, vector<1x100x256xbf16>
    %18 = vector.shape_cast %17 : vector<1x100x256xbf16> to vector<100x256xbf16>
    %cst_13 = arith.constant dense<0.000000e+00> : vector<4x256xf32>
    %19 = tpu.matmul %16, %18, %cst_13 {dimension_numbers = #tpu.dot_dimension_numbers<[1], [0], [0], [1], [0, 0, 1, 1], [], []>} : vector<4x100xbf16>, vector<100x256xbf16>, vector<4x256xf32> -> vector<4x256xf32>
    %20 = arith.addf %15, %19 : vector<4x256xf32>
    %21 = vector.extract_strided_slice %14 {offsets = [4, 0], sizes = [4, 100], strides = [1, 1]} : vector<24x100xbf16> to vector<4x100xbf16>
    %c0_14 = arith.constant 0 : index
    %c100 = arith.constant 100 : index
    %c0_15 = arith.constant 0 : index
    %22 = vector.load %arg4[%c0_14, %c100, %c0_15] : memref<1x600x256xbf16, #tpu.memory_space<vmem>>, vector<1x100x256xbf16>
    %23 = vector.shape_cast %22 : vector<1x100x256xbf16> to vector<100x256xbf16>
    %cst_16 = arith.constant dense<0.000000e+00> : vector<4x256xf32>
    %24 = tpu.matmul %21, %23, %cst_16 {dimension_numbers = #tpu.dot_dimension_numbers<[1], [0], [0], [1], [0, 0, 1, 1], [], []>} : vector<4x100xbf16>, vector<100x256xbf16>, vector<4x256xf32> -> vector<4x256xf32>
    %25 = arith.addf %20, %24 : vector<4x256xf32>
    %26 = vector.extract_strided_slice %14 {offsets = [8, 0], sizes = [4, 100], strides = [1, 1]} : vector<24x100xbf16> to vector<4x100xbf16>
    %c0_17 = arith.constant 0 : index
    %c200 = arith.constant 200 : index
    %c0_18 = arith.constant 0 : index
    %27 = vector.load %arg4[%c0_17, %c200, %c0_18] : memref<1x600x256xbf16, #tpu.memory_space<vmem>>, vector<1x100x256xbf16>
    %28 = vector.shape_cast %27 : vector<1x100x256xbf16> to vector<100x256xbf16>
    %cst_19 = arith.constant dense<0.000000e+00> : vector<4x256xf32>
    %29 = tpu.matmul %26, %28, %cst_19 {dimension_numbers = #tpu.dot_dimension_numbers<[1], [0], [0], [1], [0, 0, 1, 1], [], []>} : vector<4x100xbf16>, vector<100x256xbf16>, vector<4x256xf32> -> vector<4x256xf32>
    %30 = arith.addf %25, %29 : vector<4x256xf32>
    %31 = vector.extract_strided_slice %14 {offsets = [12, 0], sizes = [4, 100], strides = [1, 1]} : vector<24x100xbf16> to vector<4x100xbf16>
    %c0_20 = arith.constant 0 : index
    %c300 = arith.constant 300 : index
    %c0_21 = arith.constant 0 : index
    %32 = vector.load %arg4[%c0_20, %c300, %c0_21] : memref<1x600x256xbf16, #tpu.memory_space<vmem>>, vector<1x100x256xbf16>
    %33 = vector.shape_cast %32 : vector<1x100x256xbf16> to vector<100x256xbf16>
    %cst_22 = arith.constant dense<0.000000e+00> : vector<4x256xf32>
    %34 = tpu.matmul %31, %33, %cst_22 {dimension_numbers = #tpu.dot_dimension_numbers<[1], [0], [0], [1], [0, 0, 1, 1], [], []>} : vector<4x100xbf16>, vector<100x256xbf16>, vector<4x256xf32> -> vector<4x256xf32>
    %35 = arith.addf %30, %34 : vector<4x256xf32>
    %36 = vector.extract_strided_slice %14 {offsets = [16, 0], sizes = [4, 100], strides = [1, 1]} : vector<24x100xbf16> to vector<4x100xbf16>
    %c0_23 = arith.constant 0 : index
    %c400 = arith.constant 400 : index
    %c0_24 = arith.constant 0 : index
    %37 = vector.load %arg4[%c0_23, %c400, %c0_24] : memref<1x600x256xbf16, #tpu.memory_space<vmem>>, vector<1x100x256xbf16>
    %38 = vector.shape_cast %37 : vector<1x100x256xbf16> to vector<100x256xbf16>
    %cst_25 = arith.constant dense<0.000000e+00> : vector<4x256xf32>
    %39 = tpu.matmul %36, %38, %cst_25 {dimension_numbers = #tpu.dot_dimension_numbers<[1], [0], [0], [1], [0, 0, 1, 1], [], []>} : vector<4x100xbf16>, vector<100x256xbf16>, vector<4x256xf32> -> vector<4x256xf32>
    %40 = arith.addf %35, %39 : vector<4x256xf32>
    %41 = vector.extract_strided_slice %14 {offsets = [20, 0], sizes = [4, 100], strides = [1, 1]} : vector<24x100xbf16> to vector<4x100xbf16>
    %c0_26 = arith.constant 0 : index
    %c500 = arith.constant 500 : index
    %c0_27 = arith.constant 0 : index
    %42 = vector.load %arg4[%c0_26, %c500, %c0_27] : memref<1x600x256xbf16, #tpu.memory_space<vmem>>, vector<1x100x256xbf16>
    %43 = vector.shape_cast %42 : vector<1x100x256xbf16> to vector<100x256xbf16>
    %cst_28 = arith.constant dense<0.000000e+00> : vector<4x256xf32>
    %44 = tpu.matmul %41, %43, %cst_28 {dimension_numbers = #tpu.dot_dimension_numbers<[1], [0], [0], [1], [0, 0, 1, 1], [], []>} : vector<4x100xbf16>, vector<100x256xbf16>, vector<4x256xf32> -> vector<4x256xf32>
    %45 = arith.addf %40, %44 : vector<4x256xf32>
    %c0_29 = arith.constant 0 : index
    %c0_30 = arith.constant 0 : index
    %c0_31 = arith.constant 0 : index
    %46 = vector.load %arg5[%c0_29, %c0_30, %c0_31] : memref<1x1x256xf32, #tpu.memory_space<vmem>>, vector<1x1x256xf32>
    %47 = vector.shape_cast %46 : vector<1x1x256xf32> to vector<1x256xf32>
    %48 = vector.broadcast %47 : vector<1x256xf32> to vector<4x256xf32>
    %49 = arith.addf %45, %48 : vector<4x256xf32>
    %cst_32 = arith.constant 0.000000e+00 : f32
    %50 = vector.broadcast %cst_32 : f32 to vector<4x256xf32>
    %51 = arith.maximumf %49, %50 : vector<4x256xf32>
    %c0_33 = arith.constant 0 : index
    %c0_34 = arith.constant 0 : index
    %c0_35 = arith.constant 0 : index
    %52 = vector.load %arg6[%c0_33, %c0_34, %c0_35] : memref<1x1x256xf32, #tpu.memory_space<vmem>>, vector<1x1x256xf32>
    %53 = vector.shape_cast %52 : vector<1x1x256xf32> to vector<1x256xf32>
    %c0_36 = arith.constant 0 : index
    %c0_37 = arith.constant 0 : index
    %c0_38 = arith.constant 0 : index
    %54 = vector.load %arg7[%c0_36, %c0_37, %c0_38] : memref<1x1x256xf32, #tpu.memory_space<vmem>>, vector<1x1x256xf32>
    %55 = vector.shape_cast %54 : vector<1x1x256xf32> to vector<1x256xf32>
    %cst_39 = arith.constant dense<0.000000e+00> : vector<256xf32>
    %56 = vector.multi_reduction <add>, %51, %cst_39 [0] : vector<4x256xf32> to vector<256xf32>
    %57 = vector.shape_cast %56 : vector<256xf32> to vector<1x256xf32>
    %cst_40 = arith.constant 4.000000e+00 : f32
    %58 = vector.broadcast %cst_40 : f32 to vector<1x256xf32>
    %59 = arith.divf %57, %58 : vector<1x256xf32>
    %60 = vector.broadcast %59 : vector<1x256xf32> to vector<4x256xf32>
    %61 = arith.subf %51, %60 : vector<4x256xf32>
    %62 = arith.mulf %61, %61 : vector<4x256xf32>
    %cst_41 = arith.constant dense<0.000000e+00> : vector<256xf32>
    %63 = vector.multi_reduction <add>, %62, %cst_41 [0] : vector<4x256xf32> to vector<256xf32>
    %64 = vector.shape_cast %63 : vector<256xf32> to vector<1x256xf32>
    %cst_42 = arith.constant 4.000000e+00 : f32
    %65 = vector.broadcast %cst_42 : f32 to vector<1x256xf32>
    %66 = arith.divf %64, %65 : vector<1x256xf32>
    %67 = vector.broadcast %59 : vector<1x256xf32> to vector<4x256xf32>
    %68 = arith.subf %51, %67 : vector<4x256xf32>
    %cst_43 = arith.constant 9.99999974E-6 : f32
    %69 = vector.broadcast %cst_43 : f32 to vector<1x256xf32>
    %70 = arith.addf %66, %69 : vector<1x256xf32>
    %71 = math.rsqrt %70 : vector<1x256xf32>
    %72 = vector.broadcast %71 : vector<1x256xf32> to vector<4x256xf32>
    %73 = arith.mulf %68, %72 : vector<4x256xf32>
    %74 = vector.broadcast %53 : vector<1x256xf32> to vector<4x256xf32>
    %75 = arith.mulf %73, %74 : vector<4x256xf32>
    %76 = vector.broadcast %55 : vector<1x256xf32> to vector<4x256xf32>
    %77 = arith.addf %75, %76 : vector<4x256xf32>
    %78 = arith.truncf %77 : vector<4x256xf32> to vector<4x256xbf16>
    %c0_44 = arith.constant 0 : index
    %c0_45 = arith.constant 0 : index
    %c0_46 = arith.constant 0 : index
    %79 = vector.load %arg8[%c0_44, %c0_45, %c0_46] : memref<1x256x64xbf16, #tpu.memory_space<vmem>>, vector<1x256x64xbf16>
    %80 = vector.shape_cast %79 : vector<1x256x64xbf16> to vector<256x64xbf16>
    %cst_47 = arith.constant dense<0.000000e+00> : vector<4x64xf32>
    %81 = tpu.matmul %78, %80, %cst_47 {dimension_numbers = #tpu.dot_dimension_numbers<[1], [0], [0], [1], [0, 0, 1, 1], [], []>} : vector<4x256xbf16>, vector<256x64xbf16>, vector<4x64xf32> -> vector<4x64xf32>
    %c0_48 = arith.constant 0 : index
    %c0_49 = arith.constant 0 : index
    %c0_50 = arith.constant 0 : index
    %82 = vector.load %arg9[%c0_48, %c0_49, %c0_50] : memref<1x1x64xf32, #tpu.memory_space<vmem>>, vector<1x1x64xf32>
    %83 = vector.shape_cast %82 : vector<1x1x64xf32> to vector<1x64xf32>
    %84 = vector.broadcast %83 : vector<1x64xf32> to vector<4x64xf32>
    %85 = arith.addf %81, %84 : vector<4x64xf32>
    %cst_51 = arith.constant 0.000000e+00 : f32
    %86 = vector.broadcast %cst_51 : f32 to vector<4x64xf32>
    %87 = arith.maximumf %85, %86 : vector<4x64xf32>
    %c0_52 = arith.constant 0 : index
    %c0_53 = arith.constant 0 : index
    %c0_54 = arith.constant 0 : index
    %88 = vector.load %arg10[%c0_52, %c0_53, %c0_54] : memref<1x1x64xf32, #tpu.memory_space<vmem>>, vector<1x1x64xf32>
    %89 = vector.shape_cast %88 : vector<1x1x64xf32> to vector<1x64xf32>
    %c0_55 = arith.constant 0 : index
    %c0_56 = arith.constant 0 : index
    %c0_57 = arith.constant 0 : index
    %90 = vector.load %arg11[%c0_55, %c0_56, %c0_57] : memref<1x1x64xf32, #tpu.memory_space<vmem>>, vector<1x1x64xf32>
    %91 = vector.shape_cast %90 : vector<1x1x64xf32> to vector<1x64xf32>
    %cst_58 = arith.constant dense<0.000000e+00> : vector<64xf32>
    %92 = vector.multi_reduction <add>, %87, %cst_58 [0] : vector<4x64xf32> to vector<64xf32>
    %93 = vector.shape_cast %92 : vector<64xf32> to vector<1x64xf32>
    %cst_59 = arith.constant 4.000000e+00 : f32
    %94 = vector.broadcast %cst_59 : f32 to vector<1x64xf32>
    %95 = arith.divf %93, %94 : vector<1x64xf32>
    %96 = vector.broadcast %95 : vector<1x64xf32> to vector<4x64xf32>
    %97 = arith.subf %87, %96 : vector<4x64xf32>
    %98 = arith.mulf %97, %97 : vector<4x64xf32>
    %cst_60 = arith.constant dense<0.000000e+00> : vector<64xf32>
    %99 = vector.multi_reduction <add>, %98, %cst_60 [0] : vector<4x64xf32> to vector<64xf32>
    %100 = vector.shape_cast %99 : vector<64xf32> to vector<1x64xf32>
    %cst_61 = arith.constant 4.000000e+00 : f32
    %101 = vector.broadcast %cst_61 : f32 to vector<1x64xf32>
    %102 = arith.divf %100, %101 : vector<1x64xf32>
    %103 = vector.broadcast %95 : vector<1x64xf32> to vector<4x64xf32>
    %104 = arith.subf %87, %103 : vector<4x64xf32>
    %cst_62 = arith.constant 9.99999974E-6 : f32
    %105 = vector.broadcast %cst_62 : f32 to vector<1x64xf32>
    %106 = arith.addf %102, %105 : vector<1x64xf32>
    %107 = math.rsqrt %106 : vector<1x64xf32>
    %108 = vector.broadcast %107 : vector<1x64xf32> to vector<4x64xf32>
    %109 = arith.mulf %104, %108 : vector<4x64xf32>
    %110 = vector.broadcast %89 : vector<1x64xf32> to vector<4x64xf32>
    %111 = arith.mulf %109, %110 : vector<4x64xf32>
    %112 = vector.broadcast %91 : vector<1x64xf32> to vector<4x64xf32>
    %113 = arith.addf %111, %112 : vector<4x64xf32>
    %114 = arith.truncf %113 : vector<4x64xf32> to vector<4x64xbf16>
    %c0_63 = arith.constant 0 : index
    %c0_64 = arith.constant 0 : index
    %c0_65 = arith.constant 0 : index
    %115 = vector.load %arg12[%c0_63, %c0_64, %c0_65] : memref<1x64x4xbf16, #tpu.memory_space<vmem>>, vector<1x64x4xbf16>
    %116 = vector.shape_cast %115 : vector<1x64x4xbf16> to vector<64x4xbf16>
    %cst_66 = arith.constant dense<0.000000e+00> : vector<4x4xf32>
    %117 = tpu.matmul %114, %116, %cst_66 {dimension_numbers = #tpu.dot_dimension_numbers<[1], [0], [0], [1], [0, 0, 1, 1], [], []>} : vector<4x64xbf16>, vector<64x4xbf16>, vector<4x4xf32> -> vector<4x4xf32>
    %c0_67 = arith.constant 0 : index
    %c0_68 = arith.constant 0 : index
    %c0_69 = arith.constant 0 : index
    %118 = vector.load %arg13[%c0_67, %c0_68, %c0_69] : memref<1x4x4xf32, #tpu.memory_space<vmem>>, vector<1x4x4xf32>
    %119 = vector.shape_cast %118 : vector<1x4x4xf32> to vector<4x4xf32>
    %120 = vector.shape_cast %117 : vector<4x4xf32> to vector<1x4x4xf32>
    tpu.vector_store %arg13[%c0_67, %c0_68, %c0_69], %120 {strides = array<i32>} : memref<1x4x4xf32, #tpu.memory_space<vmem>>, vector<1x4x4xf32>,
    return
  }
  func.func @transform_0(%arg0: i32) -> (i32, i32, i32) {
    %c0_i32 = arith.constant 0 : i32
    %c0_i32_0 = arith.constant 0 : i32
    %c0_i32_1 = arith.constant 0 : i32
    return %arg0, %c0_i32, %c0_i32_0 : i32, i32, i32
  }
  func.func @transform_1(%arg0: i32) -> (i32, i32, i32) {
    %c0_i32 = arith.constant 0 : i32
    %c0_i32_0 = arith.constant 0 : i32
    %c0_i32_1 = arith.constant 0 : i32
    return %arg0, %c0_i32, %c0_i32_0 : i32, i32, i32
  }
  func.func @transform_2(%arg0: i32) -> (i32, i32, i32) {
    %c0_i32 = arith.constant 0 : i32
    %c0_i32_0 = arith.constant 0 : i32
    %c0_i32_1 = arith.constant 0 : i32
    return %arg0, %c0_i32, %c0_i32_0 : i32, i32, i32
  }
  func.func @transform_3(%arg0: i32) -> (i32, i32, i32) {
    %c0_i32 = arith.constant 0 : i32
    %c0_i32_0 = arith.constant 0 : i32
    %c0_i32_1 = arith.constant 0 : i32
    return %arg0, %c0_i32, %c0_i32_0 : i32, i32, i32
  }
  func.func @transform_4(%arg0: i32) -> (i32, i32, i32) {
    %c0_i32 = arith.constant 0 : i32
    %c0_i32_0 = arith.constant 0 : i32
    %c0_i32_1 = arith.constant 0 : i32
    return %arg0, %c0_i32, %c0_i32_0 : i32, i32, i32
  }
  func.func @transform_5(%arg0: i32) -> (i32, i32, i32) {
    %c0_i32 = arith.constant 0 : i32
    %c0_i32_0 = arith.constant 0 : i32
    %c0_i32_1 = arith.constant 0 : i32
    return %arg0, %c0_i32, %c0_i32_0 : i32, i32, i32
  }
  func.func @transform_6(%arg0: i32) -> (i32, i32, i32) {
    %c0_i32 = arith.constant 0 : i32
    %c0_i32_0 = arith.constant 0 : i32
    %c0_i32_1 = arith.constant 0 : i32
    return %arg0, %c0_i32, %c0_i32_0 : i32, i32, i32
  }
  func.func @transform_7(%arg0: i32) -> (i32, i32, i32) {
    %c0_i32 = arith.constant 0 : i32
    %c0_i32_0 = arith.constant 0 : i32
    %c0_i32_1 = arith.constant 0 : i32
    return %arg0, %c0_i32, %c0_i32_0 : i32, i32, i32
  }
  func.func @transform_8(%arg0: i32) -> (i32, i32, i32) {
    %c0_i32 = arith.constant 0 : i32
    %c0_i32_0 = arith.constant 0 : i32
    %c0_i32_1 = arith.constant 0 : i32
    return %arg0, %c0_i32, %c0_i32_0 : i32, i32, i32
  }
  func.func @transform_9(%arg0: i32) -> (i32, i32, i32) {
    %c0_i32 = arith.constant 0 : i32
    %c0_i32_0 = arith.constant 0 : i32
    %c0_i32_1 = arith.constant 0 : i32
    return %arg0, %c0_i32, %c0_i32_0 : i32, i32, i32
  }
  func.func @transform_10(%arg0: i32) -> (i32, i32, i32) {
    %c0_i32 = arith.constant 0 : i32
    %c0_i32_0 = arith.constant 0 : i32
    %c0_i32_1 = arith.constant 0 : i32
    return %arg0, %c0_i32, %c0_i32_0 : i32, i32, i32
  }
  func.func @transform_11(%arg0: i32) -> (i32, i32, i32) {
    %c0_i32 = arith.constant 0 : i32
    %c0_i32_0 = arith.constant 0 : i32
    %c0_i32_1 = arith.constant 0 : i32
    return %arg0, %c0_i32, %c0_i32_0 : i32, i32, i32
  }
  func.func @transform_12(%arg0: i32) -> (i32, i32, i32) {
    %c0_i32 = arith.constant 0 : i32
    %c0_i32_0 = arith.constant 0 : i32
    %c0_i32_1 = arith.constant 0 : i32
    return %arg0, %c0_i32, %c0_i32_0 : i32, i32, i32
  }
}

</mosaic_0001>

<llo_original>
// kernel: teacher_forward.2
$region0: #{teacher_forward.2}
  #allocation0 [shape = 'u32[]', space=smem, size = 0x4, offset = 0x4, fixed_abs, tag = 'smem constant byte address 0x4 - core index']
  #allocation1 [shape = 'u32[144,128]{1,0:T(1,128)}', space=vmem, size = 0x12000, scoped, tag = 'internal scratch']
  %s0 = inlined_call_operand.vmem [shape: bf16[2,224,200], index: 0, kind: input, shape index: {}]
  %s1 = inlined_call_operand.vmem [shape: bf16[2,6,200,100], index: 1, kind: input, shape index: {}]
  %s2 = inlined_call_operand.vmem [shape: f32[2,1,100], index: 2, kind: input, shape index: {}]
  %s3 = inlined_call_operand.vmem [shape: bf16[2,216,100], index: 3, kind: output, shape index: {}]
  %s4 = sld [smem:[#allocation0]]
  $region45: #{teacher_forward.2} parent=0
    _
  %s6 = ssub.s32 1, %s4
  %s7 = scalar_select 0, %s6, %s4
  loop: start=0, step=1, limit=4
  $region2: #{teacher_forward.2} parent=0 // loop_pre_header
    _
  $region3: #{teacher_forward.2} parent=0 // loop_header
    %s9 = sphi 0, %s13
    %p10 = scmp.ge.s32.totalorder %s9, 4
    %s19 = sphi 0, %s21
    %s22 = sphi 0, %s19
    %s23 = sphi 0, %s22
    %s39 = sphi 0, %s23
    %s45 = sphi 0, %s47
    %s48 = sphi 0, %s45
    %s49 = sphi 0, %s48
    %s65 = sphi 0, %s49
    %s71 = sphi 0, %s73
    %s74 = sphi 0, %s71
    %s75 = sphi 0, %s74
    %s91 = sphi 0, %s75
    %s97 = sphi 0, %s99
    %s100 = sphi 0, %s97
    %s101 = sphi 0, %s100
    %s117 = sphi 0, %s101
  $region4: #{teacher_forward.2} parent=0 // loop_header_branch
    %12 = sbr.rel (%p10) target = $region8
  $region5: #{teacher_forward.2} parent=0 // loop_body
    %s14 = ssub.s32 %s9, 1
    %s15 = ssub.s32 %s9, 2
    %s16 = sadd.s32 %s9, 1
    %s17 = ssub.s32 %s9, %s16
    %p18 = scmp.eq.s32.totalorder %s17, 0
    %s20 = sadd.s32 %s19, 1
    %s21 = scalar_select %p18, %s19, %s20
    %p24 = pneg %p18
    %p25 = scmp.eq.s32.totalorder %s9, 1
    %p26 = por %p24, %p25
    %p27 = scmp.ne.s32.totalorder %s19, %s22
    %p28 = scmp.eq.s32.totalorder %s9, 0
    %p29 = por %p27, %p28
    %p30 = scmp.ne.s32.totalorder %s19, %s22
    %p31 = scmp.eq.s32.totalorder %s14, 1
    %p32 = por %p30, %p31
    %p33 = scmp.ne.s32.totalorder %s22, %s23
    %p34 = scmp.eq.s32.totalorder %s14, 0
    %p35 = por %p33, %p34
    %p36 = scmp.ne.s32.totalorder %s22, %s23
    %p37 = scmp.eq.s32.totalorder %s15, 1
    %p38 = por %p36, %p37
    %p40 = scmp.ne.s32.totalorder %s23, %s39
    %p41 = scmp.eq.s32.totalorder %s15, 0
    %p42 = por %p40, %p41
    %s43 = ssub.s32 %s9, %s16
    %p44 = scmp.eq.s32.totalorder %s43, 0
    %s46 = sadd.s32 %s45, 1
    %s47 = scalar_select %p44, %s45, %s46
    %p50 = pneg %p44
    %p51 = scmp.eq.s32.totalorder %s9, 1
    %p52 = por %p50, %p51
    %p53 = scmp.ne.s32.totalorder %s45, %s48
    %p54 = scmp.eq.s32.totalorder %s9, 0
    %p55 = por %p53, %p54
    %p56 = scmp.ne.s32.totalorder %s45, %s48
    %p57 = scmp.eq.s32.totalorder %s14, 1
    %p58 = por %p56, %p57
    %p59 = scmp.ne.s32.totalorder %s48, %s49
    %p60 = scmp.eq.s32.totalorder %s14, 0
    %p61 = por %p59, %p60
    %p62 = scmp.ne.s32.totalorder %s48, %s49
    %p63 = scmp.eq.s32.totalorder %s15, 1
    %p64 = por %p62, %p63
    %p66 = scmp.ne.s32.totalorder %s49, %s65
    %p67 = scmp.eq.s32.totalorder %s15, 0
    %p68 = por %p66, %p67
    %s69 = ssub.s32 %s9, %s16
    %p70 = scmp.eq.s32.totalorder %s69, 0
    %s72 = sadd.s32 %s71, 1
    %s73 = scalar_select %p70, %s71, %s72
    %p76 = pneg %p70
    %p77 = scmp.eq.s32.totalorder %s9, 1
    %p78 = por %p76, %p77
    %p79 = scmp.ne.s32.totalorder %s71, %s74
    %p80 = scmp.eq.s32.totalorder %s9, 0
    %p81 = por %p79, %p80
    %p82 = scmp.ne.s32.totalorder %s71, %s74
    %p83 = scmp.eq.s32.totalorder %s14, 1
    %p84 = por %p82, %p83
    %p85 = scmp.ne.s32.totalorder %s74, %s75
    %p86 = scmp.eq.s32.totalorder %s14, 0
    %p87 = por %p85, %p86
    %p88 = scmp.ne.s32.totalorder %s74, %s75
    %p89 = scmp.eq.s32.totalorder %s15, 1
    %p90 = por %p88, %p89
    %p92 = scmp.ne.s32.totalorder %s75, %s91
    %p93 = scmp.eq.s32.totalorder %s15, 0
    %p94 = por %p92, %p93
    %s95 = ssub.s32 %s9, %s16
    %p96 = scmp.eq.s32.totalorder %s95, 0
    %s98 = sadd.s32 %s97, 1
    %s99 = scalar_select %p96, %s97, %s98
    %p102 = pneg %p96
    %p103 = scmp.eq.s32.totalorder %s9, 1
    %p104 = por %p102, %p103
    %p105 = scmp.ne.s32.totalorder %s97, %s100
    %p106 = scmp.eq.s32.totalorder %s9, 0
    %p107 = por %p105, %p106
    %p108 = scmp.ne.s32.totalorder %s97, %s100
    %p109 = scmp.eq.s32.totalorder %s14, 1
    %p110 = por %p108, %p109
    %p111 = scmp.ne.s32.totalorder %s100, %s101
    %p112 = scmp.eq.s32.totalorder %s14, 0
    %p113 = por %p111, %p112
    %p114 = scmp.ne.s32.totalorder %s100, %s101
    %p115 = scmp.eq.s32.totalorder %s15, 1
    %p116 = por %p114, %p115
    %p118 = scmp.ne.s32.totalorder %s101, %s117
    %p119 = scmp.eq.s32.totalorder %s15, 0
    %p120 = por %p118, %p119
    %p121 = scmp.le.s32.totalorder 1, %s9
    %p122 = scmp.lt.s32.totalorder %s9, 3
    %p123 = pnand %p121, %p122
    %p124 = pneg %p123
    // Predicated region
    $region9: #{teacher_forward.2} parent=5 // pred_check
      _
    $region10: #{teacher_forward.2} parent=5 // pred_check_branch
      %126 = sbr.rel (%p123) target = $region12
    $region11: #{teacher_forward.2} parent=5 // pred_region
      %s127 = ssub.s32 %s9, 1
    $region12: #{teacher_forward.2} parent=5 // pred_fallthru
      _
    %p128 = scmp.lt.s32.totalorder %s9, 2
    // Predicated region
    $region13: #{teacher_forward.2} parent=5 // pred_check
      %p129 = pneg %p128
    $region14: #{teacher_forward.2} parent=5 // pred_check_branch
      %131 = sbr.rel (%p129) target = $region16
    $region15: #{teacher_forward.2} parent=5 // pred_region
      // Predicated region
      $region17: #{teacher_forward.2} parent=15 // pred_check
        %p132 = pneg %p29
      $region18: #{teacher_forward.2} parent=15 // pred_check_branch
        %134 = sbr.rel (%p132) target = $region20
      $region19: #{teacher_forward.2} parent=15 // pred_region
        %p135 = scmp.lt.s32.totalorder %s9, 1
        %s136 = scalar_select %p135, %s9, 1
        %s137 = smul.addr %s136, 56
        %s138 = smul.addr %s137, 4
        %s139 = scalar_lea.vmem %s0, %s138
      $region20: #{teacher_forward.2} parent=15 // pred_fallthru
        _
      // Predicated region
      $region21: #{teacher_forward.2} parent=15 // pred_check
        %p140 = pneg %p55
      $region22: #{teacher_forward.2} parent=15 // pred_check_branch
        %142 = sbr.rel (%p140) target = $region24
      $region23: #{teacher_forward.2} parent=15 // pred_region
        %p143 = scmp.lt.s32.totalorder %s9, 1
        %s144 = scalar_select %p143, %s9, 1
        %s145 = smul.addr %s144, 150
        %s146 = smul.addr %s145, 4
        %s147 = scalar_lea.vmem %s1, %s146
      $region24: #{teacher_forward.2} parent=15 // pred_fallthru
        _
      // Predicated region
      $region25: #{teacher_forward.2} parent=15 // pred_check
        %p148 = pneg %p81
      $region26: #{teacher_forward.2} parent=15 // pred_check_branch
        %150 = sbr.rel (%p148) target = $region28
      $region27: #{teacher_forward.2} parent=15 // pred_region
        %p151 = scmp.lt.s32.totalorder %s9, 1
        %s152 = scalar_select %p151, %s9, 1
        %s153 = scalar_lea.vmem %s2, %s152
      $region28: #{teacher_forward.2} parent=15 // pred_fallthru
        _
    $region16: #{teacher_forward.2} parent=5 // pred_fallthru
      _
    %p154 = scmp.le.s32.totalorder 1, %s9
    %p155 = scmp.lt.s32.totalorder %s9, 3
    %p156 = pnand %p154, %p155
    %p157 = pneg %p156
    // Predicated region
    $region29: #{teacher_forward.2} parent=5 // pred_check
      _
    $region30: #{teacher_forward.2} parent=5 // pred_check_branch
      %159 = sbr.rel (%p156) target = $region32
    $region31: #{teacher_forward.2} parent=5 // pred_region
      %s160 = ssub.s32 %s9, 1
      %p161 = scmp.lt.s32.totalorder %s14, 1
      %s162 = scalar_select %p161, %s14, 1
      %s163 = smul.addr %s162, 56
      %s164 = smul.addr %s163, 4
      %s165 = scalar_lea.vmem %s0, %s164
      %p166 = pneg %p35
      %p167 = pneg %p32
      %p168 = scmp.lt.s32.totalorder %s14, 1
      %s169 = scalar_select %p168, %s14, 1
      %s170 = smul.addr %s169, 150
      %s171 = smul.addr %s170, 4
      %s172 = scalar_lea.vmem %s1, %s171
      %p173 = pneg %p61
      %p174 = pneg %p58
      %p175 = scmp.lt.s32.totalorder %s14, 1
      %s176 = scalar_select %p175, %s14, 1
      %s177 = scalar_lea.vmem %s2, %s176
      %p178 = pneg %p87
      %p179 = pneg %p84
      %p180 = pneg %p113
      %p181 = pneg %p110
      %p182 = scmp.lt.s32.totalorder %s14, 1
      %s183 = scalar_select %p182, %s14, 1
      %s184 = smul.addr %s183, 27
      %s185 = smul.addr %s184, 4
      %s186 = scalar_lea.vmem %s3, %s185
      %p187 = scmp.lt.s32.totalorder %s14, 1
      %s188 = scalar_select %p187, %s14, 1
      %s189 = smul.addr %s188, 56
      %s190 = smul.addr %s189, 4
      %s191 = scalar_lea.vmem %s0, %s190
      %p192 = scmp.lt.s32.totalorder %s14, 1
      %s193 = scalar_select %p192, %s14, 1
      %s194 = smul.addr %s193, 150
      %s195 = smul.addr %s194, 4
      %s196 = scalar_lea.vmem %s1, %s195
      %p197 = scmp.lt.s32.totalorder %s14, 1
      %s198 = scalar_select %p197, %s14, 1
      %s199 = scalar_lea.vmem %s2, %s198
      %p200 = scmp.lt.s32.totalorder %s14, 1
      %s201 = scalar_select %p200, %s14, 1
      %s202 = smul.addr %s201, 27
      %s203 = smul.addr %s202, 4
      %s204 = scalar_lea.vmem %s3, %s203
      %v206 = vld [vmem:[%s191] sm:$0xff]
      %v207 = vld [vmem:[%s191 + $0x8] sm:$0xff]
      %v208 = vld [vmem:[%s191 + $0x10] sm:$0xff]
      %v209 = vld [vmem:[%s191 + $0x18] sm:$0xff]
      %v210 = vld [vmem:[%s191 + $0x20] sm:$0xff]
      %v211 = vld [vmem:[%s191 + $0x28] sm:$0xff]
      %v212 = vld [vmem:[%s191 + $0x30] sm:$0xff]
      %v213 = vld [vmem:[%s191 + $0x38] sm:$0xff]
      %v214 = vld [vmem:[%s191 + $0x40] sm:$0xff]
      %v215 = vld [vmem:[%s191 + $0x48] sm:$0xff]
      %v216 = vld [vmem:[%s191 + $0x50] sm:$0xff]
      %v217 = vld [vmem:[%s191 + $0x58] sm:$0xff]
      %v218 = vld [vmem:[%s191 + $0x60] sm:$0xff]
      %v219 = vld [vmem:[%s191 + $0x68] sm:$0xff]
      %v220 = vld [vmem:[%s191 + $0x70] sm:$0xff]
      %v221 = vld [vmem:[%s191 + $0x78] sm:$0xff]
      %v222 = vld [vmem:[%s191 + $0x80] sm:$0xff]
      %v223 = vld [vmem:[%s191 + $0x88] sm:$0xff]
      %v224 = vld [vmem:[%s191 + $0x90] sm:$0xff]
      %v225 = vld [vmem:[%s191 + $0x98] sm:$0xff]
      %v226 = vld [vmem:[%s191 + $0xa0] sm:$0xff]
      %v227 = vld [vmem:[%s191 + $0xa8] sm:$0xff]
      %v228 = vld [vmem:[%s191 + $0xb0] sm:$0xff]
      %v229 = vld [vmem:[%s191 + $0xb8] sm:$0xff]
      %v230 = vld [vmem:[%s191 + $0xc0] sm:$0xff]
      %v231 = vld [vmem:[%s191 + $0xc8] sm:$0xff]
      %v232 = vld [vmem:[%s191 + $0xd0] sm:$0xff]
      %v233 = vld [vmem:[%s191 + $0xd8] sm:$0xff]
      %v234 = vld [vmem:[%s196] sm:$0xf]
      %v235 = vld [vmem:[%s196 + $0x4] sm:$0xf]
      %v236 = vld [vmem:[%s196 + $0x8] sm:$0xf]
      %v237 = vld [vmem:[%s196 + $0xc] sm:$0xf]
      %v238 = vld [vmem:[%s196 + $0x10] sm:$0xf]
      %v239 = vld [vmem:[%s196 + $0x14] sm:$0xf]
      %v240 = vld [vmem:[%s196 + $0x18] sm:$0xf]
      %v241 = vld [vmem:[%s196 + $0x1c] sm:$0xf]
      %v242 = vld [vmem:[%s196 + $0x20] sm:$0xf]
      %v243 = vld [vmem:[%s196 + $0x24] sm:$0xf]
      %v244 = vld [vmem:[%s196 + $0x28] sm:$0xf]
      %v245 = vld [vmem:[%s196 + $0x2c] sm:$0xf]
      %v246 = vld [vmem:[%s196 + $0x30] sm:$0xf]
      %v247 = vld [vmem:[%s196 + $0x34] sm:$0xf]
      %v248 = vld [vmem:[%s196 + $0x38] sm:$0xf]
      %v249 = vld [vmem:[%s196 + $0x3c] sm:$0xf]
      %v250 = vld [vmem:[%s196 + $0x40] sm:$0xf]
      %v251 = vld [vmem:[%s196 + $0x44] sm:$0xf]
      %v252 = vld [vmem:[%s196 + $0x48] sm:$0xf]
      %v253 = vld [vmem:[%s196 + $0x4c] sm:$0xf]
      %v254 = vld [vmem:[%s196 + $0x50] sm:$0xf]
      %v255 = vld [vmem:[%s196 + $0x54] sm:$0xf]
      %v256 = vld [vmem:[%s196 + $0x58] sm:$0xf]
      %v257 = vld [vmem:[%s196 + $0x5c] sm:$0xf]
      %v258 = vld [vmem:[%s196 + $0x60] sm:$0xf]
      %s259 = scalar_lea.vmem %s196, 100
      %v260 = vld [vmem:[%s259] sm:$0xf]
      %v261 = vld [vmem:[%s259 + $0x4] sm:$0xf]
      %v262 = vld [vmem:[%s259 + $0x8] sm:$0xf]
      %v263 = vld [vmem:[%s259 + $0xc] sm:$0xf]
      %v264 = vld [vmem:[%s259 + $0x10] sm:$0xf]
      %v265 = vld [vmem:[%s259 + $0x14] sm:$0xf]
      %v266 = vld [vmem:[%s259 + $0x18] sm:$0xf]
      %v267 = vld [vmem:[%s259 + $0x1c] sm:$0xf]
      %v268 = vld [vmem:[%s259 + $0x20] sm:$0xf]
      %v269 = vld [vmem:[%s259 + $0x24] sm:$0xf]
      %v270 = vld [vmem:[%s259 + $0x28] sm:$0xf]
      %v271 = vld [vmem:[%s259 + $0x2c] sm:$0xf]
      %v272 = vld [vmem:[%s259 + $0x30] sm:$0xf]
      %v273 = vld [vmem:[%s259 + $0x34] sm:$0xf]
      %v274 = vld [vmem:[%s259 + $0x38] sm:$0xf]
      %v275 = vld [vmem:[%s259 + $0x3c] sm:$0xf]
      %v276 = vld [vmem:[%s259 + $0x40] sm:$0xf]
      %v277 = vld [vmem:[%s259 + $0x44] sm:$0xf]
      %v278 = vld [vmem:[%s259 + $0x48] sm:$0xf]
      %v279 = vld [vmem:[%s259 + $0x4c] sm:$0xf]
      %v280 = vld [vmem:[%s259 + $0x50] sm:$0xf]
      %v281 = vld [vmem:[%s259 + $0x54] sm:$0xf]
      %v282 = vld [vmem:[%s259 + $0x58] sm:$0xf]
      %v283 = vld [vmem:[%s259 + $0x5c] sm:$0xf]
      %v284 = vld [vmem:[%s259 + $0x60] sm:$0xf]
      %s285 = scalar_lea.vmem %s196, 200
      %v286 = vld [vmem:[%s285] sm:$0xf]
      %v287 = vld [vmem:[%s285 + $0x4] sm:$0xf]
      %v288 = vld [vmem:[%s285 + $0x8] sm:$0xf]
      %v289 = vld [vmem:[%s285 + $0xc] sm:$0xf]
      %v290 = vld [vmem:[%s285 + $0x10] sm:$0xf]
      %v291 = vld [vmem:[%s285 + $0x14] sm:$0xf]
      %v292 = vld [vmem:[%s285 + $0x18] sm:$0xf]
      %v293 = vld [vmem:[%s285 + $0x1c] sm:$0xf]
      %v294 = vld [vmem:[%s285 + $0x20] sm:$0xf]
      %v295 = vld [vmem:[%s285 + $0x24] sm:$0xf]
      %v296 = vld [vmem:[%s285 + $0x28] sm:$0xf]
      %v297 = vld [vmem:[%s285 + $0x2c] sm:$0xf]
      %v298 = vld [vmem:[%s285 + $0x30] sm:$0xf]
      %v299 = vld [vmem:[%s285 + $0x34] sm:$0xf]
      %v300 = vld [vmem:[%s285 + $0x38] sm:$0xf]
      %v301 = vld [vmem:[%s285 + $0x3c] sm:$0xf]
      %v302 = vld [vmem:[%s285 + $0x40] sm:$0xf]
      %v303 = vld [vmem:[%s285 + $0x44] sm:$0xf]
      %v304 = vld [vmem:[%s285 + $0x48] sm:$0xf]
      %v305 = vld [vmem:[%s285 + $0x4c] sm:$0xf]
      %v306 = vld [vmem:[%s285 + $0x50] sm:$0xf]
      %v307 = vld [vmem:[%s285 + $0x54] sm:$0xf]
      %v308 = vld [vmem:[%s285 + $0x58] sm:$0xf]
      %v309 = vld [vmem:[%s285 + $0x5c] sm:$0xf]
      %v310 = vld [vmem:[%s285 + $0x60] sm:$0xf]
      %v339 = vunpack.c.l.b16 %v206
      %v340 = vunpack.c.h.b16 %v206
      %v341 = vunpack.c.l.b16 %v207
      %v342 = vunpack.c.h.b16 %v207
      %v343 = vunpack.c.l.b16 %v208
      %v344 = vunpack.c.h.b16 %v208
      %v345 = vunpack.c.l.b16 %v209
      %v346 = vunpack.c.h.b16 %v209
      %v347 = vunpack.c.l.b16 %v210
      %v348 = vunpack.c.h.b16 %v210
      %v349 = vunpack.c.l.b16 %v211
      %v350 = vunpack.c.h.b16 %v211
      %v351 = vunpack.c.l.b16 %v212
      %v352 = vunpack.c.h.b16 %v212
      %v353 = vunpack.c.l.b16 %v213
      %v354 = vunpack.c.h.b16 %v213
      %v355 = vunpack.c.l.b16 %v214
      %v356 = vunpack.c.h.b16 %v214
      %v357 = vunpack.c.l.b16 %v215
      %v358 = vunpack.c.h.b16 %v215
      %v359 = vunpack.c.l.b16 %v216
      %v360 = vunpack.c.h.b16 %v216
      %v361 = vunpack.c.l.b16 %v217
      %v362 = vunpack.c.h.b16 %v217
      %v363 = vunpack.c.l.b16 %v218
      %v364 = vunpack.c.h.b16 %v218
      %v365 = vunpack.c.l.b16 %v219
      %v366 = vunpack.c.h.b16 %v219
      %v367 = vunpack.c.l.b16 %v220
      %v368 = vunpack.c.h.b16 %v220
      %v369 = vunpack.c.l.b16 %v221
      %v370 = vunpack.c.h.b16 %v221
      %v371 = vunpack.c.l.b16 %v222
      %v372 = vunpack.c.h.b16 %v222
      %v373 = vunpack.c.l.b16 %v223
      %v374 = vunpack.c.h.b16 %v223
      %v375 = vunpack.c.l.b16 %v224
      %v376 = vunpack.c.h.b16 %v224
      %v377 = vunpack.c.l.b16 %v225
      %v378 = vunpack.c.h.b16 %v225
      %v379 = vunpack.c.l.b16 %v226
      %v380 = vunpack.c.h.b16 %v226
      %v381 = vunpack.c.l.b16 %v227
      %v382 = vunpack.c.h.b16 %v227
      %v383 = vunpack.c.l.b16 %v228
      %v384 = vunpack.c.h.b16 %v228
      %v385 = vunpack.c.l.b16 %v229
      %v386 = vunpack.c.h.b16 %v229
      %v387 = vunpack.c.l.b16 %v230
      %v388 = vunpack.c.h.b16 %v230
      %v389 = vunpack.c.l.b16 %v231
      %v390 = vunpack.c.h.b16 %v231
      %v391 = vunpack.c.l.b16 %v232
      %v392 = vunpack.c.h.b16 %v232
      %v393 = vunpack.c.l.b16 %v233
      %v394 = vunpack.c.h.b16 %v233
      %v395 = vpack.c.b16 %v341, %v339
      %v396 = vpack.c.b16 %v342, %v340
      %v397 = vpack.c.b16 %v345, %v343
      %v398 = vpack.c.b16 %v346, %v344
      %v399 = vpack.c.b16 %v349, %v347
      %v400 = vpack.c.b16 %v350, %v348
      %v401 = vpack.c.b16 %v353, %v351
      %v402 = vpack.c.b16 %v354, %v352
      %v403 = vpack.c.b16 %v357, %v355
      %v404 = vpack.c.b16 %v358, %v356
      %v405 = vpack.c.b16 %v361, %v359
      %v406 = vpack.c.b16 %v362, %v360
      %v407 = vpack.c.b16 %v365, %v363
      %v408 = vpack.c.b16 %v366, %v364
      %v409 = vpack.c.b16 %v369, %v367
      %v410 = vpack.c.b16 %v370, %v368
      %v411 = vpack.c.b16 %v373, %v371
      %v412 = vpack.c.b16 %v374, %v372
      %v413 = vpack.c.b16 %v377, %v375
      %v414 = vpack.c.b16 %v378, %v376
      %v415 = vpack.c.b16 %v381, %v379
      %v416 = vpack.c.b16 %v382, %v380
      %v417 = vpack.c.b16 %v385, %v383
      %v418 = vpack.c.b16 %v386, %v384
      %v419 = vpack.c.b16 %v389, %v387
      %v420 = vpack.c.b16 %v390, %v388
      %v421 = vpack.c.b16 %v393, %v391
      %v422 = vpack.c.b16 %v394, %v392
      %vm423 = vcmask 1045504
      %v424 = vrot.slane %v395, 2
      %v425 = vrot.slane %v397, 2
      %v426 = vsel %vm423, %v424, %v425
      %v427 = vrot.slane %v396, 2
      %v428 = vrot.slane %v398, 2
      %v429 = vsel %vm423, %v427, %v428
      %v430 = vrot.slane %v399, 2
      %v431 = vsel %vm423, %v425, %v430
      %v432 = vrot.slane %v400, 2
      %v433 = vsel %vm423, %v428, %v432
      %v434 = vrot.slane %v401, 2
      %v435 = vsel %vm423, %v430, %v434
      %v436 = vrot.slane %v402, 2
      %v437 = vsel %vm423, %v432, %v436
      %v438 = vrot.slane %v403, 2
      %v439 = vsel %vm423, %v434, %v438
      %v440 = vrot.slane %v404, 2
      %v441 = vsel %vm423, %v436, %v440
      %v442 = vrot.slane %v405, 2
      %v443 = vsel %vm423, %v438, %v442
      %v444 = vrot.slane %v406, 2
      %v445 = vsel %vm423, %v440, %v444
      %v446 = vrot.slane %v407, 2
      %v447 = vsel %vm423, %v442, %v446
      %v448 = vrot.slane %v408, 2
      %v449 = vsel %vm423, %v444, %v448
      %v450 = vrot.slane %v409, 2
      %v451 = vsel %vm423, %v446, %v450
      %v452 = vrot.slane %v410, 2
      %v453 = vsel %vm423, %v448, %v452
      %v454 = vrot.slane %v411, 2
      %v455 = vsel %vm423, %v450, %v454
      %v456 = vrot.slane %v412, 2
      %v457 = vsel %vm423, %v452, %v456
      %v458 = vrot.slane %v413, 2
      %v459 = vsel %vm423, %v454, %v458
      %v460 = vrot.slane %v414, 2
      %v461 = vsel %vm423, %v456, %v460
      %v462 = vrot.slane %v415, 2
      %v463 = vsel %vm423, %v458, %v462
      %v464 = vrot.slane %v416, 2
      %v465 = vsel %vm423, %v460, %v464
      %v466 = vrot.slane %v417, 2
      %v467 = vsel %vm423, %v462, %v466
      %v468 = vrot.slane %v418, 2
      %v469 = vsel %vm423, %v464, %v468
      %v470 = vrot.slane %v419, 2
      %v471 = vsel %vm423, %v466, %v470
      %v472 = vrot.slane %v420, 2
      %v473 = vsel %vm423, %v468, %v472
      %v474 = vrot.slane %v421, 2
      %v475 = vsel %vm423, %v470, %v474
      %v476 = vrot.slane %v422, 2
      %v477 = vsel %vm423, %v472, %v476
      %v517 = vunpack.c.l.b16 %v286
      %v518 = vunpack.c.l.b16 %v287
      %v519 = vunpack.c.l.b16 %v288
      %v520 = vunpack.c.l.b16 %v289
      %v521 = vunpack.c.l.b16 %v290
      %v522 = vunpack.c.l.b16 %v291
      %v523 = vunpack.c.l.b16 %v292
      %v524 = vunpack.c.l.b16 %v293
      %v525 = vunpack.c.l.b16 %v294
      %v526 = vunpack.c.l.b16 %v295
      %v527 = vunpack.c.l.b16 %v296
      %v528 = vunpack.c.l.b16 %v297
      %v529 = vunpack.c.l.b16 %v298
      %v530 = vunpack.c.l.b16 %v299
      %v531 = vunpack.c.l.b16 %v300
      %v532 = vunpack.c.l.b16 %v301
      %v533 = vunpack.c.l.b16 %v302
      %v534 = vunpack.c.l.b16 %v303
      %v535 = vunpack.c.l.b16 %v304
      %v536 = vunpack.c.l.b16 %v305
      %v537 = vunpack.c.l.b16 %v306
      %v538 = vunpack.c.l.b16 %v307
      %v539 = vunpack.c.l.b16 %v308
      %v540 = vunpack.c.l.b16 %v309
      %v541 = vunpack.c.l.b16 %v310
      %v542 = vpack.c.b16 %v518, %v517
      %v543 = vpack.c.b16 %v520, %v519
      %v544 = vpack.c.b16 %v522, %v521
      %v545 = vpack.c.b16 %v524, %v523
      %v546 = vpack.c.b16 %v526, %v525
      %v547 = vpack.c.b16 %v528, %v527
      %v548 = vpack.c.b16 %v530, %v529
      %v549 = vpack.c.b16 %v532, %v531
      %v550 = vpack.c.b16 %v534, %v533
      %v551 = vpack.c.b16 %v536, %v535
      %v552 = vpack.c.b16 %v538, %v537
      %v553 = vpack.c.b16 %v540, %v539
      %v554 = vpack.c.b16 %v541, %v541
      %vm567 = vcmask 588800
      %v569 = vsel %vm567, %v429, 0
      %v572 = vsel %vm567, %v433, 0
      %v575 = vsel %vm567, %v437, 0
      %v578 = vsel %vm567, %v441, 0
      %v581 = vsel %vm567, %v445, 0
      %v584 = vsel %vm567, %v449, 0
      %v587 = vsel %vm567, %v453, 0
      %v590 = vsel %vm567, %v457, 0
      %v593 = vsel %vm567, %v461, 0
      %v596 = vsel %vm567, %v465, 0
      %v599 = vsel %vm567, %v469, 0
      %v602 = vsel %vm567, %v473, 0
      %v605 = vsel %vm567, %v477, 0
      %v608 = vsel %vm567, %v476, 0
      %vm610 = vcmask 1043456
      %v612 = vsel %vm610, %v554, 0
      %614 = vmatprep.subr.bf16.mxu0 0
      %615 = vmatpush1.bf16.msra.mxu0 %v542
      %616 = vmatprep.subr.bf16.mxu0 0
      %617 = vmatpush1.bf16.msra.mxu0 %v543
      %618 = vmatprep.subr.bf16.mxu0 0
      %619 = vmatpush1.bf16.msra.mxu0 %v544
      %620 = vmatprep.subr.bf16.mxu0 0
      %621 = vmatpush1.bf16.msra.mxu0 %v545
      %622 = vmatprep.subr.bf16.mxu0 0
      %623 = vmatpush1.bf16.msra.mxu0 %v546
      %624 = vmatprep.subr.bf16.mxu0 0
      %625 = vmatpush1.bf16.msra.mxu0 %v547
      %626 = vmatprep.subr.bf16.mxu0 0
      %627 = vmatpush1.bf16.msra.mxu0 %v548
      %628 = vmatprep.subr.bf16.mxu0 0
      %629 = vmatpush1.bf16.msra.mxu0 %v549
      %630 = vmatprep.subr.bf16.mxu0 0
      %631 = vmatpush1.bf16.msra.mxu0 %v550
      %632 = vmatprep.subr.bf16.mxu0 0
      %633 = vmatpush1.bf16.msra.mxu0 %v551
      %634 = vmatprep.subr.bf16.mxu0 0
      %635 = vmatpush1.bf16.msra.mxu0 %v552
      %636 = vmatprep.subr.bf16.mxu0 0
      %637 = vmatpush1.bf16.msra.mxu0 %v553
      %638 = vmatprep.subr.bf16.mxu0 0
      %639 = vmatpush1.bf16.msra.mxu0 %v612
      %640 = vmatprep.subr.bf16.mxu0 0
      %641 = vmatpush1.bf16.msra.mxu0 0
      %642 = vmatprep.subr.bf16.mxu0 0
      %643 = vmatpush1.bf16.msra.mxu0 0
      %644 = vmatprep.subr.bf16.mxu0 0
      %645 = vmatpush1.bf16.msra.mxu0 0
      %646 = vmatprep.mubr.bf16.mxu0 %v569
      %647 = vmatmul.mubr.bf16.gmra.mrb[0].mxu0 %v426
      %v648 = vpop.f32.mrb[0].mxu0
      %v649 = vadd.f32 0.0, %v648
      %v650 = vpop.f32.mrb[0].mxu0
      %v651 = vpop.f32.mrb[0].mxu0
      %v652 = vadd.f32 0.0, %v651
      %v653 = vpop.f32.mrb[0].mxu0
      %654 = vmatprep.mubr.bf16.mxu0 %v572
      %655 = vmatmul.mubr.bf16.gmra.mrb[0].mxu0 %v431
      %v656 = vpop.f32.mrb[0].mxu0
      %v657 = vadd.f32 0.0, %v656
      %v658 = vpop.f32.mrb[0].mxu0
      %v659 = vpop.f32.mrb[0].mxu0
      %v660 = vadd.f32 0.0, %v659
      %v661 = vpop.f32.mrb[0].mxu0
      %662 = vmatprep.mubr.bf16.mxu0 %v575
      %663 = vmatmul.mubr.bf16.gmra.mrb[0].mxu0 %v435
      %v664 = vpop.f32.mrb[0].mxu0
      %v665 = vadd.f32 0.0, %v664
      %v666 = vpop.f32.mrb[0].mxu0
      %v667 = vpop.f32.mrb[0].mxu0
      %v668 = vadd.f32 0.0, %v667
      %v669 = vpop.f32.mrb[0].mxu0
      %670 = vmatprep.mubr.bf16.mxu0 %v578
      %671 = vmatmul.mubr.bf16.gmra.mrb[0].mxu0 %v439
      %v672 = vpop.f32.mrb[0].mxu0
      %v673 = vadd.f32 0.0, %v672
      %v674 = vpop.f32.mrb[0].mxu0
      %v675 = vpop.f32.mrb[0].mxu0
      %v676 = vadd.f32 0.0, %v675
      %v677 = vpop.f32.mrb[0].mxu0
      %678 = vmatprep.mubr.bf16.mxu0 %v581
      %679 = vmatmul.mubr.bf16.gmra.mrb[0].mxu0 %v443
      %v680 = vpop.f32.mrb[0].mxu0
      %v681 = vadd.f32 0.0, %v680
      %v682 = vpop.f32.mrb[0].mxu0
      %v683 = vpop.f32.mrb[0].mxu0
      %v684 = vadd.f32 0.0, %v683
      %v685 = vpop.f32.mrb[0].mxu0
      %686 = vmatprep.mubr.bf16.mxu0 %v584
      %687 = vmatmul.mubr.bf16.gmra.mrb[0].mxu0 %v447
      %v688 = vpop.f32.mrb[0].mxu0
      %v689 = vadd.f32 0.0, %v688
      %v690 = vpop.f32.mrb[0].mxu0
      %v691 = vpop.f32.mrb[0].mxu0
      %v692 = vadd.f32 0.0, %v691
      %v693 = vpop.f32.mrb[0].mxu0
      %694 = vmatprep.mubr.bf16.mxu0 %v587
      %695 = vmatmul.mubr.bf16.gmra.mrb[0].mxu0 %v451
      %v696 = vpop.f32.mrb[0].mxu0
      %v697 = vadd.f32 0.0, %v696
      %v698 = vpop.f32.mrb[0].mxu0
      %v699 = vpop.f32.mrb[0].mxu0
      %v700 = vadd.f32 0.0, %v699
      %v701 = vpop.f32.mrb[0].mxu0
      %702 = vmatprep.mubr.bf16.mxu0 %v590
      %703 = vmatmul.mubr.bf16.gmra.mrb[0].mxu0 %v455
      %v704 = vpop.f32.mrb[0].mxu0
      %v705 = vadd.f32 0.0, %v704
      %v706 = vpop.f32.mrb[0].mxu0
      %v707 = vpop.f32.mrb[0].mxu0
      %v708 = vadd.f32 0.0, %v707
      %v709 = vpop.f32.mrb[0].mxu0
      %710 = vmatprep.mubr.bf16.mxu0 %v593
      %711 = vmatmul.mubr.bf16.gmra.mrb[0].mxu0 %v459
      %v712 = vpop.f32.mrb[0].mxu0
      %v713 = vadd.f32 0.0, %v712
      %v714 = vpop.f32.mrb[0].mxu0
      %v715 = vpop.f32.mrb[0].mxu0
      %v716 = vadd.f32 0.0, %v715
      %v717 = vpop.f32.mrb[0].mxu0
      %718 = vmatprep.mubr.bf16.mxu0 %v596
      %719 = vmatmul.mubr.bf16.gmra.mrb[0].mxu0 %v463
      %v720 = vpop.f32.mrb[0].mxu0
      %v721 = vadd.f32 0.0, %v720
      %v722 = vpop.f32.mrb[0].mxu0
      %v723 = vpop.f32.mrb[0].mxu0
      %v724 = vadd.f32 0.0, %v723
      %v725 = vpop.f32.mrb[0].mxu0
      %726 = vmatprep.mubr.bf16.mxu0 %v599
      %727 = vmatmul.mubr.bf16.gmra.mrb[0].mxu0 %v467
      %v728 = vpop.f32.mrb[0].mxu0
      %v729 = vadd.f32 0.0, %v728
      %v730 = vpop.f32.mrb[0].mxu0
      %v731 = vpop.f32.mrb[0].mxu0
      %v732 = vadd.f32 0.0, %v731
      %v733 = vpop.f32.mrb[0].mxu0
      %734 = vmatprep.mubr.bf16.mxu0 %v602
      %735 = vmatmul.mubr.bf16.gmra.mrb[0].mxu0 %v471
      %v736 = vpop.f32.mrb[0].mxu0
      %v737 = vadd.f32 0.0, %v736
      %v738 = vpop.f32.mrb[0].mxu0
      %v739 = vpop.f32.mrb[0].mxu0
      %v740 = vadd.f32 0.0, %v739
      %v741 = vpop.f32.mrb[0].mxu0
      %742 = vmatprep.mubr.bf16.mxu0 %v605
      %743 = vmatmul.mubr.bf16.gmra.mrb[0].mxu0 %v475
      %v744 = vpop.f32.mrb[0].mxu0
      %v745 = vadd.f32 0.0, %v744
      %v746 = vpop.f32.mrb[0].mxu0
      %v747 = vpop.f32.mrb[0].mxu0
      %v748 = vadd.f32 0.0, %v747
      %v749 = vpop.f32.mrb[0].mxu0
      %750 = vmatprep.mubr.bf16.mxu0 %v608
      %751 = vmatmul.mubr.bf16.gmra.mrb[0].mxu0 %v474
      %v752 = vpop.f32.mrb[0].mxu0
      %v753 = vadd.f32 0.0, %v752
      %v754 = vpop.f32.mrb[0].mxu0
      %v755 = vpop.f32.mrb[0].mxu0
      %v756 = vpop.f32.mrb[0].mxu0
      %757 = vdwg.mxu0
      %v758 = vpack.c.b16 %v391, %v391
      %v759 = vpack.c.b16 %v392, %v392
      %v799 = vunpack.c.l.b16 %v234
      %v800 = vunpack.c.l.b16 %v235
      %v801 = vunpack.c.l.b16 %v236
      %v802 = vunpack.c.l.b16 %v237
      %v803 = vunpack.c.l.b16 %v238
      %v804 = vunpack.c.l.b16 %v239
      %v805 = vunpack.c.l.b16 %v240
      %v806 = vunpack.c.l.b16 %v241
      %v807 = vunpack.c.l.b16 %v242
      %v808 = vunpack.c.l.b16 %v243
      %v809 = vunpack.c.l.b16 %v244
      %v810 = vunpack.c.l.b16 %v245
      %v811 = vunpack.c.l.b16 %v246
      %v812 = vunpack.c.l.b16 %v247
      %v813 = vunpack.c.l.b16 %v248
      %v814 = vunpack.c.l.b16 %v249
      %v815 = vunpack.c.l.b16 %v250
      %v816 = vunpack.c.l.b16 %v251
      %v817 = vunpack.c.l.b16 %v252
      %v818 = vunpack.c.l.b16 %v253
      %v819 = vunpack.c.l.b16 %v254
      %v820 = vunpack.c.l.b16 %v255
      %v821 = vunpack.c.l.b16 %v256
      %v822 = vunpack.c.l.b16 %v257
      %v823 = vunpack.c.l.b16 %v258
      %v824 = vpack.c.b16 %v800, %v799
      %v825 = vpack.c.b16 %v802, %v801
      %v826 = vpack.c.b16 %v804, %v803
      %v827 = vpack.c.b16 %v806, %v805
      %v828 = vpack.c.b16 %v808, %v807
      %v829 = vpack.c.b16 %v810, %v809
      %v830 = vpack.c.b16 %v812, %v811
      %v831 = vpack.c.b16 %v814, %v813
      %v832 = vpack.c.b16 %v816, %v815
      %v833 = vpack.c.b16 %v818, %v817
      %v834 = vpack.c.b16 %v820, %v819
      %v835 = vpack.c.b16 %v822, %v821
      %v836 = vpack.c.b16 %v823, %v823
      %v850 = vsel %vm567, %v396, 0
      %v853 = vsel %vm567, %v398, 0
      %v856 = vsel %vm567, %v400, 0
      %v859 = vsel %vm567, %v402, 0
      %v862 = vsel %vm567, %v404, 0
      %v865 = vsel %vm567, %v406, 0
      %v868 = vsel %vm567, %v408, 0
      %v871 = vsel %vm567, %v410, 0
      %v874 = vsel %vm567, %v412, 0
      %v877 = vsel %vm567, %v414, 0
      %v880 = vsel %vm567, %v416, 0
      %v883 = vsel %vm567, %v418, 0
      %v886 = vsel %vm567, %v420, 0
      %v889 = vsel %vm567, %v759, 0
      %v892 = vsel %vm610, %v836, 0
      %894 = vmatprep.subr.bf16.mxu0 0
      %895 = vmatpush1.bf16.msra.mxu0 %v824
      %896 = vmatprep.subr.bf16.mxu0 0
      %897 = vmatpush1.bf16.msra.mxu0 %v825
      %898 = vmatprep.subr.bf16.mxu0 0
      %899 = vmatpush1.bf16.msra.mxu0 %v826
      %900 = vmatprep.subr.bf16.mxu0 0
      %901 = vmatpush1.bf16.msra.mxu0 %v827
      %902 = vmatprep.subr.bf16.mxu0 0
      %903 = vmatpush1.bf16.msra.mxu0 %v828
      %904 = vmatprep.subr.bf16.mxu0 0
      %905 = vmatpush1.bf16.msra.mxu0 %v829
      %906 = vmatprep.subr.bf16.mxu0 0
      %907 = vmatpush1.bf16.msra.mxu0 %v830
      %908 = vmatprep.subr.bf16.mxu0 0
      %909 = vmatpush1.bf16.msra.mxu0 %v831
      %910 = vmatprep.subr.bf16.mxu0 0
      %911 = vmatpush1.bf16.msra.mxu0 %v832
      %912 = vmatprep.subr.bf16.mxu0 0
      %913 = vmatpush1.bf16.msra.mxu0 %v833
      %914 = vmatprep.subr.bf16.mxu0 0
      %915 = vmatpush1.bf16.msra.mxu0 %v834
      %916 = vmatprep.subr.bf16.mxu0 0
      %917 = vmatpush1.bf16.msra.mxu0 %v835
      %918 = vmatprep.subr.bf16.mxu0 0
      %919 = vmatpush1.bf16.msra.mxu0 %v892
      %920 = vmatprep.subr.bf16.mxu0 0
      %921 = vmatpush1.bf16.msra.mxu0 0
      %922 = vmatprep.subr.bf16.mxu0 0
      %923 = vmatpush1.bf16.msra.mxu0 0
      %924 = vmatprep.subr.bf16.mxu0 0
      %925 = vmatpush1.bf16.msra.mxu0 0
      %926 = vmatprep.mubr.bf16.mxu0 %v850
      %927 = vmatmul.mubr.bf16.gmra.mrb[0].mxu0 %v395
      %v928 = vpop.f32.mrb[0].mxu0
      %v929 = vadd.f32 %v649, %v928
      %v930 = vpop.f32.mrb[0].mxu0
      %v931 = vpop.f32.mrb[0].mxu0
      %v932 = vadd.f32 %v652, %v931
      %v933 = vpop.f32.mrb[0].mxu0
      %934 = vmatprep.mubr.bf16.mxu0 %v853
      %935 = vmatmul.mubr.bf16.gmra.mrb[0].mxu0 %v397
      %v936 = vpop.f32.mrb[0].mxu0
      %v937 = vadd.f32 %v657, %v936
      %v938 = vpop.f32.mrb[0].mxu0
      %v939 = vpop.f32.mrb[0].mxu0
      %v940 = vadd.f32 %v660, %v939
      %v941 = vpop.f32.mrb[0].mxu0
      %942 = vmatprep.mubr.bf16.mxu0 %v856
      %943 = vmatmul.mubr.bf16.gmra.mrb[0].mxu0 %v399
      %v944 = vpop.f32.mrb[0].mxu0
      %v945 = vadd.f32 %v665, %v944
      %v946 = vpop.f32.mrb[0].mxu0
      %v947 = vpop.f32.mrb[0].mxu0
      %v948 = vadd.f32 %v668, %v947
      %v949 = vpop.f32.mrb[0].mxu0
      %950 = vmatprep.mubr.bf16.mxu0 %v859
      %951 = vmatmul.mubr.bf16.gmra.mrb[0].mxu0 %v401
      %v952 = vpop.f32.mrb[0].mxu0
      %v953 = vadd.f32 %v673, %v952
      %v954 = vpop.f32.mrb[0].mxu0
      %v955 = vpop.f32.mrb[0].mxu0
      %v956 = vadd.f32 %v676, %v955
      %v957 = vpop.f32.mrb[0].mxu0
      %958 = vmatprep.mubr.bf16.mxu0 %v862
      %959 = vmatmul.mubr.bf16.gmra.mrb[0].mxu0 %v403
      %v960 = vpop.f32.mrb[0].mxu0
      %v961 = vadd.f32 %v681, %v960
      %v962 = vpop.f32.mrb[0].mxu0
      %v963 = vpop.f32.mrb[0].mxu0
      %v964 = vadd.f32 %v684, %v963
      %v965 = vpop.f32.mrb[0].mxu0
      %966 = vmatprep.mubr.bf16.mxu0 %v865
      %967 = vmatmul.mubr.bf16.gmra.mrb[0].mxu0 %v405
      %v968 = vpop.f32.mrb[0].mxu0
      %v969 = vadd.f32 %v689, %v968
      %v970 = vpop.f32.mrb[0].mxu0
      %v971 = vpop.f32.mrb[0].mxu0
      %v972 = vadd.f32 %v692, %v971
      %v973 = vpop.f32.mrb[0].mxu0
      %974 = vmatprep.mubr.bf16.mxu0 %v868
      %975 = vmatmul.mubr.bf16.gmra.mrb[0].mxu0 %v407
      %v976 = vpop.f32.mrb[0].mxu0
      %v977 = vadd.f32 %v697, %v976
      %v978 = vpop.f32.mrb[0].mxu0
      %v979 = vpop.f32.mrb[0].mxu0
      %v980 = vadd.f32 %v700, %v979
      %v981 = vpop.f32.mrb[0].mxu0
      %982 = vmatprep.mubr.bf16.mxu0 %v871
      %983 = vmatmul.mubr.bf16.gmra.mrb[0].mxu0 %v409
      %v984 = vpop.f32.mrb[0].mxu0
      %v985 = vadd.f32 %v705, %v984
      %v986 = vpop.f32.mrb[0].mxu0
      %v987 = vpop.f32.mrb[0].mxu0
      %v988 = vadd.f32 %v708, %v987
      %v989 = vpop.f32.mrb[0].mxu0
      %990 = vmatprep.mubr.bf16.mxu0 %v874
      %991 = vmatmul.mubr.bf16.gmra.mrb[0].mxu0 %v411
      %v992 = vpop.f32.mrb[0].mxu0
      %v993 = vadd.f32 %v713, %v992
      %v994 = vpop.f32.mrb[0].mxu0
      %v995 = vpop.f32.mrb[0].mxu0
      %v996 = vadd.f32 %v716, %v995
      %v997 = vpop.f32.mrb[0].mxu0
      %998 = vmatprep.mubr.bf16.mxu0 %v877
      %999 = vmatmul.mubr.bf16.gmra.mrb[0].mxu0 %v413
      %v1000 = vpop.f32.mrb[0].mxu0
      %v1001 = vadd.f32 %v721, %v1000
      %v1002 = vpop.f32.mrb[0].mxu0
      %v1003 = vpop.f32.mrb[0].mxu0
      %v1004 = vadd.f32 %v724, %v1003
      %v1005 = vpop.f32.mrb[0].mxu0
      %1006 = vmatprep.mubr.bf16.mxu0 %v880
      %1007 = vmatmul.mubr.bf16.gmra.mrb[0].mxu0 %v415
      %v1008 = vpop.f32.mrb[0].mxu0
      %v1009 = vadd.f32 %v729, %v1008
      %v1010 = vpop.f32.mrb[0].mxu0
      %v1011 = vpop.f32.mrb[0].mxu0
      %v1012 = vadd.f32 %v732, %v1011
      %v1013 = vpop.f32.mrb[0].mxu0
      %1014 = vmatprep.mubr.bf16.mxu0 %v883
      %1015 = vmatmul.mubr.bf16.gmra.mrb[0].mxu0 %v417
      %v1016 = vpop.f32.mrb[0].mxu0
      %v1017 = vadd.f32 %v737, %v1016
      %v1018 = vpop.f32.mrb[0].mxu0
      %v1019 = vpop.f32.mrb[0].mxu0
      %v1020 = vadd.f32 %v740, %v1019
      %v1021 = vpop.f32.mrb[0].mxu0
      %1022 = vmatprep.mubr.bf16.mxu0 %v886
      %1023 = vmatmul.mubr.bf16.gmra.mrb[0].mxu0 %v419
      %v1024 = vpop.f32.mrb[0].mxu0
      %v1025 = vadd.f32 %v745, %v1024
      %v1026 = vpop.f32.mrb[0].mxu0
      %v1027 = vpop.f32.mrb[0].mxu0
      %v1028 = vadd.f32 %v748, %v1027
      %v1029 = vpop.f32.mrb[0].mxu0
      %1030 = vmatprep.mubr.bf16.mxu0 %v889
      %1031 = vmatmul.mubr.bf16.gmra.mrb[0].mxu0 %v758
      %v1032 = vpop.f32.mrb[0].mxu0
      %v1033 = vadd.f32 %v753, %v1032
      %v1034 = vpop.f32.mrb[0].mxu0
      %v1035 = vpop.f32.mrb[0].mxu0
      %v1036 = vpop.f32.mrb[0].mxu0
      %1037 = vdwg.mxu0
      %s1038 = scalar_lea.vmem %s196, 300
      %v1039 = vld [vmem:[%s1038] sm:$0xf]
      %v1040 = vld [vmem:[%s1038 + $0x4] sm:$0xf]
      %v1041 = vld [vmem:[%s1038 + $0x8] sm:$0xf]
      %v1042 = vld [vmem:[%s1038 + $0xc] sm:$0xf]
      %v1043 = vld [vmem:[%s1038 + $0x10] sm:$0xf]
      %v1044 = vld [vmem:[%s1038 + $0x14] sm:$0xf]
      %v1045 = vld [vmem:[%s1038 + $0x18] sm:$0xf]
      %v1046 = vld [vmem:[%s1038 + $0x1c] sm:$0xf]
      %v1047 = vld [vmem:[%s1038 + $0x20] sm:$0xf]
      %v1048 = vld [vmem:[%s1038 + $0x24] sm:$0xf]
      %v1049 = vld [vmem:[%s1038 + $0x28] sm:$0xf]
      %v1050 = vld [vmem:[%s1038 + $0x2c] sm:$0xf]
      %v1051 = vld [vmem:[%s1038 + $0x30] sm:$0xf]
      %v1052 = vld [vmem:[%s1038 + $0x34] sm:$0xf]
      %v1053 = vld [vmem:[%s1038 + $0x38] sm:$0xf]
      %v1054 = vld [vmem:[%s1038 + $0x3c] sm:$0xf]
      %v1055 = vld [vmem:[%s1038 + $0x40] sm:$0xf]
      %v1056 = vld [vmem:[%s1038 + $0x44] sm:$0xf]
      %v1057 = vld [vmem:[%s1038 + $0x48] sm:$0xf]
      %v1058 = vld [vmem:[%s1038 + $0x4c] sm:$0xf]
      %v1059 = vld [vmem:[%s1038 + $0x50] sm:$0xf]
      %v1060 = vld [vmem:[%s1038 + $0x54] sm:$0xf]
      %v1061 = vld [vmem:[%s1038 + $0x58] sm:$0xf]
      %v1062 = vld [vmem:[%s1038 + $0x5c] sm:$0xf]
      %v1063 = vld [vmem:[%s1038 + $0x60] sm:$0xf]
      %v1089 = vunpack.c.l.b16 %v1039
      %v1090 = vunpack.c.l.b16 %v1040
      %v1091 = vunpack.c.l.b16 %v1041
      %v1092 = vunpack.c.l.b16 %v1042
      %v1093 = vunpack.c.l.b16 %v1043
      %v1094 = vunpack.c.l.b16 %v1044
      %v1095 = vunpack.c.l.b16 %v1045
      %v1096 = vunpack.c.l.b16 %v1046
      %v1097 = vunpack.c.l.b16 %v1047
      %v1098 = vunpack.c.l.b16 %v1048
      %v1099 = vunpack.c.l.b16 %v1049
      %v1100 = vunpack.c.l.b16 %v1050
      %v1101 = vunpack.c.l.b16 %v1051
      %v1102 = vunpack.c.l.b16 %v1052
      %v1103 = vunpack.c.l.b16 %v1053
      %v1104 = vunpack.c.l.b16 %v1054
      %v1105 = vunpack.c.l.b16 %v1055
      %v1106 = vunpack.c.l.b16 %v1056
      %v1107 = vunpack.c.l.b16 %v1057
      %v1108 = vunpack.c.l.b16 %v1058
      %v1109 = vunpack.c.l.b16 %v1059
      %v1110 = vunpack.c.l.b16 %v1060
      %v1111 = vunpack.c.l.b16 %v1061
      %v1112 = vunpack.c.l.b16 %v1062
      %v1113 = vunpack.c.l.b16 %v1063
      %v1114 = vpack.c.b16 %v1090, %v1089
      %v1115 = vpack.c.b16 %v1092, %v1091
      %v1116 = vpack.c.b16 %v1094, %v1093
      %v1117 = vpack.c.b16 %v1096, %v1095
      %v1118 = vpack.c.b16 %v1098, %v1097
      %v1119 = vpack.c.b16 %v1100, %v1099
      %v1120 = vpack.c.b16 %v1102, %v1101
      %v1121 = vpack.c.b16 %v1104, %v1103
      %v1122 = vpack.c.b16 %v1106, %v1105
      %v1123 = vpack.c.b16 %v1108, %v1107
      %v1124 = vpack.c.b16 %v1110, %v1109
      %v1125 = vpack.c.b16 %v1112, %v1111
      %v1126 = vpack.c.b16 %v1113, %v1113
      %v1140 = vsel %vm610, %v1126, 0
      %1142 = vmatprep.subr.bf16.mxu0 0
      %1143 = vmatpush1.bf16.msra.mxu0 %v1114
      %1144 = vmatprep.subr.bf16.mxu0 0
      %1145 = vmatpush1.bf16.msra.mxu0 %v1115
      %1146 = vmatprep.subr.bf16.mxu0 0
      %1147 = vmatpush1.bf16.msra.mxu0 %v1116
      %1148 = vmatprep.subr.bf16.mxu0 0
      %1149 = vmatpush1.bf16.msra.mxu0 %v1117
      %1150 = vmatprep.subr.bf16.mxu0 0
      %1151 = vmatpush1.bf16.msra.mxu0 %v1118
      %1152 = vmatprep.subr.bf16.mxu0 0
      %1153 = vmatpush1.bf16.msra.mxu0 %v1119
      %1154 = vmatprep.subr.bf16.mxu0 0
      %1155 = vmatpush1.bf16.msra.mxu0 %v1120
      %1156 = vmatprep.subr.bf16.mxu0 0
      %1157 = vmatpush1.bf16.msra.mxu0 %v1121
      %1158 = vmatprep.subr.bf16.mxu0 0
      %1159 = vmatpush1.bf16.msra.mxu0 %v1122
      %1160 = vmatprep.subr.bf16.mxu0 0
      %1161 = vmatpush1.bf16.msra.mxu0 %v1123
      %1162 = vmatprep.subr.bf16.mxu0 0
      %1163 = vmatpush1.bf16.msra.mxu0 %v1124
      %1164 = vmatprep.subr.bf16.mxu0 0
      %1165 = vmatpush1.bf16.msra.mxu0 %v1125
      %1166 = vmatprep.subr.bf16.mxu0 0
      %1167 = vmatpush1.bf16.msra.mxu0 %v1140
      %1168 = vmatprep.subr.bf16.mxu0 0
      %1169 = vmatpush1.bf16.msra.mxu0 0
      %1170 = vmatprep.subr.bf16.mxu0 0
      %1171 = vmatpush1.bf16.msra.mxu0 0
      %1172 = vmatprep.subr.bf16.mxu0 0
      %1173 = vmatpush1.bf16.msra.mxu0 0
      %1174 = vmatprep.mubr.bf16.mxu0 %v569
      %1175 = vmatmul.mubr.bf16.gmra.mrb[0].mxu0 %v426
      %v1176 = vpop.f32.mrb[0].mxu0
      %v1177 = vadd.f32 0.0, %v1176
      %v1178 = vpop.f32.mrb[0].mxu0
      %v1179 = vpop.f32.mrb[0].mxu0
      %v1180 = vadd.f32 0.0, %v1179
      %v1181 = vpop.f32.mrb[0].mxu0
      %1182 = vmatprep.mubr.bf16.mxu0 %v572
      %1183 = vmatmul.mubr.bf16.gmra.mrb[0].mxu0 %v431
      %v1184 = vpop.f32.mrb[0].mxu0
      %v1185 = vadd.f32 0.0, %v1184
      %v1186 = vpop.f32.mrb[0].mxu0
      %v1187 = vpop.f32.mrb[0].mxu0
      %v1188 = vadd.f32 0.0, %v1187
      %v1189 = vpop.f32.mrb[0].mxu0
      %1190 = vmatprep.mubr.bf16.mxu0 %v575
      %1191 = vmatmul.mubr.bf16.gmra.mrb[0].mxu0 %v435
      %v1192 = vpop.f32.mrb[0].mxu0
      %v1193 = vadd.f32 0.0, %v1192
      %v1194 = vpop.f32.mrb[0].mxu0
      %v1195 = vpop.f32.mrb[0].mxu0
      %v1196 = vadd.f32 0.0, %v1195
      %v1197 = vpop.f32.mrb[0].mxu0
      %1198 = vmatprep.mubr.bf16.mxu0 %v578
      %1199 = vmatmul.mubr.bf16.gmra.mrb[0].mxu0 %v439
      %v1200 = vpop.f32.mrb[0].mxu0
      %v1201 = vadd.f32 0.0, %v1200
      %v1202 = vpop.f32.mrb[0].mxu0
      %v1203 = vpop.f32.mrb[0].mxu0
      %v1204 = vadd.f32 0.0, %v1203
      %v1205 = vpop.f32.mrb[0].mxu0
      %1206 = vmatprep.mubr.bf16.mxu0 %v581
      %1207 = vmatmul.mubr.bf16.gmra.mrb[0].mxu0 %v443
      %v1208 = vpop.f32.mrb[0].mxu0
      %v1209 = vadd.f32 0.0, %v1208
      %v1210 = vpop.f32.mrb[0].mxu0
      %v1211 = vpop.f32.mrb[0].mxu0
      %v1212 = vadd.f32 0.0, %v1211
      %v1213 = vpop.f32.mrb[0].mxu0
      %1214 = vmatprep.mubr.bf16.mxu0 %v584
      %1215 = vmatmul.mubr.bf16.gmra.mrb[0].mxu0 %v447
      %v1216 = vpop.f32.mrb[0].mxu0
      %v1217 = vadd.f32 0.0, %v1216
      %v1218 = vpop.f32.mrb[0].mxu0
      %v1219 = vpop.f32.mrb[0].mxu0
      %v1220 = vadd.f32 0.0, %v1219
      %v1221 = vpop.f32.mrb[0].mxu0
      %1222 = vmatprep.mubr.bf16.mxu0 %v587
      %1223 = vmatmul.mubr.bf16.gmra.mrb[0].mxu0 %v451
      %v1224 = vpop.f32.mrb[0].mxu0
      %v1225 = vadd.f32 0.0, %v1224
      %v1226 = vpop.f32.mrb[0].mxu0
      %v1227 = vpop.f32.mrb[0].mxu0
      %v1228 = vadd.f32 0.0, %v1227
      %v1229 = vpop.f32.mrb[0].mxu0
      %1230 = vmatprep.mubr.bf16.mxu0 %v590
      %1231 = vmatmul.mubr.bf16.gmra.mrb[0].mxu0 %v455
      %v1232 = vpop.f32.mrb[0].mxu0
      %v1233 = vadd.f32 0.0, %v1232
      %v1234 = vpop.f32.mrb[0].mxu0
      %v1235 = vpop.f32.mrb[0].mxu0
      %v1236 = vadd.f32 0.0, %v1235
      %v1237 = vpop.f32.mrb[0].mxu0
      %1238 = vmatprep.mubr.bf16.mxu0 %v593
      %1239 = vmatmul.mubr.bf16.gmra.mrb[0].mxu0 %v459
      %v1240 = vpop.f32.mrb[0].mxu0
      %v1241 = vadd.f32 0.0, %v1240
      %v1242 = vpop.f32.mrb[0].mxu0
      %v1243 = vpop.f32.mrb[0].mxu0
      %v1244 = vadd.f32 0.0, %v1243
      %v1245 = vpop.f32.mrb[0].mxu0
      %1246 = vmatprep.mubr.bf16.mxu0 %v596
      %1247 = vmatmul.mubr.bf16.gmra.mrb[0].mxu0 %v463
      %v1248 = vpop.f32.mrb[0].mxu0
      %v1249 = vadd.f32 0.0, %v1248
      %v1250 = vpop.f32.mrb[0].mxu0
      %v1251 = vpop.f32.mrb[0].mxu0
      %v1252 = vadd.f32 0.0, %v1251
      %v1253 = vpop.f32.mrb[0].mxu0
      %1254 = vmatprep.mubr.bf16.mxu0 %v599
      %1255 = vmatmul.mubr.bf16.gmra.mrb[0].mxu0 %v467
      %v1256 = vpop.f32.mrb[0].mxu0
      %v1257 = vadd.f32 0.0, %v1256
      %v1258 = vpop.f32.mrb[0].mxu0
      %v1259 = vpop.f32.mrb[0].mxu0
      %v1260 = vadd.f32 0.0, %v1259
      %v1261 = vpop.f32.mrb[0].mxu0
      %1262 = vmatprep.mubr.bf16.mxu0 %v602
      %1263 = vmatmul.mubr.bf16.gmra.mrb[0].mxu0 %v471
      %v1264 = vpop.f32.mrb[0].mxu0
      %v1265 = vadd.f32 0.0, %v1264
      %v1266 = vpop.f32.mrb[0].mxu0
      %v1267 = vpop.f32.mrb[0].mxu0
      %v1268 = vadd.f32 0.0, %v1267
      %v1269 = vpop.f32.mrb[0].mxu0
      %1270 = vmatprep.mubr.bf16.mxu0 %v605
      %1271 = vmatmul.mubr.bf16.gmra.mrb[0].mxu0 %v475
      %v1272 = vpop.f32.mrb[0].mxu0
      %v1273 = vadd.f32 0.0, %v1272
      %v1274 = vpop.f32.mrb[0].mxu0
      %v1275 = vpop.f32.mrb[0].mxu0
      %v1276 = vadd.f32 0.0, %v1275
      %v1277 = vpop.f32.mrb[0].mxu0
      %1278 = vmatprep.mubr.bf16.mxu0 %v608
      %1279 = vmatmul.mubr.bf16.gmra.mrb[0].mxu0 %v474
      %v1280 = vpop.f32.mrb[0].mxu0
      %v1281 = vadd.f32 0.0, %v1280
      %v1282 = vpop.f32.mrb[0].mxu0
      %v1283 = vpop.f32.mrb[0].mxu0
      %v1284 = vpop.f32.mrb[0].mxu0
      %1285 = vdwg.mxu0
      %v1311 = vunpack.c.l.b16 %v260
      %v1312 = vunpack.c.l.b16 %v261
      %v1313 = vunpack.c.l.b16 %v262
      %v1314 = vunpack.c.l.b16 %v263
      %v1315 = vunpack.c.l.b16 %v264
      %v1316 = vunpack.c.l.b16 %v265
      %v1317 = vunpack.c.l.b16 %v266
      %v1318 = vunpack.c.l.b16 %v267
      %v1319 = vunpack.c.l.b16 %v268
      %v1320 = vunpack.c.l.b16 %v269
      %v1321 = vunpack.c.l.b16 %v270
      %v1322 = vunpack.c.l.b16 %v271
      %v1323 = vunpack.c.l.b16 %v272
      %v1324 = vunpack.c.l.b16 %v273
      %v1325 = vunpack.c.l.b16 %v274
      %v1326 = vunpack.c.l.b16 %v275
      %v1327 = vunpack.c.l.b16 %v276
      %v1328 = vunpack.c.l.b16 %v277
      %v1329 = vunpack.c.l.b16 %v278
      %v1330 = vunpack.c.l.b16 %v279
      %v1331 = vunpack.c.l.b16 %v280
      %v1332 = vunpack.c.l.b16 %v281
      %v1333 = vunpack.c.l.b16 %v282
      %v1334 = vunpack.c.l.b16 %v283
      %v1335 = vunpack.c.l.b16 %v284
      %v1336 = vpack.c.b16 %v1312, %v1311
      %v1337 = vpack.c.b16 %v1314, %v1313
      %v1338 = vpack.c.b16 %v1316, %v1315
      %v1339 = vpack.c.b16 %v1318, %v1317
      %v1340 = vpack.c.b16 %v1320, %v1319
      %v1341 = vpack.c.b16 %v1322, %v1321
      %v1342 = vpack.c.b16 %v1324, %v1323
      %v1343 = vpack.c.b16 %v1326, %v1325
      %v1344 = vpack.c.b16 %v1328, %v1327
      %v1345 = vpack.c.b16 %v1330, %v1329
      %v1346 = vpack.c.b16 %v1332, %v1331
      %v1347 = vpack.c.b16 %v1334, %v1333
      %v1348 = vpack.c.b16 %v1335, %v1335
      %v1362 = vsel %vm610, %v1348, 0
      %1364 = vmatprep.subr.bf16.mxu0 0
      %1365 = vmatpush1.bf16.msra.mxu0 %v1336
      %1366 = vmatprep.subr.bf16.mxu0 0
      %1367 = vmatpush1.bf16.msra.mxu0 %v1337
      %1368 = vmatprep.subr.bf16.mxu0 0
      %1369 = vmatpush1.bf16.msra.mxu0 %v1338
      %1370 = vmatprep.subr.bf16.mxu0 0
      %1371 = vmatpush1.bf16.msra.mxu0 %v1339
      %1372 = vmatprep.subr.bf16.mxu0 0
      %1373 = vmatpush1.bf16.msra.mxu0 %v1340
      %1374 = vmatprep.subr.bf16.mxu0 0
      %1375 = vmatpush1.bf16.msra.mxu0 %v1341
      %1376 = vmatprep.subr.bf16.mxu0 0
      %1377 = vmatpush1.bf16.msra.mxu0 %v1342
      %1378 = vmatprep.subr.bf16.mxu0 0
      %1379 = vmatpush1.bf16.msra.mxu0 %v1343
      %1380 = vmatprep.subr.bf16.mxu0 0
      %1381 = vmatpush1.bf16.msra.mxu0 %v1344
      %1382 = vmatprep.subr.bf16.mxu0 0
      %1383 = vmatpush1.bf16.msra.mxu0 %v1345
      %1384 = vmatprep.subr.bf16.mxu0 0
      %1385 = vmatpush1.bf16.msra.mxu0 %v1346
      %1386 = vmatprep.subr.bf16.mxu0 0
      %1387 = vmatpush1.bf16.msra.mxu0 %v1347
      %1388 = vmatprep.subr.bf16.mxu0 0
      %1389 = vmatpush1.bf16.msra.mxu0 %v1362
      %1390 = vmatprep.subr.bf16.mxu0 0
      %1391 = vmatpush1.bf16.msra.mxu0 0
      %1392 = vmatprep.subr.bf16.mxu0 0
      %1393 = vmatpush1.bf16.msra.mxu0 0
      %1394 = vmatprep.subr.bf16.mxu0 0
      %1395 = vmatpush1.bf16.msra.mxu0 0
      %1396 = vmatprep.mubr.bf16.mxu0 %v850
      %1397 = vmatmul.mubr.bf16.gmra.mrb[0].mxu0 %v395
      %v1398 = vpop.f32.mrb[0].mxu0
      %v1399 = vadd.f32 %v1177, %v1398
      %v1400 = vpop.f32.mrb[0].mxu0
      %v1401 = vpop.f32.mrb[0].mxu0
      %v1402 = vadd.f32 %v1180, %v1401
      %v1403 = vpop.f32.mrb[0].mxu0
      %1404 = vmatprep.mubr.bf16.mxu0 %v853
      %1405 = vmatmul.mubr.bf16.gmra.mrb[0].mxu0 %v397
      %v1406 = vpop.f32.mrb[0].mxu0
      %v1407 = vadd.f32 %v1185, %v1406
      %v1408 = vpop.f32.mrb[0].mxu0
      %v1409 = vpop.f32.mrb[0].mxu0
      %v1410 = vadd.f32 %v1188, %v1409
      %v1411 = vpop.f32.mrb[0].mxu0
      %1412 = vmatprep.mubr.bf16.mxu0 %v856
      %1413 = vmatmul.mubr.bf16.gmra.mrb[0].mxu0 %v399
      %v1414 = vpop.f32.mrb[0].mxu0
      %v1415 = vadd.f32 %v1193, %v1414
      %v1416 = vpop.f32.mrb[0].mxu0
      %v1417 = vpop.f32.mrb[0].mxu0
      %v1418 = vadd.f32 %v1196, %v1417
      %v1419 = vpop.f32.mrb[0].mxu0
      %1420 = vmatprep.mubr.bf16.mxu0 %v859
      %1421 = vmatmul.mubr.bf16.gmra.mrb[0].mxu0 %v401
      %v1422 = vpop.f32.mrb[0].mxu0
      %v1423 = vadd.f32 %v1201, %v1422
      %v1424 = vpop.f32.mrb[0].mxu0
      %v1425 = vpop.f32.mrb[0].mxu0
      %v1426 = vadd.f32 %v1204, %v1425
      %v1427 = vpop.f32.mrb[0].mxu0
      %1428 = vmatprep.mubr.bf16.mxu0 %v862
      %1429 = vmatmul.mubr.bf16.gmra.mrb[0].mxu0 %v403
      %v1430 = vpop.f32.mrb[0].mxu0
      %v1431 = vadd.f32 %v1209, %v1430
      %v1432 = vpop.f32.mrb[0].mxu0
      %v1433 = vpop.f32.mrb[0].mxu0
      %v1434 = vadd.f32 %v1212, %v1433
      %v1435 = vpop.f32.mrb[0].mxu0
      %1436 = vmatprep.mubr.bf16.mxu0 %v865
      %1437 = vmatmul.mubr.bf16.gmra.mrb[0].mxu0 %v405
      %v1438 = vpop.f32.mrb[0].mxu0
      %v1439 = vadd.f32 %v1217, %v1438
      %v1440 = vpop.f32.mrb[0].mxu0
      %v1441 = vpop.f32.mrb[0].mxu0
      %v1442 = vadd.f32 %v1220, %v1441
      %v1443 = vpop.f32.mrb[0].mxu0
      %1444 = vmatprep.mubr.bf16.mxu0 %v868
      %1445 = vmatmul.mubr.bf16.gmra.mrb[0].mxu0 %v407
      %v1446 = vpop.f32.mrb[0].mxu0
      %v1447 = vadd.f32 %v1225, %v1446
      %v1448 = vpop.f32.mrb[0].mxu0
      %v1449 = vpop.f32.mrb[0].mxu0
      %v1450 = vadd.f32 %v1228, %v1449
      %v1451 = vpop.f32.mrb[0].mxu0
      %1452 = vmatprep.mubr.bf16.mxu0 %v871
      %1453 = vmatmul.mubr.bf16.gmra.mrb[0].mxu0 %v409
      %v1454 = vpop.f32.mrb[0].mxu0
      %v1455 = vadd.f32 %v1233, %v1454
      %v1456 = vpop.f32.mrb[0].mxu0
      %v1457 = vpop.f32.mrb[0].mxu0
      %v1458 = vadd.f32 %v1236, %v1457
      %v1459 = vpop.f32.mrb[0].mxu0
      %1460 = vmatprep.mubr.bf16.mxu0 %v874
      %1461 = vmatmul.mubr.bf16.gmra.mrb[0].mxu0 %v411
      %v1462 = vpop.f32.mrb[0].mxu0
      %v1463 = vadd.f32 %v1241, %v1462
      %v1464 = vpop.f32.mrb[0].mxu0
      %v1465 = vpop.f32.mrb[0].mxu0
      %v1466 = vadd.f32 %v1244, %v1465
      %v1467 = vpop.f32.mrb[0].mxu0
      %1468 = vmatprep.mubr.bf16.mxu0 %v877
      %1469 = vmatmul.mubr.bf16.gmra.mrb[0].mxu0 %v413
      %v1470 = vpop.f32.mrb[0].mxu0
      %v1471 = vadd.f32 %v1249, %v1470
      %v1472 = vpop.f32.mrb[0].mxu0
      %v1473 = vpop.f32.mrb[0].mxu0
      %v1474 = vadd.f32 %v1252, %v1473
      %v1475 = vpop.f32.mrb[0].mxu0
      %1476 = vmatprep.mubr.bf16.mxu0 %v880
      %1477 = vmatmul.mubr.bf16.gmra.mrb[0].mxu0 %v415
      %v1478 = vpop.f32.mrb[0].mxu0
      %v1479 = vadd.f32 %v1257, %v1478
      %v1480 = vpop.f32.mrb[0].mxu0
      %v1481 = vpop.f32.mrb[0].mxu0
      %v1482 = vadd.f32 %v1260, %v1481
      %v1483 = vpop.f32.mrb[0].mxu0
      %1484 = vmatprep.mubr.bf16.mxu0 %v883
      %1485 = vmatmul.mubr.bf16.gmra.mrb[0].mxu0 %v417
      %v1486 = vpop.f32.mrb[0].mxu0
      %v1487 = vadd.f32 %v1265, %v1486
      %v1488 = vpop.f32.mrb[0].mxu0
      %v1489 = vpop.f32.mrb[0].mxu0
      %v1490 = vadd.f32 %v1268, %v1489
      %v1491 = vpop.f32.mrb[0].mxu0
      %1492 = vmatprep.mubr.bf16.mxu0 %v886
      %1493 = vmatmul.mubr.bf16.gmra.mrb[0].mxu0 %v419
      %v1494 = vpop.f32.mrb[0].mxu0
      %v1495 = vadd.f32 %v1273, %v1494
      %v1496 = vpop.f32.mrb[0].mxu0
      %v1497 = vpop.f32.mrb[0].mxu0
      %v1498 = vadd.f32 %v1276, %v1497
      %v1499 = vpop.f32.mrb[0].mxu0
      %1500 = vmatprep.mubr.bf16.mxu0 %v889
      %1501 = vmatmul.mubr.bf16.gmra.mrb[0].mxu0 %v758
      %v1502 = vpop.f32.mrb[0].mxu0
      %v1503 = vadd.f32 %v1281, %v1502
      %v1504 = vpop.f32.mrb[0].mxu0
      %v1505 = vpop.f32.mrb[0].mxu0
      %v1506 = vpop.f32.mrb[0].mxu0
      %1507 = vdwg.mxu0
      %s1508 = scalar_lea.vmem %s196, 400
      %v1509 = vld [vmem:[%s1508] sm:$0xf]
      %v1510 = vld [vmem:[%s1508 + $0x4] sm:$0xf]
      %v1511 = vld [vmem:[%s1508 + $0x8] sm:$0xf]
      %v1512 = vld [vmem:[%s1508 + $0xc] sm:$0xf]
      %v1513 = vld [vmem:[%s1508 + $0x10] sm:$0xf]
      %v1514 = vld [vmem:[%s1508 + $0x14] sm:$0xf]
      %v1515 = vld [vmem:[%s1508 + $0x18] sm:$0xf]
      %v1516 = vld [vmem:[%s1508 + $0x1c] sm:$0xf]
      %v1517 = vld [vmem:[%s1508 + $0x20] sm:$0xf]
      %v1518 = vld [vmem:[%s1508 + $0x24] sm:$0xf]
      %v1519 = vld [vmem:[%s1508 + $0x28] sm:$0xf]
      %v1520 = vld [vmem:[%s1508 + $0x2c] sm:$0xf]
      %v1521 = vld [vmem:[%s1508 + $0x30] sm:$0xf]
      %v1522 = vld [vmem:[%s1508 + $0x34] sm:$0xf]
      %v1523 = vld [vmem:[%s1508 + $0x38] sm:$0xf]
      %v1524 = vld [vmem:[%s1508 + $0x3c] sm:$0xf]
      %v1525 = vld [vmem:[%s1508 + $0x40] sm:$0xf]
      %v1526 = vld [vmem:[%s1508 + $0x44] sm:$0xf]
      %v1527 = vld [vmem:[%s1508 + $0x48] sm:$0xf]
      %v1528 = vld [vmem:[%s1508 + $0x4c] sm:$0xf]
      %v1529 = vld [vmem:[%s1508 + $0x50] sm:$0xf]
      %v1530 = vld [vmem:[%s1508 + $0x54] sm:$0xf]
      %v1531 = vld [vmem:[%s1508 + $0x58] sm:$0xf]
      %v1532 = vld [vmem:[%s1508 + $0x5c] sm:$0xf]
      %v1533 = vld [vmem:[%s1508 + $0x60] sm:$0xf]
      %v1534 = vpack.c.b16 %v343, %v341
      %v1535 = vpack.c.b16 %v344, %v342
      %v1536 = vpack.c.b16 %v347, %v345
      %v1537 = vpack.c.b16 %v348, %v346
      %v1538 = vpack.c.b16 %v351, %v349
      %v1539 = vpack.c.b16 %v352, %v350
      %v1540 = vpack.c.b16 %v355, %v353
      %v1541 = vpack.c.b16 %v356, %v354
      %v1542 = vpack.c.b16 %v359, %v357
      %v1543 = vpack.c.b16 %v360, %v358
      %v1544 = vpack.c.b16 %v363, %v361
      %v1545 = vpack.c.b16 %v364, %v362
      %v1546 = vpack.c.b16 %v367, %v365
      %v1547 = vpack.c.b16 %v368, %v366
      %v1548 = vpack.c.b16 %v371, %v369
      %v1549 = vpack.c.b16 %v372, %v370
      %v1550 = vpack.c.b16 %v375, %v373
      %v1551 = vpack.c.b16 %v376, %v374
      %v1552 = vpack.c.b16 %v379, %v377
      %v1553 = vpack.c.b16 %v380, %v378
      %v1554 = vpack.c.b16 %v383, %v381
      %v1555 = vpack.c.b16 %v384, %v382
      %v1556 = vpack.c.b16 %v387, %v385
      %v1557 = vpack.c.b16 %v388, %v386
      %v1558 = vpack.c.b16 %v391, %v389
      %v1559 = vpack.c.b16 %v392, %v390
      %v1560 = vpack.c.b16 %v393, %v393
      %v1561 = vpack.c.b16 %v394, %v394
      %v1601 = vunpack.c.l.b16 %v1509
      %v1602 = vunpack.c.l.b16 %v1510
      %v1603 = vunpack.c.l.b16 %v1511
      %v1604 = vunpack.c.l.b16 %v1512
      %v1605 = vunpack.c.l.b16 %v1513
      %v1606 = vunpack.c.l.b16 %v1514
      %v1607 = vunpack.c.l.b16 %v1515
      %v1608 = vunpack.c.l.b16 %v1516
      %v1609 = vunpack.c.l.b16 %v1517
      %v1610 = vunpack.c.l.b16 %v1518
      %v1611 = vunpack.c.l.b16 %v1519
      %v1612 = vunpack.c.l.b16 %v1520
      %v1613 = vunpack.c.l.b16 %v1521
      %v1614 = vunpack.c.l.b16 %v1522
      %v1615 = vunpack.c.l.b16 %v1523
      %v1616 = vunpack.c.l.b16 %v1524
      %v1617 = vunpack.c.l.b16 %v1525
      %v1618 = vunpack.c.l.b16 %v1526
      %v1619 = vunpack.c.l.b16 %v1527
      %v1620 = vunpack.c.l.b16 %v1528
      %v1621 = vunpack.c.l.b16 %v1529
      %v1622 = vunpack.c.l.b16 %v1530
      %v1623 = vunpack.c.l.b16 %v1531
      %v1624 = vunpack.c.l.b16 %v1532
      %v1625 = vunpack.c.l.b16 %v1533
      %v1626 = vpack.c.b16 %v1602, %v1601
      %v1627 = vpack.c.b16 %v1604, %v1603
      %v1628 = vpack.c.b16 %v1606, %v1605
      %v1629 = vpack.c.b16 %v1608, %v1607
      %v1630 = vpack.c.b16 %v1610, %v1609
      %v1631 = vpack.c.b16 %v1612, %v1611
      %v1632 = vpack.c.b16 %v1614, %v1613
      %v1633 = vpack.c.b16 %v1616, %v1615
      %v1634 = vpack.c.b16 %v1618, %v1617
      %v1635 = vpack.c.b16 %v1620, %v1619
      %v1636 = vpack.c.b16 %v1622, %v1621
      %v1637 = vpack.c.b16 %v1624, %v1623
      %v1638 = vpack.c.b16 %v1625, %v1625
      %v1652 = vsel %vm567, %v1535, 0
      %v1655 = vsel %vm567, %v1537, 0
      %v1658 = vsel %vm567, %v1539, 0
      %v1661 = vsel %vm567, %v1541, 0
      %v1664 = vsel %vm567, %v1543, 0
      %v1667 = vsel %vm567, %v1545, 0
      %v1670 = vsel %vm567, %v1547, 0
      %v1673 = vsel %vm567, %v1549, 0
      %v1676 = vsel %vm567, %v1551, 0
      %v1679 = vsel %vm567, %v1553, 0
      %v1682 = vsel %vm567, %v1555, 0
      %v1685 = vsel %vm567, %v1557, 0
      %v1688 = vsel %vm567, %v1559, 0
      %v1691 = vsel %vm567, %v1561, 0
      %v1694 = vsel %vm610, %v1638, 0
      %1696 = vmatprep.subr.bf16.mxu0 0
      %1697 = vmatpush1.bf16.msra.mxu0 %v1626
      %1698 = vmatprep.subr.bf16.mxu0 0
      %1699 = vmatpush1.bf16.msra.mxu0 %v1627
      %1700 = vmatprep.subr.bf16.mxu0 0
      %1701 = vmatpush1.bf16.msra.mxu0 %v1628
      %1702 = vmatprep.subr.bf16.mxu0 0
      %1703 = vmatpush1.bf16.msra.mxu0 %v1629
      %1704 = vmatprep.subr.bf16.mxu0 0
      %1705 = vmatpush1.bf16.msra.mxu0 %v1630
      %1706 = vmatprep.subr.bf16.mxu0 0
      %1707 = vmatpush1.bf16.msra.mxu0 %v1631
      %1708 = vmatprep.subr.bf16.mxu0 0
      %1709 = vmatpush1.bf16.msra.mxu0 %v1632
      %1710 = vmatprep.subr.bf16.mxu0 0
      %1711 = vmatpush1.bf16.msra.mxu0 %v1633
      %1712 = vmatprep.subr.bf16.mxu0 0
      %1713 = vmatpush1.bf16.msra.mxu0 %v1634
      %1714 = vmatprep.subr.bf16.mxu0 0
      %1715 = vmatpush1.bf16.msra.mxu0 %v1635
      %1716 = vmatprep.subr.bf16.mxu0 0
      %1717 = vmatpush1.bf16.msra.mxu0 %v1636
      %1718 = vmatprep.subr.bf16.mxu0 0
      %1719 = vmatpush1.bf16.msra.mxu0 %v1637
      %1720 = vmatprep.subr.bf16.mxu0 0
      %1721 = vmatpush1.bf16.msra.mxu0 %v1694
      %1722 = vmatprep.subr.bf16.mxu0 0
      %1723 = vmatpush1.bf16.msra.mxu0 0
      %1724 = vmatprep.subr.bf16.mxu0 0
      %1725 = vmatpush1.bf16.msra.mxu0 0
      %1726 = vmatprep.subr.bf16.mxu0 0
      %1727 = vmatpush1.bf16.msra.mxu0 0
      %1728 = vmatprep.mubr.bf16.mxu0 %v1652
      %1729 = vmatmul.mubr.bf16.gmra.mrb[0].mxu0 %v1534
      %v1730 = vpop.f32.mrb[0].mxu0
      %v1731 = vadd.f32 0.0, %v1730
      %v1732 = vpop.f32.mrb[0].mxu0
      %v1733 = vpop.f32.mrb[0].mxu0
      %v1734 = vadd.f32 0.0, %v1733
      %v1735 = vpop.f32.mrb[0].mxu0
      %1736 = vmatprep.mubr.bf16.mxu0 %v1655
      %1737 = vmatmul.mubr.bf16.gmra.mrb[0].mxu0 %v1536
      %v1738 = vpop.f32.mrb[0].mxu0
      %v1739 = vadd.f32 0.0, %v1738
      %v1740 = vpop.f32.mrb[0].mxu0
      %v1741 = vpop.f32.mrb[0].mxu0
      %v1742 = vadd.f32 0.0, %v1741
      %v1743 = vpop.f32.mrb[0].mxu0
      %1744 = vmatprep.mubr.bf16.mxu0 %v1658
      %1745 = vmatmul.mubr.bf16.gmra.mrb[0].mxu0 %v1538
      %v1746 = vpop.f32.mrb[0].mxu0
      %v1747 = vadd.f32 0.0, %v1746
      %v1748 = vpop.f32.mrb[0].mxu0
      %v1749 = vpop.f32.mrb[0].mxu0
      %v1750 = vadd.f32 0.0, %v1749
      %v1751 = vpop.f32.mrb[0].mxu0
      %1752 = vmatprep.mubr.bf16.mxu0 %v1661
      %1753 = vmatmul.mubr.bf16.gmra.mrb[0].mxu0 %v1540
      %v1754 = vpop.f32.mrb[0].mxu0
      %v1755 = vadd.f32 0.0, %v1754
      %v1756 = vpop.f32.mrb[0].mxu0
      %v1757 = vpop.f32.mrb[0].mxu0
      %v1758 = vadd.f32 0.0, %v1757
      %v1759 = vpop.f32.mrb[0].mxu0
      %1760 = vmatprep.mubr.bf16.mxu0 %v1664
      %1761 = vmatmul.mubr.bf16.gmra.mrb[0].mxu0 %v1542
      %v1762 = vpop.f32.mrb[0].mxu0
      %v1763 = vadd.f32 0.0, %v1762
      %v1764 = vpop.f32.mrb[0].mxu0
      %v1765 = vpop.f32.mrb[0].mxu0
      %v1766 = vadd.f32 0.0, %v1765
      %v1767 = vpop.f32.mrb[0].mxu0
      %1768 = vmatprep.mubr.bf16.mxu0 %v1667
      %1769 = vmatmul.mubr.bf16.gmra.mrb[0].mxu0 %v1544
      %v1770 = vpop.f32.mrb[0].mxu0
      %v1771 = vadd.f32 0.0, %v1770
      %v1772 = vpop.f32.mrb[0].mxu0
      %v1773 = vpop.f32.mrb[0].mxu0
      %v1774 = vadd.f32 0.0, %v1773
      %v1775 = vpop.f32.mrb[0].mxu0
      %1776 = vmatprep.mubr.bf16.mxu0 %v1670
      %1777 = vmatmul.mubr.bf16.gmra.mrb[0].mxu0 %v1546
      %v1778 = vpop.f32.mrb[0].mxu0
      %v1779 = vadd.f32 0.0, %v1778
      %v1780 = vpop.f32.mrb[0].mxu0
      %v1781 = vpop.f32.mrb[0].mxu0
      %v1782 = vadd.f32 0.0, %v1781
      %v1783 = vpop.f32.mrb[0].mxu0
      %1784 = vmatprep.mubr.bf16.mxu0 %v1673
      %1785 = vmatmul.mubr.bf16.gmra.mrb[0].mxu0 %v1548
      %v1786 = vpop.f32.mrb[0].mxu0
      %v1787 = vadd.f32 0.0, %v1786
      %v1788 = vpop.f32.mrb[0].mxu0
      %v1789 = vpop.f32.mrb[0].mxu0
      %v1790 = vadd.f32 0.0, %v1789
      %v1791 = vpop.f32.mrb[0].mxu0
      %1792 = vmatprep.mubr.bf16.mxu0 %v1676
      %1793 = vmatmul.mubr.bf16.gmra.mrb[0].mxu0 %v1550
      %v1794 = vpop.f32.mrb[0].mxu0
      %v1795 = vadd.f32 0.0, %v1794
      %v1796 = vpop.f32.mrb[0].mxu0
      %v1797 = vpop.f32.mrb[0].mxu0
      %v1798 = vadd.f32 0.0, %v1797
      %v1799 = vpop.f32.mrb[0].mxu0
      %1800 = vmatprep.mubr.bf16.mxu0 %v1679
      %1801 = vmatmul.mubr.bf16.gmra.mrb[0].mxu0 %v1552
      %v1802 = vpop.f32.mrb[0].mxu0
      %v1803 = vadd.f32 0.0, %v1802
      %v1804 = vpop.f32.mrb[0].mxu0
      %v1805 = vpop.f32.mrb[0].mxu0
      %v1806 = vadd.f32 0.0, %v1805
      %v1807 = vpop.f32.mrb[0].mxu0
      %1808 = vmatprep.mubr.bf16.mxu0 %v1682
      %1809 = vmatmul.mubr.bf16.gmra.mrb[0].mxu0 %v1554
      %v1810 = vpop.f32.mrb[0].mxu0
      %v1811 = vadd.f32 0.0, %v1810
      %v1812 = vpop.f32.mrb[0].mxu0
      %v1813 = vpop.f32.mrb[0].mxu0
      %v1814 = vadd.f32 0.0, %v1813
      %v1815 = vpop.f32.mrb[0].mxu0
      %1816 = vmatprep.mubr.bf16.mxu0 %v1685
      %1817 = vmatmul.mubr.bf16.gmra.mrb[0].mxu0 %v1556
      %v1818 = vpop.f32.mrb[0].mxu0
      %v1819 = vadd.f32 0.0, %v1818
      %v1820 = vpop.f32.mrb[0].mxu0
      %v1821 = vpop.f32.mrb[0].mxu0
      %v1822 = vadd.f32 0.0, %v1821
      %v1823 = vpop.f32.mrb[0].mxu0
      %1824 = vmatprep.mubr.bf16.mxu0 %v1688
      %1825 = vmatmul.mubr.bf16.gmra.mrb[0].mxu0 %v1558
      %v1826 = vpop.f32.mrb[0].mxu0
      %v1827 = vadd.f32 0.0, %v1826
      %v1828 = vpop.f32.mrb[0].mxu0
      %v1829 = vpop.f32.mrb[0].mxu0
      %v1830 = vadd.f32 0.0, %v1829
      %v1831 = vpop.f32.mrb[0].mxu0
      %1832 = vmatprep.mubr.bf16.mxu0 %v1691
      %1833 = vmatmul.mubr.bf16.gmra.mrb[0].mxu0 %v1560
      %v1834 = vpop.f32.mrb[0].mxu0
      %v1835 = vadd.f32 0.0, %v1834
      %v1836 = vpop.f32.mrb[0].mxu0
      %v1837 = vpop.f32.mrb[0].mxu0
      %v1838 = vpop.f32.mrb[0].mxu0
      %1839 = vdwg.mxu0
      %v1840 = vadd.f32 %v929, %v1731
      %v1841 = vadd.f32 %v932, %v1734
      %v1842 = vadd.f32 %v937, %v1739
      %v1843 = vadd.f32 %v940, %v1742
      %v1844 = vadd.f32 %v945, %v1747
      %v1845 = vadd.f32 %v948, %v1750
      %v1846 = vadd.f32 %v953, %v1755
      %v1847 = vadd.f32 %v956, %v1758
      %v1848 = vadd.f32 %v961, %v1763
      %v1849 = vadd.f32 %v964, %v1766
      %v1850 = vadd.f32 %v969, %v1771
      %v1851 = vadd.f32 %v972, %v1774
      %v1852 = vadd.f32 %v977, %v1779
      %v1853 = vadd.f32 %v980, %v1782
      %v1854 = vadd.f32 %v985, %v1787
      %v1855 = vadd.f32 %v988, %v1790
      %v1856 = vadd.f32 %v993, %v1795
      %v1857 = vadd.f32 %v996, %v1798
      %v1858 = vadd.f32 %v1001, %v1803
      %v1859 = vadd.f32 %v1004, %v1806
      %v1860 = vadd.f32 %v1009, %v1811
      %v1861 = vadd.f32 %v1012, %v1814
      %v1862 = vadd.f32 %v1017, %v1819
      %v1863 = vadd.f32 %v1020, %v1822
      %v1864 = vadd.f32 %v1025, %v1827
      %v1865 = vadd.f32 %v1028, %v1830
      %v1866 = vadd.f32 %v1033, %v1835
      %s1867 = scalar_lea.vmem %s196, 500
      %v1868 = vld [vmem:[%s1867] sm:$0xf]
      %v1869 = vld [vmem:[%s1867 + $0x4] sm:$0xf]
      %v1870 = vld [vmem:[%s1867 + $0x8] sm:$0xf]
      %v1871 = vld [vmem:[%s1867 + $0xc] sm:$0xf]
      %v1872 = vld [vmem:[%s1867 + $0x10] sm:$0xf]
      %v1873 = vld [vmem:[%s1867 + $0x14] sm:$0xf]
      %v1874 = vld [vmem:[%s1867 + $0x18] sm:$0xf]
      %v1875 = vld [vmem:[%s1867 + $0x1c] sm:$0xf]
      %v1876 = vld [vmem:[%s1867 + $0x20] sm:$0xf]
      %v1877 = vld [vmem:[%s1867 + $0x24] sm:$0xf]
      %v1878 = vld [vmem:[%s1867 + $0x28] sm:$0xf]
      %v1879 = vld [vmem:[%s1867 + $0x2c] sm:$0xf]
      %v1880 = vld [vmem:[%s1867 + $0x30] sm:$0xf]
      %v1881 = vld [vmem:[%s1867 + $0x34] sm:$0xf]
      %v1882 = vld [vmem:[%s1867 + $0x38] sm:$0xf]
      %v1883 = vld [vmem:[%s1867 + $0x3c] sm:$0xf]
      %v1884 = vld [vmem:[%s1867 + $0x40] sm:$0xf]
      %v1885 = vld [vmem:[%s1867 + $0x44] sm:$0xf]
      %v1886 = vld [vmem:[%s1867 + $0x48] sm:$0xf]
      %v1887 = vld [vmem:[%s1867 + $0x4c] sm:$0xf]
      %v1888 = vld [vmem:[%s1867 + $0x50] sm:$0xf]
      %v1889 = vld [vmem:[%s1867 + $0x54] sm:$0xf]
      %v1890 = vld [vmem:[%s1867 + $0x58] sm:$0xf]
      %v1891 = vld [vmem:[%s1867 + $0x5c] sm:$0xf]
      %v1892 = vld [vmem:[%s1867 + $0x60] sm:$0xf]
      %v1918 = vunpack.c.l.b16 %v1868
      %v1919 = vunpack.c.l.b16 %v1869
      %v1920 = vunpack.c.l.b16 %v1870
      %v1921 = vunpack.c.l.b16 %v1871
      %v1922 = vunpack.c.l.b16 %v1872
      %v1923 = vunpack.c.l.b16 %v1873
      %v1924 = vunpack.c.l.b16 %v1874
      %v1925 = vunpack.c.l.b16 %v1875
      %v1926 = vunpack.c.l.b16 %v1876
      %v1927 = vunpack.c.l.b16 %v1877
      %v1928 = vunpack.c.l.b16 %v1878
      %v1929 = vunpack.c.l.b16 %v1879
      %v1930 = vunpack.c.l.b16 %v1880
      %v1931 = vunpack.c.l.b16 %v1881
      %v1932 = vunpack.c.l.b16 %v1882
      %v1933 = vunpack.c.l.b16 %v1883
      %v1934 = vunpack.c.l.b16 %v1884
      %v1935 = vunpack.c.l.b16 %v1885
      %v1936 = vunpack.c.l.b16 %v1886
      %v1937 = vunpack.c.l.b16 %v1887
      %v1938 = vunpack.c.l.b16 %v1888
      %v1939 = vunpack.c.l.b16 %v1889
      %v1940 = vunpack.c.l.b16 %v1890
      %v1941 = vunpack.c.l.b16 %v1891
      %v1942 = vunpack.c.l.b16 %v1892
      %v1943 = vpack.c.b16 %v1919, %v1918
      %v1944 = vpack.c.b16 %v1921, %v1920
      %v1945 = vpack.c.b16 %v1923, %v1922
      %v1946 = vpack.c.b16 %v1925, %v1924
      %v1947 = vpack.c.b16 %v1927, %v1926
      %v1948 = vpack.c.b16 %v1929, %v1928
      %v1949 = vpack.c.b16 %v1931, %v1930
      %v1950 = vpack.c.b16 %v1933, %v1932
      %v1951 = vpack.c.b16 %v1935, %v1934
      %v1952 = vpack.c.b16 %v1937, %v1936
      %v1953 = vpack.c.b16 %v1939, %v1938
      %v1954 = vpack.c.b16 %v1941, %v1940
      %v1955 = vpack.c.b16 %v1942, %v1942
      %v1969 = vsel %vm610, %v1955, 0
      %1971 = vmatprep.subr.bf16.mxu0 0
      %1972 = vmatpush1.bf16.msra.mxu0 %v1943
      %1973 = vmatprep.subr.bf16.mxu0 0
      %1974 = vmatpush1.bf16.msra.mxu0 %v1944
      %1975 = vmatprep.subr.bf16.mxu0 0
      %1976 = vmatpush1.bf16.msra.mxu0 %v1945
      %1977 = vmatprep.subr.bf16.mxu0 0
      %1978 = vmatpush1.bf16.msra.mxu0 %v1946
      %1979 = vmatprep.subr.bf16.mxu0 0
      %1980 = vmatpush1.bf16.msra.mxu0 %v1947
      %1981 = vmatprep.subr.bf16.mxu0 0
      %1982 = vmatpush1.bf16.msra.mxu0 %v1948
      %1983 = vmatprep.subr.bf16.mxu0 0
      %1984 = vmatpush1.bf16.msra.mxu0 %v1949
      %1985 = vmatprep.subr.bf16.mxu0 0
      %1986 = vmatpush1.bf16.msra.mxu0 %v1950
      %1987 = vmatprep.subr.bf16.mxu0 0
      %1988 = vmatpush1.bf16.msra.mxu0 %v1951
      %1989 = vmatprep.subr.bf16.mxu0 0
      %1990 = vmatpush1.bf16.msra.mxu0 %v1952
      %1991 = vmatprep.subr.bf16.mxu0 0
      %1992 = vmatpush1.bf16.msra.mxu0 %v1953
      %1993 = vmatprep.subr.bf16.mxu0 0
      %1994 = vmatpush1.bf16.msra.mxu0 %v1954
      %1995 = vmatprep.subr.bf16.mxu0 0
      %1996 = vmatpush1.bf16.msra.mxu0 %v1969
      %1997 = vmatprep.subr.bf16.mxu0 0
      %1998 = vmatpush1.bf16.msra.mxu0 0
      %1999 = vmatprep.subr.bf16.mxu0 0
      %2000 = vmatpush1.bf16.msra.mxu0 0
      %2001 = vmatprep.subr.bf16.mxu0 0
      %2002 = vmatpush1.bf16.msra.mxu0 0
      %2003 = vmatprep.mubr.bf16.mxu0 %v1652
      %2004 = vmatmul.mubr.bf16.gmra.mrb[0].mxu0 %v1534
      %v2005 = vpop.f32.mrb[0].mxu0
      %v2006 = vadd.f32 0.0, %v2005
      %v2007 = vpop.f32.mrb[0].mxu0
      %v2008 = vpop.f32.mrb[0].mxu0
      %v2009 = vadd.f32 0.0, %v2008
      %v2010 = vpop.f32.mrb[0].mxu0
      %2011 = vmatprep.mubr.bf16.mxu0 %v1655
      %2012 = vmatmul.mubr.bf16.gmra.mrb[0].mxu0 %v1536
      %v2013 = vpop.f32.mrb[0].mxu0
      %v2014 = vadd.f32 0.0, %v2013
      %v2015 = vpop.f32.mrb[0].mxu0
      %v2016 = vpop.f32.mrb[0].mxu0
      %v2017 = vadd.f32 0.0, %v2016
      %v2018 = vpop.f32.mrb[0].mxu0
      %2019 = vmatprep.mubr.bf16.mxu0 %v1658
      %2020 = vmatmul.mubr.bf16.gmra.mrb[0].mxu0 %v1538
      %v2021 = vpop.f32.mrb[0].mxu0
      %v2022 = vadd.f32 0.0, %v2021
      %v2023 = vpop.f32.mrb[0].mxu0
      %v2024 = vpop.f32.mrb[0].mxu0
      %v2025 = vadd.f32 0.0, %v2024
      %v2026 = vpop.f32.mrb[0].mxu0
      %2027 = vmatprep.mubr.bf16.mxu0 %v1661
      %2028 = vmatmul.mubr.bf16.gmra.mrb[0].mxu0 %v1540
      %v2029 = vpop.f32.mrb[0].mxu0
      %v2030 = vadd.f32 0.0, %v2029
      %v2031 = vpop.f32.mrb[0].mxu0
      %v2032 = vpop.f32.mrb[0].mxu0
      %v2033 = vadd.f32 0.0, %v2032
      %v2034 = vpop.f32.mrb[0].mxu0
      %2035 = vmatprep.mubr.bf16.mxu0 %v1664
      %2036 = vmatmul.mubr.bf16.gmra.mrb[0].mxu0 %v1542
      %v2037 = vpop.f32.mrb[0].mxu0
      %v2038 = vadd.f32 0.0, %v2037
      %v2039 = vpop.f32.mrb[0].mxu0
      %v2040 = vpop.f32.mrb[0].mxu0
      %v2041 = vadd.f32 0.0, %v2040
      %v2042 = vpop.f32.mrb[0].mxu0
      %2043 = vmatprep.mubr.bf16.mxu0 %v1667
      %2044 = vmatmul.mubr.bf16.gmra.mrb[0].mxu0 %v1544
      %v2045 = vpop.f32.mrb[0].mxu0
      %v2046 = vadd.f32 0.0, %v2045
      %v2047 = vpop.f32.mrb[0].mxu0
      %v2048 = vpop.f32.mrb[0].mxu0
      %v2049 = vadd.f32 0.0, %v2048
      %v2050 = vpop.f32.mrb[0].mxu0
      %2051 = vmatprep.mubr.bf16.mxu0 %v1670
      %2052 = vmatmul.mubr.bf16.gmra.mrb[0].mxu0 %v1546
      %v2053 = vpop.f32.mrb[0].mxu0
      %v2054 = vadd.f32 0.0, %v2053
      %v2055 = vpop.f32.mrb[0].mxu0
      %v2056 = vpop.f32.mrb[0].mxu0
      %v2057 = vadd.f32 0.0, %v2056
      %v2058 = vpop.f32.mrb[0].mxu0
      %2059 = vmatprep.mubr.bf16.mxu0 %v1673
      %2060 = vmatmul.mubr.bf16.gmra.mrb[0].mxu0 %v1548
      %v2061 = vpop.f32.mrb[0].mxu0
      %v2062 = vadd.f32 0.0, %v2061
      %v2063 = vpop.f32.mrb[0].mxu0
      %v2064 = vpop.f32.mrb[0].mxu0
      %v2065 = vadd.f32 0.0, %v2064
      %v2066 = vpop.f32.mrb[0].mxu0
      %2067 = vmatprep.mubr.bf16.mxu0 %v1676
      %2068 = vmatmul.mubr.bf16.gmra.mrb[0].mxu0 %v1550
      %v2069 = vpop.f32.mrb[0].mxu0
      %v2070 = vadd.f32 0.0, %v2069
      %v2071 = vpop.f32.mrb[0].mxu0
      %v2072 = vpop.f32.mrb[0].mxu0
      %v2073 = vadd.f32 0.0, %v2072
      %v2074 = vpop.f32.mrb[0].mxu0
      %2075 = vmatprep.mubr.bf16.mxu0 %v1679
      %2076 = vmatmul.mubr.bf16.gmra.mrb[0].mxu0 %v1552
      %v2077 = vpop.f32.mrb[0].mxu0
      %v2078 = vadd.f32 0.0, %v2077
      %v2079 = vpop.f32.mrb[0].mxu0
      %v2080 = vpop.f32.mrb[0].mxu0
      %v2081 = vadd.f32 0.0, %v2080
      %v2082 = vpop.f32.mrb[0].mxu0
      %2083 = vmatprep.mubr.bf16.mxu0 %v1682
      %2084 = vmatmul.mubr.bf16.gmra.mrb[0].mxu0 %v1554
      %v2085 = vpop.f32.mrb[0].mxu0
      %v2086 = vadd.f32 0.0, %v2085
      %v2087 = vpop.f32.mrb[0].mxu0
      %v2088 = vpop.f32.mrb[0].mxu0
      %v2089 = vadd.f32 0.0, %v2088
      %v2090 = vpop.f32.mrb[0].mxu0
      %2091 = vmatprep.mubr.bf16.mxu0 %v1685
      %2092 = vmatmul.mubr.bf16.gmra.mrb[0].mxu0 %v1556
      %v2093 = vpop.f32.mrb[0].mxu0
      %v2094 = vadd.f32 0.0, %v2093
      %v2095 = vpop.f32.mrb[0].mxu0
      %v2096 = vpop.f32.mrb[0].mxu0
      %v2097 = vadd.f32 0.0, %v2096
      %v2098 = vpop.f32.mrb[0].mxu0
      %2099 = vmatprep.mubr.bf16.mxu0 %v1688
      %2100 = vmatmul.mubr.bf16.gmra.mrb[0].mxu0 %v1558
      %v2101 = vpop.f32.mrb[0].mxu0
      %v2102 = vadd.f32 0.0, %v2101
      %v2103 = vpop.f32.mrb[0].mxu0
      %v2104 = vpop.f32.mrb[0].mxu0
      %v2105 = vadd.f32 0.0, %v2104
      %v2106 = vpop.f32.mrb[0].mxu0
      %2107 = vmatprep.mubr.bf16.mxu0 %v1691
      %2108 = vmatmul.mubr.bf16.gmra.mrb[0].mxu0 %v1560
      %v2109 = vpop.f32.mrb[0].mxu0
      %v2110 = vadd.f32 0.0, %v2109
      %v2111 = vpop.f32.mrb[0].mxu0
      %v2112 = vpop.f32.mrb[0].mxu0
      %v2113 = vpop.f32.mrb[0].mxu0
      %2114 = vdwg.mxu0
      %v2115 = vadd.f32 %v1399, %v2006
      %v2116 = vadd.f32 %v1402, %v2009
      %v2117 = vadd.f32 %v1407, %v2014
      %v2118 = vadd.f32 %v1410, %v2017
      %v2119 = vadd.f32 %v1415, %v2022
      %v2120 = vadd.f32 %v1418, %v2025
      %v2121 = vadd.f32 %v1423, %v2030
      %v2122 = vadd.f32 %v1426, %v2033
      %v2123 = vadd.f32 %v1431, %v2038
      %v2124 = vadd.f32 %v1434, %v2041
      %v2125 = vadd.f32 %v1439, %v2046
      %v2126 = vadd.f32 %v1442, %v2049
      %v2127 = vadd.f32 %v1447, %v2054
      %v2128 = vadd.f32 %v1450, %v2057
      %v2129 = vadd.f32 %v1455, %v2062
      %v2130 = vadd.f32 %v1458, %v2065
      %v2131 = vadd.f32 %v1463, %v2070
      %v2132 = vadd.f32 %v1466, %v2073
      %v2133 = vadd.f32 %v1471, %v2078
      %v2134 = vadd.f32 %v1474, %v2081
      %v2135 = vadd.f32 %v1479, %v2086
      %v2136 = vadd.f32 %v1482, %v2089
      %v2137 = vadd.f32 %v1487, %v2094
      %v2138 = vadd.f32 %v1490, %v2097
      %v2139 = vadd.f32 %v1495, %v2102
      %v2140 = vadd.f32 %v1498, %v2105
      %v2141 = vadd.f32 %v1503, %v2110
      %v2142 = vmax.f32 %v1840, %v2115
      %v2143 = vmax.f32 %v1841, %v2116
      %v2144 = vmax.f32 %v1842, %v2117
      %v2145 = vmax.f32 %v1843, %v2118
      %v2146 = vmax.f32 %v1844, %v2119
      %v2147 = vmax.f32 %v1845, %v2120
      %v2148 = vmax.f32 %v1846, %v2121
      %v2149 = vmax.f32 %v1847, %v2122
      %v2150 = vmax.f32 %v1848, %v2123
      %v2151 = vmax.f32 %v1849, %v2124
      %v2152 = vmax.f32 %v1850, %v2125
      %v2153 = vmax.f32 %v1851, %v2126
      %v2154 = vmax.f32 %v1852, %v2127
      %v2155 = vmax.f32 %v1853, %v2128
      %v2156 = vmax.f32 %v1854, %v2129
      %v2157 = vmax.f32 %v1855, %v2130
      %v2158 = vmax.f32 %v1856, %v2131
      %v2159 = vmax.f32 %v1857, %v2132
      %v2160 = vmax.f32 %v1858, %v2133
      %v2161 = vmax.f32 %v1859, %v2134
      %v2162 = vmax.f32 %v1860, %v2135
      %v2163 = vmax.f32 %v1861, %v2136
      %v2164 = vmax.f32 %v1862, %v2137
      %v2165 = vmax.f32 %v1863, %v2138
      %v2166 = vmax.f32 %v1864, %v2139
      %v2167 = vmax.f32 %v1865, %v2140
      %v2168 = vmax.f32 %v1866, %v2141
      %v2169 = vld [vmem:[%s199] sm:$0x1]
      %v2171 = vlaneseq
      %v2172 = vshrl.u32 %v2171, 7
      %v2173 = vsub.s32 0, %v2172
      %v2174 = vrot.slane %v2169, %v2173
      %v2176 = vadd.f32 %v2142, %v2174
      %v2177 = vadd.f32 %v2143, %v2174
      %v2178 = vadd.f32 %v2144, %v2174
      %v2179 = vadd.f32 %v2145, %v2174
      %v2180 = vadd.f32 %v2146, %v2174
      %v2181 = vadd.f32 %v2147, %v2174
      %v2182 = vadd.f32 %v2148, %v2174
      %v2183 = vadd.f32 %v2149, %v2174
      %v2184 = vadd.f32 %v2150, %v2174
      %v2185 = vadd.f32 %v2151, %v2174
      %v2186 = vadd.f32 %v2152, %v2174
      %v2187 = vadd.f32 %v2153, %v2174
      %v2188 = vadd.f32 %v2154, %v2174
      %v2189 = vadd.f32 %v2155, %v2174
      %v2190 = vadd.f32 %v2156, %v2174
      %v2191 = vadd.f32 %v2157, %v2174
      %v2192 = vadd.f32 %v2158, %v2174
      %v2193 = vadd.f32 %v2159, %v2174
      %v2194 = vadd.f32 %v2160, %v2174
      %v2195 = vadd.f32 %v2161, %v2174
      %v2196 = vadd.f32 %v2162, %v2174
      %v2197 = vadd.f32 %v2163, %v2174
      %v2198 = vadd.f32 %v2164, %v2174
      %v2199 = vadd.f32 %v2165, %v2174
      %v2200 = vadd.f32 %v2166, %v2174
      %v2201 = vadd.f32 %v2167, %v2174
      %v2202 = vadd.f32 %v2168, %v2174
      %v2203 = vmax.f32 %v2176, 0.0
      %v2204 = vmax.f32 %v2177, 0.0
      %v2205 = vmax.f32 %v2178, 0.0
      %v2206 = vmax.f32 %v2179, 0.0
      %v2207 = vmax.f32 %v2180, 0.0
      %v2208 = vmax.f32 %v2181, 0.0
      %v2209 = vmax.f32 %v2182, 0.0
      %v2210 = vmax.f32 %v2183, 0.0
      %v2211 = vmax.f32 %v2184, 0.0
      %v2212 = vmax.f32 %v2185, 0.0
      %v2213 = vmax.f32 %v2186, 0.0
      %v2214 = vmax.f32 %v2187, 0.0
      %v2215 = vmax.f32 %v2188, 0.0
      %v2216 = vmax.f32 %v2189, 0.0
      %v2217 = vmax.f32 %v2190, 0.0
      %v2218 = vmax.f32 %v2191, 0.0
      %v2219 = vmax.f32 %v2192, 0.0
      %v2220 = vmax.f32 %v2193, 0.0
      %v2221 = vmax.f32 %v2194, 0.0
      %v2222 = vmax.f32 %v2195, 0.0
      %v2223 = vmax.f32 %v2196, 0.0
      %v2224 = vmax.f32 %v2197, 0.0
      %v2225 = vmax.f32 %v2198, 0.0
      %v2226 = vmax.f32 %v2199, 0.0
      %v2227 = vmax.f32 %v2200, 0.0
      %v2228 = vmax.f32 %v2201, 0.0
      %v2229 = vmax.f32 %v2202, 0.0
      %v2230 = vpack.c.bf16 %v2204, %v2203
      %v2231 = vpack.c.bf16 %v2206, %v2205
      %v2232 = vpack.c.bf16 %v2208, %v2207
      %v2233 = vpack.c.bf16 %v2210, %v2209
      %v2234 = vpack.c.bf16 %v2212, %v2211
      %v2235 = vpack.c.bf16 %v2214, %v2213
      %v2236 = vpack.c.bf16 %v2216, %v2215
      %v2237 = vpack.c.bf16 %v2218, %v2217
      %v2238 = vpack.c.bf16 %v2220, %v2219
      %v2239 = vpack.c.bf16 %v2222, %v2221
      %v2240 = vpack.c.bf16 %v2224, %v2223
      %v2241 = vpack.c.bf16 %v2226, %v2225
      %v2242 = vpack.c.bf16 %v2228, %v2227
      %v2243 = vpack.c.bf16 %v2229, %v2229
      %v2258 = vunpack.c.l.b16 %v2230
      %v2259 = vunpack.c.h.b16 %v2230
      %v2260 = vunpack.c.l.b16 %v2231
      %v2261 = vunpack.c.h.b16 %v2231
      %v2262 = vunpack.c.l.b16 %v2232
      %v2263 = vunpack.c.h.b16 %v2232
      %v2264 = vunpack.c.l.b16 %v2233
      %v2265 = vunpack.c.h.b16 %v2233
      %v2266 = vunpack.c.l.b16 %v2234
      %v2267 = vunpack.c.h.b16 %v2234
      %v2268 = vunpack.c.l.b16 %v2235
      %v2269 = vunpack.c.h.b16 %v2235
      %v2270 = vunpack.c.l.b16 %v2236
      %v2271 = vunpack.c.h.b16 %v2236
      %v2272 = vunpack.c.l.b16 %v2237
      %v2273 = vunpack.c.h.b16 %v2237
      %v2274 = vunpack.c.l.b16 %v2238
      %v2275 = vunpack.c.h.b16 %v2238
      %v2276 = vunpack.c.l.b16 %v2239
      %v2277 = vunpack.c.h.b16 %v2239
      %v2278 = vunpack.c.l.b16 %v2240
      %v2279 = vunpack.c.h.b16 %v2240
      %v2280 = vunpack.c.l.b16 %v2241
      %v2281 = vunpack.c.h.b16 %v2241
      %v2282 = vunpack.c.l.b16 %v2242
      %v2283 = vunpack.c.h.b16 %v2242
      %v2284 = vunpack.c.l.b16 %v2243
      %v2285 = vpack.c.b16 %v2258, %v2258
      %v2286 = vpack.c.b16 %v2259, %v2259
      %v2287 = vpack.c.b16 %v2260, %v2260
      %v2288 = vpack.c.b16 %v2261, %v2261
      %v2289 = vpack.c.b16 %v2262, %v2262
      %v2290 = vpack.c.b16 %v2263, %v2263
      %v2291 = vpack.c.b16 %v2264, %v2264
      %v2292 = vpack.c.b16 %v2265, %v2265
      %v2293 = vpack.c.b16 %v2266, %v2266
      %v2294 = vpack.c.b16 %v2267, %v2267
      %v2295 = vpack.c.b16 %v2268, %v2268
      %v2296 = vpack.c.b16 %v2269, %v2269
      %v2297 = vpack.c.b16 %v2270, %v2270
      %v2298 = vpack.c.b16 %v2271, %v2271
      %v2299 = vpack.c.b16 %v2272, %v2272
      %v2300 = vpack.c.b16 %v2273, %v2273
      %v2301 = vpack.c.b16 %v2274, %v2274
      %v2302 = vpack.c.b16 %v2275, %v2275
      %v2303 = vpack.c.b16 %v2276, %v2276
      %v2304 = vpack.c.b16 %v2277, %v2277
      %v2305 = vpack.c.b16 %v2278, %v2278
      %v2306 = vpack.c.b16 %v2279, %v2279
      %v2307 = vpack.c.b16 %v2280, %v2280
      %v2308 = vpack.c.b16 %v2281, %v2281
      %v2309 = vpack.c.b16 %v2282, %v2282
      %v2310 = vpack.c.b16 %v2283, %v2283
      %v2311 = vpack.c.b16 %v2284, %v2284
      %vm2339 = vcmask 814080
      %2340 = vst.msk [vmem:[%s204] sm:$0xf] %vm2339, %v2285
      %2341 = vst.msk [vmem:[%s204 + $0x4] sm:$0xf] %vm2339, %v2286
      %2342 = vst.msk [vmem:[%s204 + $0x8] sm:$0xf] %vm2339, %v2287
      %2343 = vst.msk [vmem:[%s204 + $0xc] sm:$0xf] %vm2339, %v2288
      %2344 = vst.msk [vmem:[%s204 + $0x10] sm:$0xf] %vm2339, %v2289
      %2345 = vst.msk [vmem:[%s204 + $0x14] sm:$0xf] %vm2339, %v2290
      %2346 = vst.msk [vmem:[%s204 + $0x18] sm:$0xf] %vm2339, %v2291
      %2347 = vst.msk [vmem:[%s204 + $0x1c] sm:$0xf] %vm2339, %v2292
      %2348 = vst.msk [vmem:[%s204 + $0x20] sm:$0xf] %vm2339, %v2293
      %2349 = vst.msk [vmem:[%s204 + $0x24] sm:$0xf] %vm2339, %v2294
      %2350 = vst.msk [vmem:[%s204 + $0x28] sm:$0xf] %vm2339, %v2295
      %2351 = vst.msk [vmem:[%s204 + $0x2c] sm:$0xf] %vm2339, %v2296
      %2352 = vst.msk [vmem:[%s204 + $0x30] sm:$0xf] %vm2339, %v2297
      %2353 = vst.msk [vmem:[%s204 + $0x34] sm:$0xf] %vm2339, %v2298
      %2354 = vst.msk [vmem:[%s204 + $0x38] sm:$0xf] %vm2339, %v2299
      %2355 = vst.msk [vmem:[%s204 + $0x3c] sm:$0xf] %vm2339, %v2300
      %2356 = vst.msk [vmem:[%s204 + $0x40] sm:$0xf] %vm2339, %v2301
      %2357 = vst.msk [vmem:[%s204 + $0x44] sm:$0xf] %vm2339, %v2302
      %2358 = vst.msk [vmem:[%s204 + $0x48] sm:$0xf] %vm2339, %v2303
      %2359 = vst.msk [vmem:[%s204 + $0x4c] sm:$0xf] %vm2339, %v2304
      %2360 = vst.msk [vmem:[%s204 + $0x50] sm:$0xf] %vm2339, %v2305
      %2361 = vst.msk [vmem:[%s204 + $0x54] sm:$0xf] %vm2339, %v2306
      %2362 = vst.msk [vmem:[%s204 + $0x58] sm:$0xf] %vm2339, %v2307
      %2363 = vst.msk [vmem:[%s204 + $0x5c] sm:$0xf] %vm2339, %v2308
      %2364 = vst.msk [vmem:[%s204 + $0x60] sm:$0xf] %vm2339, %v2309
      %2365 = vst.msk [vmem:[%s204 + $0x64] sm:$0xf] %vm2339, %v2310
      %2366 = vst.msk [vmem:[%s204 + $0x68] sm:$0xf] %vm2339, %v2311
      %p2367 = scmp.lt.s32.totalorder %s14, 1
      %s2368 = scalar_select %p2367, %s14, 1
      %s2369 = smul.addr %s2368, 27
      %s2370 = smul.addr %s2369, 4
      %s2371 = scalar_lea.vmem %s3, %s2370
      // Predicated region
      $region33: #{teacher_forward.2} parent=31 // pred_check
        %p2372 = pneg %p110
      $region34: #{teacher_forward.2} parent=31 // pred_check_branch
        %2374 = sbr.rel (%p2372) target = $region36
      $region35: #{teacher_forward.2} parent=31 // pred_region
        _
      $region36: #{teacher_forward.2} parent=31 // pred_fallthru
        _
    $region32: #{teacher_forward.2} parent=5 // pred_fallthru
      _
    %p2375 = scmp.le.s32.totalorder 2, %s9
    // Predicated region
    $region37: #{teacher_forward.2} parent=5 // pred_check
      %p2376 = pneg %p2375
    $region38: #{teacher_forward.2} parent=5 // pred_check_branch
      %2378 = sbr.rel (%p2376) target = $region40
    $region39: #{teacher_forward.2} parent=5 // pred_region
      %s2379 = ssub.s32 %s9, 2
      // Predicated region
      $region41: #{teacher_forward.2} parent=39 // pred_check
        %p2380 = pneg %p116
      $region42: #{teacher_forward.2} parent=39 // pred_check_branch
        %2382 = sbr.rel (%p2380) target = $region44
      $region43: #{teacher_forward.2} parent=39 // pred_region
        %p2383 = scmp.lt.s32.totalorder %s15, 1
        %s2384 = scalar_select %p2383, %s15, 1
        %s2385 = smul.addr %s2384, 27
        %s2386 = smul.addr %s2385, 4
        %s2387 = scalar_lea.vmem %s3, %s2386
      $region44: #{teacher_forward.2} parent=39 // pred_fallthru
        _
    $region40: #{teacher_forward.2} parent=5 // pred_fallthru
      _
  $region6: #{teacher_forward.2} parent=0 // loop_footer
    %s13 = sadd.s32 1, %s9
  $region7: #{teacher_forward.2} parent=0 // loop_footer_branch
    %8 = sbr.rel target = $region3
  $region8: #{teacher_forward.2} parent=0 // loop_exit
    _

// kernel: teacher_forward.3
$region0: #{teacher_forward.3}
  #allocation0 [shape = 'u32[]', space=smem, size = 0x4, offset = 0x4, fixed_abs, tag = 'smem constant byte address 0x4 - core index']
  #allocation1 [shape = 'u32[144,128]{1,0:T(1,128)}', space=vmem, size = 0x12000, scoped, tag = 'internal scratch']
  %s0 = inlined_call_operand.vmem [shape: bf16[2,48,1000], index: 0, kind: input, shape index: {}]
  %s1 = inlined_call_operand.vmem [shape: bf16[2,1000,100], index: 1, kind: input, shape index: {}]
  %s2 = inlined_call_operand.vmem [shape: f32[2,1,100], index: 2, kind: input, shape index: {}]
  %s3 = inlined_call_operand.vmem [shape: bf16[2,600,256], index: 3, kind: input, shape index: {}]
  %s4 = inlined_call_operand.vmem [shape: f32[2,1,256], index: 4, kind: input, shape index: {}]
  %s5 = inlined_call_operand.vmem [shape: f32[2,1,256], index: 5, kind: input, shape index: {}]
  %s6 = inlined_call_operand.vmem [shape: f32[2,1,256], index: 6, kind: input, shape index: {}]
  %s7 = inlined_call_operand.vmem [shape: bf16[2,256,64], index: 7, kind: input, shape index: {}]
  %s8 = inlined_call_operand.vmem [shape: f32[2,1,64], index: 8, kind: input, shape index: {}]
  %s9 = inlined_call_operand.vmem [shape: f32[2,1,64], index: 9, kind: input, shape index: {}]
  %s10 = inlined_call_operand.vmem [shape: f32[2,1,64], index: 10, kind: input, shape index: {}]
  %s11 = inlined_call_operand.vmem [shape: bf16[2,64,4], index: 11, kind: input, shape index: {}]
  %s12 = inlined_call_operand.vmem [shape: f32[2,4,4], index: 12, kind: output, shape index: {}]
  %s13 = sld [smem:[#allocation0]]
  $region81: #{teacher_forward.3} parent=0
    _
  %s15 = ssub.s32 1, %s13
  %s16 = scalar_select 0, %s15, %s13
  loop: start=0, step=1, limit=4
  $region2: #{teacher_forward.3} parent=0 // loop_pre_header
    _
  $region3: #{teacher_forward.3} parent=0 // loop_header
    %s18 = sphi 0, %s22
    %p19 = scmp.ge.s32.totalorder %s18, 4
    %s28 = sphi 0, %s30
    %s31 = sphi 0, %s28
    %s32 = sphi 0, %s31
    %s48 = sphi 0, %s32
    %s54 = sphi 0, %s56
    %s57 = sphi 0, %s54
    %s58 = sphi 0, %s57
    %s74 = sphi 0, %s58
    %s80 = sphi 0, %s82
    %s83 = sphi 0, %s80
    %s84 = sphi 0, %s83
    %s100 = sphi 0, %s84
    %s106 = sphi 0, %s108
    %s109 = sphi 0, %s106
    %s110 = sphi 0, %s109
    %s126 = sphi 0, %s110
    %s132 = sphi 0, %s134
    %s135 = sphi 0, %s132
    %s136 = sphi 0, %s135
    %s152 = sphi 0, %s136
    %s158 = sphi 0, %s160
    %s161 = sphi 0, %s158
    %s162 = sphi 0, %s161
    %s178 = sphi 0, %s162
    %s184 = sphi 0, %s186
    %s187 = sphi 0, %s184
    %s188 = sphi 0, %s187
    %s204 = sphi 0, %s188
    %s210 = sphi 0, %s212
    %s213 = sphi 0, %s210
    %s214 = sphi 0, %s213
    %s230 = sphi 0, %s214
    %s236 = sphi 0, %s238
    %s239 = sphi 0, %s236
    %s240 = sphi 0, %s239
    %s256 = sphi 0, %s240
    %s262 = sphi 0, %s264
    %s265 = sphi 0, %s262
    %s266 = sphi 0, %s265
    %s282 = sphi 0, %s266
    %s288 = sphi 0, %s290
    %s291 = sphi 0, %s288
    %s292 = sphi 0, %s291
    %s308 = sphi 0, %s292
    %s314 = sphi 0, %s316
    %s317 = sphi 0, %s314
    %s318 = sphi 0, %s317
    %s334 = sphi 0, %s318
    %s340 = sphi 0, %s342
    %s343 = sphi 0, %s340
    %s344 = sphi 0, %s343
    %s360 = sphi 0, %s344
  $region4: #{teacher_forward.3} parent=0 // loop_header_branch
    %21 = sbr.rel (%p19) target = $region8
  $region5: #{teacher_forward.3} parent=0 // loop_body
    %s23 = ssub.s32 %s18, 1
    %s24 = ssub.s32 %s18, 2
    %s25 = sadd.s32 %s18, 1
    %s26 = ssub.s32 %s18, %s25
    %p27 = scmp.eq.s32.totalorder %s26, 0
    %s29 = sadd.s32 %s28, 1
    %s30 = scalar_select %p27, %s28, %s29
    %p33 = pneg %p27
    %p34 = scmp.eq.s32.totalorder %s18, 1
    %p35 = por %p33, %p34
    %p36 = scmp.ne.s32.totalorder %s28, %s31
    %p37 = scmp.eq.s32.totalorder %s18, 0
    %p38 = por %p36, %p37
    %p39 = scmp.ne.s32.totalorder %s28, %s31
    %p40 = scmp.eq.s32.totalorder %s23, 1
    %p41 = por %p39, %p40
    %p42 = scmp.ne.s32.totalorder %s31, %s32
    %p43 = scmp.eq.s32.totalorder %s23, 0
    %p44 = por %p42, %p43
    %p45 = scmp.ne.s32.totalorder %s31, %s32
    %p46 = scmp.eq.s32.totalorder %s24, 1
    %p47 = por %p45, %p46
    %p49 = scmp.ne.s32.totalorder %s32, %s48
    %p50 = scmp.eq.s32.totalorder %s24, 0
    %p51 = por %p49, %p50
    %s52 = ssub.s32 %s18, %s25
    %p53 = scmp.eq.s32.totalorder %s52, 0
    %s55 = sadd.s32 %s54, 1
    %s56 = scalar_select %p53, %s54, %s55
    %p59 = pneg %p53
    %p60 = scmp.eq.s32.totalorder %s18, 1
    %p61 = por %p59, %p60
    %p62 = scmp.ne.s32.totalorder %s54, %s57
    %p63 = scmp.eq.s32.totalorder %s18, 0
    %p64 = por %p62, %p63
    %p65 = scmp.ne.s32.totalorder %s54, %s57
    %p66 = scmp.eq.s32.totalorder %s23, 1
    %p67 = por %p65, %p66
    %p68 = scmp.ne.s32.totalorder %s57, %s58
    %p69 = scmp.eq.s32.totalorder %s23, 0
    %p70 = por %p68, %p69
    %p71 = scmp.ne.s32.totalorder %s57, %s58
    %p72 = scmp.eq.s32.totalorder %s24, 1
    %p73 = por %p71, %p72
    %p75 = scmp.ne.s32.totalorder %s58, %s74
    %p76 = scmp.eq.s32.totalorder %s24, 0
    %p77 = por %p75, %p76
    %s78 = ssub.s32 %s18, %s25
    %p79 = scmp.eq.s32.totalorder %s78, 0
    %s81 = sadd.s32 %s80, 1
    %s82 = scalar_select %p79, %s80, %s81
    %p85 = pneg %p79
    %p86 = scmp.eq.s32.totalorder %s18, 1
    %p87 = por %p85, %p86
    %p88 = scmp.ne.s32.totalorder %s80, %s83
    %p89 = scmp.eq.s32.totalorder %s18, 0
    %p90 = por %p88, %p89
    %p91 = scmp.ne.s32.totalorder %s80, %s83
    %p92 = scmp.eq.s32.totalorder %s23, 1
    %p93 = por %p91, %p92
    %p94 = scmp.ne.s32.totalorder %s83, %s84
    %p95 = scmp.eq.s32.totalorder %s23, 0
    %p96 = por %p94, %p95
    %p97 = scmp.ne.s32.totalorder %s83, %s84
    %p98 = scmp.eq.s32.totalorder %s24, 1
    %p99 = por %p97, %p98
    %p101 = scmp.ne.s32.totalorder %s84, %s100
    %p102 = scmp.eq.s32.totalorder %s24, 0
    %p103 = por %p101, %p102
    %s104 = ssub.s32 %s18, %s25
    %p105 = scmp.eq.s32.totalorder %s104, 0
    %s107 = sadd.s32 %s106, 1
    %s108 = scalar_select %p105, %s106, %s107
    %p111 = pneg %p105
    %p112 = scmp.eq.s32.totalorder %s18, 1
    %p113 = por %p111, %p112
    %p114 = scmp.ne.s32.totalorder %s106, %s109
    %p115 = scmp.eq.s32.totalorder %s18, 0
    %p116 = por %p114, %p115
    %p117 = scmp.ne.s32.totalorder %s106, %s109
    %p118 = scmp.eq.s32.totalorder %s23, 1
    %p119 = por %p117, %p118
    %p120 = scmp.ne.s32.totalorder %s109, %s110
    %p121 = scmp.eq.s32.totalorder %s23, 0
    %p122 = por %p120, %p121
    %p123 = scmp.ne.s32.totalorder %s109, %s110
    %p124 = scmp.eq.s32.totalorder %s24, 1
    %p125 = por %p123, %p124
    %p127 = scmp.ne.s32.totalorder %s110, %s126
    %p128 = scmp.eq.s32.totalorder %s24, 0
    %p129 = por %p127, %p128
    %s130 = ssub.s32 %s18, %s25
    %p131 = scmp.eq.s32.totalorder %s130, 0
    %s133 = sadd.s32 %s132, 1
    %s134 = scalar_select %p131, %s132, %s133
    %p137 = pneg %p131
    %p138 = scmp.eq.s32.totalorder %s18, 1
    %p139 = por %p137, %p138
    %p140 = scmp.ne.s32.totalorder %s132, %s135
    %p141 = scmp.eq.s32.totalorder %s18, 0
    %p142 = por %p140, %p141
    %p143 = scmp.ne.s32.totalorder %s132, %s135
    %p144 = scmp.eq.s32.totalorder %s23, 1
    %p145 = por %p143, %p144
    %p146 = scmp.ne.s32.totalorder %s135, %s136
    %p147 = scmp.eq.s32.totalorder %s23, 0
    %p148 = por %p146, %p147
    %p149 = scmp.ne.s32.totalorder %s135, %s136
    %p150 = scmp.eq.s32.totalorder %s24, 1
    %p151 = por %p149, %p150
    %p153 = scmp.ne.s32.totalorder %s136, %s152
    %p154 = scmp.eq.s32.totalorder %s24, 0
    %p155 = por %p153, %p154
    %s156 = ssub.s32 %s18, %s25
    %p157 = scmp.eq.s32.totalorder %s156, 0
    %s159 = sadd.s32 %s158, 1
    %s160 = scalar_select %p157, %s158, %s159
    %p163 = pneg %p157
    %p164 = scmp.eq.s32.totalorder %s18, 1
    %p165 = por %p163, %p164
    %p166 = scmp.ne.s32.totalorder %s158, %s161
    %p167 = scmp.eq.s32.totalorder %s18, 0
    %p168 = por %p166, %p167
    %p169 = scmp.ne.s32.totalorder %s158, %s161
    %p170 = scmp.eq.s32.totalorder %s23, 1
    %p171 = por %p169, %p170
    %p172 = scmp.ne.s32.totalorder %s161, %s162
    %p173 = scmp.eq.s32.totalorder %s23, 0
    %p174 = por %p172, %p173
    %p175 = scmp.ne.s32.totalorder %s161, %s162
    %p176 = scmp.eq.s32.totalorder %s24, 1
    %p177 = por %p175, %p176
    %p179 = scmp.ne.s32.totalorder %s162, %s178
    %p180 = scmp.eq.s32.totalorder %s24, 0
    %p181 = por %p179, %p180
    %s182 = ssub.s32 %s18, %s25
    %p183 = scmp.eq.s32.totalorder %s182, 0
    %s185 = sadd.s32 %s184, 1
    %s186 = scalar_select %p183, %s184, %s185
    %p189 = pneg %p183
    %p190 = scmp.eq.s32.totalorder %s18, 1
    %p191 = por %p189, %p190
    %p192 = scmp.ne.s32.totalorder %s184, %s187
    %p193 = scmp.eq.s32.totalorder %s18, 0
    %p194 = por %p192, %p193
    %p195 = scmp.ne.s32.totalorder %s184, %s187
    %p196 = scmp.eq.s32.totalorder %s23, 1
    %p197 = por %p195, %p196
    %p198 = scmp.ne.s32.totalorder %s187, %s188
    %p199 = scmp.eq.s32.totalorder %s23, 0
    %p200 = por %p198, %p199
    %p201 = scmp.ne.s32.totalorder %s187, %s188
    %p202 = scmp.eq.s32.totalorder %s24, 1
    %p203 = por %p201, %p202
    %p205 = scmp.ne.s32.totalorder %s188, %s204
    %p206 = scmp.eq.s32.totalorder %s24, 0
    %p207 = por %p205, %p206
    %s208 = ssub.s32 %s18, %s25
    %p209 = scmp.eq.s32.totalorder %s208, 0
    %s211 = sadd.s32 %s210, 1
    %s212 = scalar_select %p209, %s210, %s211
    %p215 = pneg %p209
    %p216 = scmp.eq.s32.totalorder %s18, 1
    %p217 = por %p215, %p216
    %p218 = scmp.ne.s32.totalorder %s210, %s213
    %p219 = scmp.eq.s32.totalorder %s18, 0
    %p220 = por %p218, %p219
    %p221 = scmp.ne.s32.totalorder %s210, %s213
    %p222 = scmp.eq.s32.totalorder %s23, 1
    %p223 = por %p221, %p222
    %p224 = scmp.ne.s32.totalorder %s213, %s214
    %p225 = scmp.eq.s32.totalorder %s23, 0
    %p226 = por %p224, %p225
    %p227 = scmp.ne.s32.totalorder %s213, %s214
    %p228 = scmp.eq.s32.totalorder %s24, 1
    %p229 = por %p227, %p228
    %p231 = scmp.ne.s32.totalorder %s214, %s230
    %p232 = scmp.eq.s32.totalorder %s24, 0
    %p233 = por %p231, %p232
    %s234 = ssub.s32 %s18, %s25
    %p235 = scmp.eq.s32.totalorder %s234, 0
    %s237 = sadd.s32 %s236, 1
    %s238 = scalar_select %p235, %s236, %s237
    %p241 = pneg %p235
    %p242 = scmp.eq.s32.totalorder %s18, 1
    %p243 = por %p241, %p242
    %p244 = scmp.ne.s32.totalorder %s236, %s239
    %p245 = scmp.eq.s32.totalorder %s18, 0
    %p246 = por %p244, %p245
    %p247 = scmp.ne.s32.totalorder %s236, %s239
    %p248 = scmp.eq.s32.totalorder %s23, 1
    %p249 = por %p247, %p248
    %p250 = scmp.ne.s32.totalorder %s239, %s240
    %p251 = scmp.eq.s32.totalorder %s23, 0
    %p252 = por %p250, %p251
    %p253 = scmp.ne.s32.totalorder %s239, %s240
    %p254 = scmp.eq.s32.totalorder %s24, 1
    %p255 = por %p253, %p254
    %p257 = scmp.ne.s32.totalorder %s240, %s256
    %p258 = scmp.eq.s32.totalorder %s24, 0
    %p259 = por %p257, %p258
    %s260 = ssub.s32 %s18, %s25
    %p261 = scmp.eq.s32.totalorder %s260, 0
    %s263 = sadd.s32 %s262, 1
    %s264 = scalar_select %p261, %s262, %s263
    %p267 = pneg %p261
    %p268 = scmp.eq.s32.totalorder %s18, 1
    %p269 = por %p267, %p268
    %p270 = scmp.ne.s32.totalorder %s262, %s265
    %p271 = scmp.eq.s32.totalorder %s18, 0
    %p272 = por %p270, %p271
    %p273 = scmp.ne.s32.totalorder %s262, %s265
    %p274 = scmp.eq.s32.totalorder %s23, 1
    %p275 = por %p273, %p274
    %p276 = scmp.ne.s32.totalorder %s265, %s266
    %p277 = scmp.eq.s32.totalorder %s23, 0
    %p278 = por %p276, %p277
    %p279 = scmp.ne.s32.totalorder %s265, %s266
    %p280 = scmp.eq.s32.totalorder %s24, 1
    %p281 = por %p279, %p280
    %p283 = scmp.ne.s32.totalorder %s266, %s282
    %p284 = scmp.eq.s32.totalorder %s24, 0
    %p285 = por %p283, %p284
    %s286 = ssub.s32 %s18, %s25
    %p287 = scmp.eq.s32.totalorder %s286, 0
    %s289 = sadd.s32 %s288, 1
    %s290 = scalar_select %p287, %s288, %s289
    %p293 = pneg %p287
    %p294 = scmp.eq.s32.totalorder %s18, 1
    %p295 = por %p293, %p294
    %p296 = scmp.ne.s32.totalorder %s288, %s291
    %p297 = scmp.eq.s32.totalorder %s18, 0
    %p298 = por %p296, %p297
    %p299 = scmp.ne.s32.totalorder %s288, %s291
    %p300 = scmp.eq.s32.totalorder %s23, 1
    %p301 = por %p299, %p300
    %p302 = scmp.ne.s32.totalorder %s291, %s292
    %p303 = scmp.eq.s32.totalorder %s23, 0
    %p304 = por %p302, %p303
    %p305 = scmp.ne.s32.totalorder %s291, %s292
    %p306 = scmp.eq.s32.totalorder %s24, 1
    %p307 = por %p305, %p306
    %p309 = scmp.ne.s32.totalorder %s292, %s308
    %p310 = scmp.eq.s32.totalorder %s24, 0
    %p311 = por %p309, %p310
    %s312 = ssub.s32 %s18, %s25
    %p313 = scmp.eq.s32.totalorder %s312, 0
    %s315 = sadd.s32 %s314, 1
    %s316 = scalar_select %p313, %s314, %s315
    %p319 = pneg %p313
    %p320 = scmp.eq.s32.totalorder %s18, 1
    %p321 = por %p319, %p320
    %p322 = scmp.ne.s32.totalorder %s314, %s317
    %p323 = scmp.eq.s32.totalorder %s18, 0
    %p324 = por %p322, %p323
    %p325 = scmp.ne.s32.totalorder %s314, %s317
    %p326 = scmp.eq.s32.totalorder %s23, 1
    %p327 = por %p325, %p326
    %p328 = scmp.ne.s32.totalorder %s317, %s318
    %p329 = scmp.eq.s32.totalorder %s23, 0
    %p330 = por %p328, %p329
    %p331 = scmp.ne.s32.totalorder %s317, %s318
    %p332 = scmp.eq.s32.totalorder %s24, 1
    %p333 = por %p331, %p332
    %p335 = scmp.ne.s32.totalorder %s318, %s334
    %p336 = scmp.eq.s32.totalorder %s24, 0
    %p337 = por %p335, %p336
    %s338 = ssub.s32 %s18, %s25
    %p339 = scmp.eq.s32.totalorder %s338, 0
    %s341 = sadd.s32 %s340, 1
    %s342 = scalar_select %p339, %s340, %s341
    %p345 = pneg %p339
    %p346 = scmp.eq.s32.totalorder %s18, 1
    %p347 = por %p345, %p346
    %p348 = scmp.ne.s32.totalorder %s340, %s343
    %p349 = scmp.eq.s32.totalorder %s18, 0
    %p350 = por %p348, %p349
    %p351 = scmp.ne.s32.totalorder %s340, %s343
    %p352 = scmp.eq.s32.totalorder %s23, 1
    %p353 = por %p351, %p352
    %p354 = scmp.ne.s32.totalorder %s343, %s344
    %p355 = scmp.eq.s32.totalorder %s23, 0
    %p356 = por %p354, %p355
    %p357 = scmp.ne.s32.totalorder %s343, %s344
    %p358 = scmp.eq.s32.totalorder %s24, 1
    %p359 = por %p357, %p358
    %p361 = scmp.ne.s32.totalorder %s344, %s360
    %p362 = scmp.eq.s32.totalorder %s24, 0
    %p363 = por %p361, %p362
    %p364 = scmp.le.s32.totalorder 1, %s18
    %p365 = scmp.lt.s32.totalorder %s18, 3
    %p366 = pnand %p364, %p365
    %p367 = pneg %p366
    // Predicated region
    $region9: #{teacher_forward.3} parent=5 // pred_check
      _
    $region10: #{teacher_forward.3} parent=5 // pred_check_branch
      %369 = sbr.rel (%p366) target = $region12
    $region11: #{teacher_forward.3} parent=5 // pred_region
      %s370 = ssub.s32 %s18, 1
    $region12: #{teacher_forward.3} parent=5 // pred_fallthru
      _
    %p371 = scmp.lt.s32.totalorder %s18, 2
    // Predicated region
    $region13: #{teacher_forward.3} parent=5 // pred_check
      %p372 = pneg %p371
    $region14: #{teacher_forward.3} parent=5 // pred_check_branch
      %374 = sbr.rel (%p372) target = $region16
    $region15: #{teacher_forward.3} parent=5 // pred_region
      // Predicated region
      $region17: #{teacher_forward.3} parent=15 // pred_check
        %p375 = pneg %p38
      $region18: #{teacher_forward.3} parent=15 // pred_check_branch
        %377 = sbr.rel (%p375) target = $region20
      $region19: #{teacher_forward.3} parent=15 // pred_region
        %p378 = scmp.lt.s32.totalorder %s18, 1
        %s379 = scalar_select %p378, %s18, 1
        %s380 = smul.addr %s379, 48
        %s381 = smul.addr %s380, 4
        %s382 = scalar_lea.vmem %s0, %s381
      $region20: #{teacher_forward.3} parent=15 // pred_fallthru
        _
      // Predicated region
      $region21: #{teacher_forward.3} parent=15 // pred_check
        %p383 = pneg %p64
      $region22: #{teacher_forward.3} parent=15 // pred_check_branch
        %385 = sbr.rel (%p383) target = $region24
      $region23: #{teacher_forward.3} parent=15 // pred_region
        %p386 = scmp.lt.s32.totalorder %s18, 1
        %s387 = scalar_select %p386, %s18, 1
        %s388 = smul.addr %s387, 125
        %s389 = smul.addr %s388, 4
        %s390 = scalar_lea.vmem %s1, %s389
      $region24: #{teacher_forward.3} parent=15 // pred_fallthru
        _
      // Predicated region
      $region25: #{teacher_forward.3} parent=15 // pred_check
        %p391 = pneg %p90
      $region26: #{teacher_forward.3} parent=15 // pred_check_branch
        %393 = sbr.rel (%p391) target = $region28
      $region27: #{teacher_forward.3} parent=15 // pred_region
        %p394 = scmp.lt.s32.totalorder %s18, 1
        %s395 = scalar_select %p394, %s18, 1
        %s396 = scalar_lea.vmem %s2, %s395
      $region28: #{teacher_forward.3} parent=15 // pred_fallthru
        _
      // Predicated region
      $region29: #{teacher_forward.3} parent=15 // pred_check
        %p397 = pneg %p116
      $region30: #{teacher_forward.3} parent=15 // pred_check_branch
        %399 = sbr.rel (%p397) target = $region32
      $region31: #{teacher_forward.3} parent=15 // pred_region
        %p400 = scmp.lt.s32.totalorder %s18, 1
        %s401 = scalar_select %p400, %s18, 1
        %s402 = smul.addr %s401, 150
        %s403 = smul.addr %s402, 4
        %s404 = scalar_lea.vmem %s3, %s403
      $region32: #{teacher_forward.3} parent=15 // pred_fallthru
        _
      // Predicated region
      $region33: #{teacher_forward.3} parent=15 // pred_check
        %p405 = pneg %p142
      $region34: #{teacher_forward.3} parent=15 // pred_check_branch
        %407 = sbr.rel (%p405) target = $region36
      $region35: #{teacher_forward.3} parent=15 // pred_region
        %p408 = scmp.lt.s32.totalorder %s18, 1
        %s409 = scalar_select %p408, %s18, 1
        %s410 = smul.addr %s409, 2
        %s411 = scalar_lea.vmem %s4, %s410
      $region36: #{teacher_forward.3} parent=15 // pred_fallthru
        _
      // Predicated region
      $region37: #{teacher_forward.3} parent=15 // pred_check
        %p412 = pneg %p168
      $region38: #{teacher_forward.3} parent=15 // pred_check_branch
        %414 = sbr.rel (%p412) target = $region40
      $region39: #{teacher_forward.3} parent=15 // pred_region
        %p415 = scmp.lt.s32.totalorder %s18, 1
        %s416 = scalar_select %p415, %s18, 1
        %s417 = smul.addr %s416, 2
        %s418 = scalar_lea.vmem %s5, %s417
      $region40: #{teacher_forward.3} parent=15 // pred_fallthru
        _
      // Predicated region
      $region41: #{teacher_forward.3} parent=15 // pred_check
        %p419 = pneg %p194
      $region42: #{teacher_forward.3} parent=15 // pred_check_branch
        %421 = sbr.rel (%p419) target = $region44
      $region43: #{teacher_forward.3} parent=15 // pred_region
        %p422 = scmp.lt.s32.totalorder %s18, 1
        %s423 = scalar_select %p422, %s18, 1
        %s424 = smul.addr %s423, 2
        %s425 = scalar_lea.vmem %s6, %s424
      $region44: #{teacher_forward.3} parent=15 // pred_fallthru
        _
      // Predicated region
      $region45: #{teacher_forward.3} parent=15 // pred_check
        %p426 = pneg %p220
      $region46: #{teacher_forward.3} parent=15 // pred_check_branch
        %428 = sbr.rel (%p426) target = $region48
      $region47: #{teacher_forward.3} parent=15 // pred_region
        %p429 = scmp.lt.s32.totalorder %s18, 1
        %s430 = scalar_select %p429, %s18, 1
        %s431 = smul.addr %s430, 32
        %s432 = smul.addr %s431, 4
        %s433 = scalar_lea.vmem %s7, %s432
      $region48: #{teacher_forward.3} parent=15 // pred_fallthru
        _
      // Predicated region
      $region49: #{teacher_forward.3} parent=15 // pred_check
        %p434 = pneg %p246
      $region50: #{teacher_forward.3} parent=15 // pred_check_branch
        %436 = sbr.rel (%p434) target = $region52
      $region51: #{teacher_forward.3} parent=15 // pred_region
        %p437 = scmp.lt.s32.totalorder %s18, 1
        %s438 = scalar_select %p437, %s18, 1
        %s439 = scalar_lea.vmem %s8, %s438
      $region52: #{teacher_forward.3} parent=15 // pred_fallthru
        _
      // Predicated region
      $region53: #{teacher_forward.3} parent=15 // pred_check
        %p440 = pneg %p272
      $region54: #{teacher_forward.3} parent=15 // pred_check_branch
        %442 = sbr.rel (%p440) target = $region56
      $region55: #{teacher_forward.3} parent=15 // pred_region
        %p443 = scmp.lt.s32.totalorder %s18, 1
        %s444 = scalar_select %p443, %s18, 1
        %s445 = scalar_lea.vmem %s9, %s444
      $region56: #{teacher_forward.3} parent=15 // pred_fallthru
        _
      // Predicated region
      $region57: #{teacher_forward.3} parent=15 // pred_check
        %p446 = pneg %p298
      $region58: #{teacher_forward.3} parent=15 // pred_check_branch
        %448 = sbr.rel (%p446) target = $region60
      $region59: #{teacher_forward.3} parent=15 // pred_region
        %p449 = scmp.lt.s32.totalorder %s18, 1
        %s450 = scalar_select %p449, %s18, 1
        %s451 = scalar_lea.vmem %s10, %s450
      $region60: #{teacher_forward.3} parent=15 // pred_fallthru
        _
      // Predicated region
      $region61: #{teacher_forward.3} parent=15 // pred_check
        %p452 = pneg %p324
      $region62: #{teacher_forward.3} parent=15 // pred_check_branch
        %454 = sbr.rel (%p452) target = $region64
      $region63: #{teacher_forward.3} parent=15 // pred_region
        %p455 = scmp.lt.s32.totalorder %s18, 1
        %s456 = scalar_select %p455, %s18, 1
        %s457 = smul.addr %s456, 8
        %s458 = smul.addr %s457, 4
        %s459 = scalar_lea.vmem %s11, %s458
      $region64: #{teacher_forward.3} parent=15 // pred_fallthru
        _
    $region16: #{teacher_forward.3} parent=5 // pred_fallthru
      _
    %p460 = scmp.le.s32.totalorder 1, %s18
    %p461 = scmp.lt.s32.totalorder %s18, 3
    %p462 = pnand %p460, %p461
    %p463 = pneg %p462
    // Predicated region
    $region65: #{teacher_forward.3} parent=5 // pred_check
      _
    $region66: #{teacher_forward.3} parent=5 // pred_check_branch
      %465 = sbr.rel (%p462) target = $region68
    $region67: #{teacher_forward.3} parent=5 // pred_region
      %s466 = ssub.s32 %s18, 1
      %p467 = scmp.lt.s32.totalorder %s23, 1
      %s468 = scalar_select %p467, %s23, 1
      %s469 = smul.addr %s468, 48
      %s470 = smul.addr %s469, 4
      %s471 = scalar_lea.vmem %s0, %s470
      %p472 = pneg %p44
      %p473 = pneg %p41
      %p474 = scmp.lt.s32.totalorder %s23, 1
      %s475 = scalar_select %p474, %s23, 1
      %s476 = smul.addr %s475, 125
      %s477 = smul.addr %s476, 4
      %s478 = scalar_lea.vmem %s1, %s477
      %p479 = pneg %p70
      %p480 = pneg %p67
      %p481 = scmp.lt.s32.totalorder %s23, 1
      %s482 = scalar_select %p481, %s23, 1
      %s483 = scalar_lea.vmem %s2, %s482
      %p484 = pneg %p96
      %p485 = pneg %p93
      %p486 = scmp.lt.s32.totalorder %s23, 1
      %s487 = scalar_select %p486, %s23, 1
      %s488 = smul.addr %s487, 150
      %s489 = smul.addr %s488, 4
      %s490 = scalar_lea.vmem %s3, %s489
      %p491 = pneg %p122
      %p492 = pneg %p119
      %p493 = scmp.lt.s32.totalorder %s23, 1
      %s494 = scalar_select %p493, %s23, 1
      %s495 = smul.addr %s494, 2
      %s496 = scalar_lea.vmem %s4, %s495
      %p497 = pneg %p148
      %p498 = pneg %p145
      %p499 = scmp.lt.s32.totalorder %s23, 1
      %s500 = scalar_select %p499, %s23, 1
      %s501 = smul.addr %s500, 2
      %s502 = scalar_lea.vmem %s5, %s501
      %p503 = pneg %p174
      %p504 = pneg %p171
      %p505 = scmp.lt.s32.totalorder %s23, 1
      %s506 = scalar_select %p505, %s23, 1
      %s507 = smul.addr %s506, 2
      %s508 = scalar_lea.vmem %s6, %s507
      %p509 = pneg %p200
      %p510 = pneg %p197
      %p511 = scmp.lt.s32.totalorder %s23, 1
      %s512 = scalar_select %p511, %s23, 1
      %s513 = smul.addr %s512, 32
      %s514 = smul.addr %s513, 4
      %s515 = scalar_lea.vmem %s7, %s514
      %p516 = pneg %p226
      %p517 = pneg %p223
      %p518 = scmp.lt.s32.totalorder %s23, 1
      %s519 = scalar_select %p518, %s23, 1
      %s520 = scalar_lea.vmem %s8, %s519
      %p521 = pneg %p252
      %p522 = pneg %p249
      %p523 = scmp.lt.s32.totalorder %s23, 1
      %s524 = scalar_select %p523, %s23, 1
      %s525 = scalar_lea.vmem %s9, %s524
      %p526 = pneg %p278
      %p527 = pneg %p275
      %p528 = scmp.lt.s32.totalorder %s23, 1
      %s529 = scalar_select %p528, %s23, 1
      %s530 = scalar_lea.vmem %s10, %s529
      %p531 = pneg %p304
      %p532 = pneg %p301
      %p533 = scmp.lt.s32.totalorder %s23, 1
      %s534 = scalar_select %p533, %s23, 1
      %s535 = smul.addr %s534, 8
      %s536 = smul.addr %s535, 4
      %s537 = scalar_lea.vmem %s11, %s536
      %p538 = pneg %p330
      %p539 = pneg %p327
      %p540 = pneg %p356
      %p541 = pneg %p353
      %p542 = scmp.lt.s32.totalorder %s23, 1
      %s543 = scalar_select %p542, %s23, 1
      %s544 = smul.addr %s543, 4
      %s545 = scalar_lea.vmem %s12, %s544
      %p546 = scmp.lt.s32.totalorder %s23, 1
      %s547 = scalar_select %p546, %s23, 1
      %s548 = smul.addr %s547, 48
      %s549 = smul.addr %s548, 4
      %s550 = scalar_lea.vmem %s0, %s549
      %p551 = scmp.lt.s32.totalorder %s23, 1
      %s552 = scalar_select %p551, %s23, 1
      %s553 = smul.addr %s552, 125
      %s554 = smul.addr %s553, 4
      %s555 = scalar_lea.vmem %s1, %s554
      %p556 = scmp.lt.s32.totalorder %s23, 1
      %s557 = scalar_select %p556, %s23, 1
      %s558 = scalar_lea.vmem %s2, %s557
      %p559 = scmp.lt.s32.totalorder %s23, 1
      %s560 = scalar_select %p559, %s23, 1
      %s561 = smul.addr %s560, 150
      %s562 = smul.addr %s561, 4
      %s563 = scalar_lea.vmem %s3, %s562
      %p564 = scmp.lt.s32.totalorder %s23, 1
      %s565 = scalar_select %p564, %s23, 1
      %s566 = smul.addr %s565, 2
      %s567 = scalar_lea.vmem %s4, %s566
      %p568 = scmp.lt.s32.totalorder %s23, 1
      %s569 = scalar_select %p568, %s23, 1
      %s570 = smul.addr %s569, 2
      %s571 = scalar_lea.vmem %s5, %s570
      %p572 = scmp.lt.s32.totalorder %s23, 1
      %s573 = scalar_select %p572, %s23, 1
      %s574 = smul.addr %s573, 2
      %s575 = scalar_lea.vmem %s6, %s574
      %p576 = scmp.lt.s32.totalorder %s23, 1
      %s577 = scalar_select %p576, %s23, 1
      %s578 = smul.addr %s577, 32
      %s579 = smul.addr %s578, 4
      %s580 = scalar_lea.vmem %s7, %s579
      %p581 = scmp.lt.s32.totalorder %s23, 1
      %s582 = scalar_select %p581, %s23, 1
      %s583 = scalar_lea.vmem %s8, %s582
      %p584 = scmp.lt.s32.totalorder %s23, 1
      %s585 = scalar_select %p584, %s23, 1
      %s586 = scalar_lea.vmem %s9, %s585
      %p587 = scmp.lt.s32.totalorder %s23, 1
      %s588 = scalar_select %p587, %s23, 1
      %s589 = scalar_lea.vmem %s10, %s588
      %p590 = scmp.lt.s32.totalorder %s23, 1
      %s591 = scalar_select %p590, %s23, 1
      %s592 = smul.addr %s591, 8
      %s593 = smul.addr %s592, 4
      %s594 = scalar_lea.vmem %s11, %s593
      %p595 = scmp.lt.s32.totalorder %s23, 1
      %s596 = scalar_select %p595, %s23, 1
      %s597 = smul.addr %s596, 4
      %s598 = scalar_lea.vmem %s12, %s597
      %v600 = vld [vmem:[%s550] sm:$0xff]
      %v601 = vld [vmem:[%s550 + $0x8] sm:$0xff]
      %v602 = vld [vmem:[%s550 + $0x10] sm:$0xff]
      %v603 = vld [vmem:[%s550 + $0x18] sm:$0xff]
      %v604 = vld [vmem:[%s550 + $0x20] sm:$0xff]
      %v605 = vld [vmem:[%s550 + $0x28] sm:$0xff]
      %v606 = vld [vmem:[%s550 + $0x30] sm:$0xff]
      %v607 = vld [vmem:[%s550 + $0x38] sm:$0xff]
      %v608 = vld [vmem:[%s550 + $0x40] sm:$0xff]
      %v609 = vld [vmem:[%s550 + $0x48] sm:$0xff]
      %v610 = vld [vmem:[%s550 + $0x50] sm:$0xff]
      %v611 = vld [vmem:[%s550 + $0x58] sm:$0xff]
      %v612 = vld [vmem:[%s550 + $0x60] sm:$0xff]
      %v613 = vld [vmem:[%s550 + $0x68] sm:$0xff]
      %v614 = vld [vmem:[%s550 + $0x70] sm:$0xff]
      %v615 = vld [vmem:[%s550 + $0x78] sm:$0xff]
      %v616 = vld [vmem:[%s550 + $0x80] sm:$0xff]
      %v617 = vld [vmem:[%s550 + $0x88] sm:$0xff]
      %v618 = vld [vmem:[%s550 + $0x90] sm:$0xff]
      %v619 = vld [vmem:[%s550 + $0x98] sm:$0xff]
      %v620 = vld [vmem:[%s550 + $0xa0] sm:$0xff]
      %v621 = vld [vmem:[%s550 + $0xa8] sm:$0xff]
      %v622 = vld [vmem:[%s550 + $0xb0] sm:$0xff]
      %v623 = vld [vmem:[%s550 + $0xb8] sm:$0xff]
      %v624 = vld [vmem:[%s555] sm:$0xf]
      %v625 = vld [vmem:[%s555 + $0x4] sm:$0xf]
      %v626 = vld [vmem:[%s555 + $0x8] sm:$0xf]
      %v627 = vld [vmem:[%s555 + $0xc] sm:$0xf]
      %v628 = vld [vmem:[%s555 + $0x10] sm:$0xf]
      %v629 = vld [vmem:[%s555 + $0x14] sm:$0xf]
      %v630 = vld [vmem:[%s555 + $0x18] sm:$0xf]
      %v631 = vld [vmem:[%s555 + $0x1c] sm:$0xf]
      %v632 = vld [vmem:[%s555 + $0x20] sm:$0xf]
      %v633 = vld [vmem:[%s555 + $0x24] sm:$0xf]
      %v634 = vld [vmem:[%s555 + $0x28] sm:$0xf]
      %v635 = vld [vmem:[%s555 + $0x2c] sm:$0xf]
      %v636 = vld [vmem:[%s555 + $0x30] sm:$0xf]
      %v637 = vld [vmem:[%s555 + $0x34] sm:$0xf]
      %v638 = vld [vmem:[%s555 + $0x38] sm:$0xf]
      %v639 = vld [vmem:[%s555 + $0x3c] sm:$0xf]
      %v640 = vld [vmem:[%s555 + $0x40] sm:$0xf]
      %v641 = vld [vmem:[%s555 + $0x44] sm:$0xf]
      %v642 = vld [vmem:[%s555 + $0x48] sm:$0xf]
      %v643 = vld [vmem:[%s555 + $0x4c] sm:$0xf]
      %v644 = vld [vmem:[%s555 + $0x50] sm:$0xf]
      %v645 = vld [vmem:[%s555 + $0x54] sm:$0xf]
      %v646 = vld [vmem:[%s555 + $0x58] sm:$0xf]
      %v647 = vld [vmem:[%s555 + $0x5c] sm:$0xf]
      %v648 = vld [vmem:[%s555 + $0x60] sm:$0xf]
      %v649 = vld [vmem:[%s555 + $0x64] sm:$0xf]
      %v650 = vld [vmem:[%s555 + $0x68] sm:$0xf]
      %v651 = vld [vmem:[%s555 + $0x6c] sm:$0xf]
      %v652 = vld [vmem:[%s555 + $0x70] sm:$0xf]
      %v653 = vld [vmem:[%s555 + $0x74] sm:$0xf]
      %v654 = vld [vmem:[%s555 + $0x78] sm:$0xf]
      %v655 = vld [vmem:[%s555 + $0x7c] sm:$0xf]
      %v656 = vld [vmem:[%s555 + $0x80] sm:$0xf]
      %v657 = vld [vmem:[%s555 + $0x84] sm:$0xf]
      %v658 = vld [vmem:[%s555 + $0x88] sm:$0xf]
      %v659 = vld [vmem:[%s555 + $0x8c] sm:$0xf]
      %v660 = vld [vmem:[%s555 + $0x90] sm:$0xf]
      %v661 = vld [vmem:[%s555 + $0x94] sm:$0xf]
      %v662 = vld [vmem:[%s555 + $0x98] sm:$0xf]
      %v663 = vld [vmem:[%s555 + $0x9c] sm:$0xf]
      %v664 = vld [vmem:[%s555 + $0xa0] sm:$0xf]
      %v665 = vld [vmem:[%s555 + $0xa4] sm:$0xf]
      %v666 = vld [vmem:[%s555 + $0xa8] sm:$0xf]
      %v667 = vld [vmem:[%s555 + $0xac] sm:$0xf]
      %v668 = vld [vmem:[%s555 + $0xb0] sm:$0xf]
      %v669 = vld [vmem:[%s555 + $0xb4] sm:$0xf]
      %v670 = vld [vmem:[%s555 + $0xb8] sm:$0xf]
      %v671 = vld [vmem:[%s555 + $0xbc] sm:$0xf]
      %v672 = vld [vmem:[%s555 + $0xc0] sm:$0xf]
      %v673 = vld [vmem:[%s555 + $0xc4] sm:$0xf]
      %v674 = vld [vmem:[%s555 + $0xc8] sm:$0xf]
      %v675 = vld [vmem:[%s555 + $0xcc] sm:$0xf]
      %v676 = vld [vmem:[%s555 + $0xd0] sm:$0xf]
      %v677 = vld [vmem:[%s555 + $0xd4] sm:$0xf]
      %v678 = vld [vmem:[%s555 + $0xd8] sm:$0xf]
      %v679 = vld [vmem:[%s555 + $0xdc] sm:$0xf]
      %v680 = vld [vmem:[%s555 + $0xe0] sm:$0xf]
      %v681 = vld [vmem:[%s555 + $0xe4] sm:$0xf]
      %v682 = vld [vmem:[%s555 + $0xe8] sm:$0xf]
      %v683 = vld [vmem:[%s555 + $0xec] sm:$0xf]
      %v684 = vld [vmem:[%s555 + $0xf0] sm:$0xf]
      %v685 = vld [vmem:[%s555 + $0xf4] sm:$0xf]
      %v686 = vld [vmem:[%s555 + $0xf8] sm:$0xf]
      %v687 = vld [vmem:[%s555 + $0xfc] sm:$0xf]
      %v688 = vld [vmem:[%s555 + $0x100] sm:$0xf]
      %v689 = vld [vmem:[%s555 + $0x104] sm:$0xf]
      %v690 = vld [vmem:[%s555 + $0x108] sm:$0xf]
      %v691 = vld [vmem:[%s555 + $0x10c] sm:$0xf]
      %v692 = vld [vmem:[%s555 + $0x110] sm:$0xf]
      %v693 = vld [vmem:[%s555 + $0x114] sm:$0xf]
      %v694 = vld [vmem:[%s555 + $0x118] sm:$0xf]
      %v695 = vld [vmem:[%s555 + $0x11c] sm:$0xf]
      %v696 = vld [vmem:[%s555 + $0x120] sm:$0xf]
      %v697 = vld [vmem:[%s555 + $0x124] sm:$0xf]
      %v698 = vld [vmem:[%s555 + $0x128] sm:$0xf]
      %v699 = vld [vmem:[%s555 + $0x12c] sm:$0xf]
      %v700 = vld [vmem:[%s555 + $0x130] sm:$0xf]
      %v701 = vld [vmem:[%s555 + $0x134] sm:$0xf]
      %v702 = vld [vmem:[%s555 + $0x138] sm:$0xf]
      %v703 = vld [vmem:[%s555 + $0x13c] sm:$0xf]
      %v704 = vld [vmem:[%s555 + $0x140] sm:$0xf]
      %v705 = vld [vmem:[%s555 + $0x144] sm:$0xf]
      %v706 = vld [vmem:[%s555 + $0x148] sm:$0xf]
      %v707 = vld [vmem:[%s555 + $0x14c] sm:$0xf]
      %v708 = vld [vmem:[%s555 + $0x150] sm:$0xf]
      %v709 = vld [vmem:[%s555 + $0x154] sm:$0xf]
      %v710 = vld [vmem:[%s555 + $0x158] sm:$0xf]
      %v711 = vld [vmem:[%s555 + $0x15c] sm:$0xf]
      %v712 = vld [vmem:[%s555 + $0x160] sm:$0xf]
      %v713 = vld [vmem:[%s555 + $0x164] sm:$0xf]
      %v714 = vld [vmem:[%s555 + $0x168] sm:$0xf]
      %v715 = vld [vmem:[%s555 + $0x16c] sm:$0xf]
      %v716 = vld [vmem:[%s555 + $0x170] sm:$0xf]
      %v717 = vld [vmem:[%s555 + $0x174] sm:$0xf]
      %v718 = vld [vmem:[%s555 + $0x178] sm:$0xf]
      %v719 = vld [vmem:[%s555 + $0x17c] sm:$0xf]
      %v720 = vld [vmem:[%s555 + $0x180] sm:$0xf]
      %v721 = vld [vmem:[%s555 + $0x184] sm:$0xf]
      %v722 = vld [vmem:[%s555 + $0x188] sm:$0xf]
      %v723 = vld [vmem:[%s555 + $0x18c] sm:$0xf]
      %v724 = vld [vmem:[%s555 + $0x190] sm:$0xf]
      %v725 = vld [vmem:[%s555 + $0x194] sm:$0xf]
      %v726 = vld [vmem:[%s555 + $0x198] sm:$0xf]
      %v727 = vld [vmem:[%s555 + $0x19c] sm:$0xf]
      %v728 = vld [vmem:[%s555 + $0x1a0] sm:$0xf]
      %v729 = vld [vmem:[%s555 + $0x1a4] sm:$0xf]
      %v730 = vld [vmem:[%s555 + $0x1a8] sm:$0xf]
      %v731 = vld [vmem:[%s555 + $0x1ac] sm:$0xf]
      %v732 = vld [vmem:[%s555 + $0x1b0] sm:$0xf]
      %v733 = vld [vmem:[%s555 + $0x1b4] sm:$0xf]
      %v734 = vld [vmem:[%s555 + $0x1b8] sm:$0xf]
      %v735 = vld [vmem:[%s555 + $0x1bc] sm:$0xf]
      %v736 = vld [vmem:[%s555 + $0x1c0] sm:$0xf]
      %v737 = vld [vmem:[%s555 + $0x1c4] sm:$0xf]
      %v738 = vld [vmem:[%s555 + $0x1c8] sm:$0xf]
      %v739 = vld [vmem:[%s555 + $0x1cc] sm:$0xf]
      %v740 = vld [vmem:[%s555 + $0x1d0] sm:$0xf]
      %v741 = vld [vmem:[%s555 + $0x1d4] sm:$0xf]
      %v742 = vld [vmem:[%s555 + $0x1d8] sm:$0xf]
      %v743 = vld [vmem:[%s555 + $0x1dc] sm:$0xf]
      %v744 = vld [vmem:[%s555 + $0x1e0] sm:$0xf]
      %v745 = vld [vmem:[%s555 + $0x1e4] sm:$0xf]
      %v746 = vld [vmem:[%s555 + $0x1e8] sm:$0xf]
      %v747 = vld [vmem:[%s555 + $0x1ec] sm:$0xf]
      %v748 = vld [vmem:[%s555 + $0x1f0] sm:$0xf]
      %v773 = vunpack.c.l.b16 %v600
      %v774 = vunpack.c.h.b16 %v600
      %v775 = vunpack.c.l.b16 %v601
      %v776 = vunpack.c.h.b16 %v601
      %v777 = vunpack.c.l.b16 %v602
      %v778 = vunpack.c.h.b16 %v602
      %v779 = vunpack.c.l.b16 %v603
      %v780 = vunpack.c.h.b16 %v603
      %v781 = vunpack.c.l.b16 %v604
      %v782 = vunpack.c.h.b16 %v604
      %v783 = vunpack.c.l.b16 %v605
      %v784 = vunpack.c.h.b16 %v605
      %v785 = vunpack.c.l.b16 %v606
      %v786 = vunpack.c.h.b16 %v606
      %v787 = vunpack.c.l.b16 %v607
      %v788 = vunpack.c.h.b16 %v607
      %v789 = vunpack.c.l.b16 %v608
      %v790 = vunpack.c.h.b16 %v608
      %v791 = vunpack.c.l.b16 %v609
      %v792 = vunpack.c.h.b16 %v609
      %v793 = vunpack.c.l.b16 %v610
      %v794 = vunpack.c.h.b16 %v610
      %v795 = vunpack.c.l.b16 %v611
      %v796 = vunpack.c.h.b16 %v611
      %v797 = vunpack.c.l.b16 %v612
      %v798 = vunpack.c.h.b16 %v612
      %v799 = vunpack.c.l.b16 %v613
      %v800 = vunpack.c.h.b16 %v613
      %v801 = vunpack.c.l.b16 %v614
      %v802 = vunpack.c.h.b16 %v614
      %v803 = vunpack.c.l.b16 %v615
      %v804 = vunpack.c.h.b16 %v615
      %v805 = vunpack.c.l.b16 %v616
      %v806 = vunpack.c.h.b16 %v616
      %v807 = vunpack.c.l.b16 %v617
      %v808 = vunpack.c.h.b16 %v617
      %v809 = vunpack.c.l.b16 %v618
      %v810 = vunpack.c.h.b16 %v618
      %v811 = vunpack.c.l.b16 %v619
      %v812 = vunpack.c.h.b16 %v619
      %v813 = vunpack.c.l.b16 %v620
      %v814 = vunpack.c.h.b16 %v620
      %v815 = vunpack.c.l.b16 %v621
      %v816 = vunpack.c.h.b16 %v621
      %v817 = vunpack.c.l.b16 %v622
      %v818 = vunpack.c.h.b16 %v622
      %v819 = vunpack.c.l.b16 %v623
      %v820 = vunpack.c.h.b16 %v623
      %v821 = vpack.c.b16 %v781, %v773
      %v822 = vpack.c.b16 %v782, %v774
      %v823 = vpack.c.b16 %v783, %v775
      %v824 = vpack.c.b16 %v784, %v776
      %v825 = vpack.c.b16 %v785, %v777
      %v826 = vpack.c.b16 %v786, %v778
      %v827 = vpack.c.b16 %v787, %v779
      %v828 = vpack.c.b16 %v788, %v780
      %v829 = vpack.c.b16 %v797, %v789
      %v830 = vpack.c.b16 %v798, %v790
      %v831 = vpack.c.b16 %v799, %v791
      %v832 = vpack.c.b16 %v800, %v792
      %v833 = vpack.c.b16 %v801, %v793
      %v834 = vpack.c.b16 %v802, %v794
      %v835 = vpack.c.b16 %v803, %v795
      %v836 = vpack.c.b16 %v804, %v796
      %v837 = vpack.c.b16 %v813, %v805
      %v838 = vpack.c.b16 %v814, %v806
      %v839 = vpack.c.b16 %v815, %v807
      %v840 = vpack.c.b16 %v816, %v808
      %v841 = vpack.c.b16 %v817, %v809
      %v842 = vpack.c.b16 %v818, %v810
      %v843 = vpack.c.b16 %v819, %v811
      %v844 = vpack.c.b16 %v820, %v812
      %v991 = vunpack.c.l.b16 %v624
      %v992 = vunpack.c.l.b16 %v625
      %v993 = vunpack.c.l.b16 %v626
      %v994 = vunpack.c.l.b16 %v627
      %v995 = vunpack.c.l.b16 %v628
      %v996 = vunpack.c.l.b16 %v629
      %v997 = vunpack.c.l.b16 %v630
      %v998 = vunpack.c.l.b16 %v631
      %v999 = vunpack.c.l.b16 %v632
      %v1000 = vunpack.c.l.b16 %v633
      %v1001 = vunpack.c.l.b16 %v634
      %v1002 = vunpack.c.l.b16 %v635
      %v1003 = vunpack.c.l.b16 %v636
      %v1004 = vunpack.c.l.b16 %v637
      %v1005 = vunpack.c.l.b16 %v638
      %v1006 = vunpack.c.l.b16 %v639
      %v1007 = vunpack.c.l.b16 %v640
      %v1008 = vunpack.c.l.b16 %v641
      %v1009 = vunpack.c.l.b16 %v642
      %v1010 = vunpack.c.l.b16 %v643
      %v1011 = vunpack.c.l.b16 %v644
      %v1012 = vunpack.c.l.b16 %v645
      %v1013 = vunpack.c.l.b16 %v646
      %v1014 = vunpack.c.l.b16 %v647
      %v1015 = vunpack.c.l.b16 %v648
      %v1016 = vunpack.c.l.b16 %v649
      %v1017 = vunpack.c.l.b16 %v650
      %v1018 = vunpack.c.l.b16 %v651
      %v1019 = vunpack.c.l.b16 %v652
      %v1020 = vunpack.c.l.b16 %v653
      %v1021 = vunpack.c.l.b16 %v654
      %v1022 = vunpack.c.l.b16 %v655
      %v1023 = vunpack.c.l.b16 %v656
      %v1024 = vunpack.c.l.b16 %v657
      %v1025 = vunpack.c.l.b16 %v658
      %v1026 = vunpack.c.l.b16 %v659
      %v1027 = vunpack.c.l.b16 %v660
      %v1028 = vunpack.c.l.b16 %v661
      %v1029 = vunpack.c.l.b16 %v662
      %v1030 = vunpack.c.l.b16 %v663
      %v1031 = vunpack.c.l.b16 %v664
      %v1032 = vunpack.c.l.b16 %v665
      %v1033 = vunpack.c.l.b16 %v666
      %v1034 = vunpack.c.l.b16 %v667
      %v1035 = vunpack.c.l.b16 %v668
      %v1036 = vunpack.c.l.b16 %v669
      %v1037 = vunpack.c.l.b16 %v670
      %v1038 = vunpack.c.l.b16 %v671
      %v1039 = vunpack.c.l.b16 %v672
      %v1040 = vunpack.c.l.b16 %v673
      %v1041 = vunpack.c.l.b16 %v674
      %v1042 = vunpack.c.l.b16 %v675
      %v1043 = vunpack.c.l.b16 %v676
      %v1044 = vunpack.c.l.b16 %v677
      %v1045 = vunpack.c.l.b16 %v678
      %v1046 = vunpack.c.l.b16 %v679
      %v1047 = vunpack.c.l.b16 %v680
      %v1048 = vunpack.c.l.b16 %v681
      %v1049 = vunpack.c.l.b16 %v682
      %v1050 = vunpack.c.l.b16 %v683
      %v1051 = vunpack.c.l.b16 %v684
      %v1052 = vunpack.c.l.b16 %v685
      %v1053 = vunpack.c.l.b16 %v686
      %v1054 = vunpack.c.l.b16 %v687
      %v1055 = vunpack.c.l.b16 %v688
      %v1056 = vunpack.c.l.b16 %v689
      %v1057 = vunpack.c.l.b16 %v690
      %v1058 = vunpack.c.l.b16 %v691
      %v1059 = vunpack.c.l.b16 %v692
      %v1060 = vunpack.c.l.b16 %v693
      %v1061 = vunpack.c.l.b16 %v694
      %v1062 = vunpack.c.l.b16 %v695
      %v1063 = vunpack.c.l.b16 %v696
      %v1064 = vunpack.c.l.b16 %v697
      %v1065 = vunpack.c.l.b16 %v698
      %v1066 = vunpack.c.l.b16 %v699
      %v1067 = vunpack.c.l.b16 %v700
      %v1068 = vunpack.c.l.b16 %v701
      %v1069 = vunpack.c.l.b16 %v702
      %v1070 = vunpack.c.l.b16 %v703
      %v1071 = vunpack.c.l.b16 %v704
      %v1072 = vunpack.c.l.b16 %v705
      %v1073 = vunpack.c.l.b16 %v706
      %v1074 = vunpack.c.l.b16 %v707
      %v1075 = vunpack.c.l.b16 %v708
      %v1076 = vunpack.c.l.b16 %v709
      %v1077 = vunpack.c.l.b16 %v710
      %v1078 = vunpack.c.l.b16 %v711
      %v1079 = vunpack.c.l.b16 %v712
      %v1080 = vunpack.c.l.b16 %v713
      %v1081 = vunpack.c.l.b16 %v714
      %v1082 = vunpack.c.l.b16 %v715
      %v1083 = vunpack.c.l.b16 %v716
      %v1084 = vunpack.c.l.b16 %v717
      %v1085 = vunpack.c.l.b16 %v718
      %v1086 = vunpack.c.l.b16 %v719
      %v1087 = vunpack.c.l.b16 %v720
      %v1088 = vunpack.c.l.b16 %v721
      %v1089 = vunpack.c.l.b16 %v722
      %v1090 = vunpack.c.l.b16 %v723
      %v1091 = vunpack.c.l.b16 %v724
      %v1092 = vunpack.c.l.b16 %v725
      %v1093 = vunpack.c.l.b16 %v726
      %v1094 = vunpack.c.l.b16 %v727
      %v1095 = vunpack.c.l.b16 %v728
      %v1096 = vunpack.c.l.b16 %v729
      %v1097 = vunpack.c.l.b16 %v730
      %v1098 = vunpack.c.l.b16 %v731
      %v1099 = vunpack.c.l.b16 %v732
      %v1100 = vunpack.c.l.b16 %v733
      %v1101 = vunpack.c.l.b16 %v734
      %v1102 = vunpack.c.l.b16 %v735
      %v1103 = vunpack.c.l.b16 %v736
      %v1104 = vunpack.c.l.b16 %v737
      %v1105 = vunpack.c.l.b16 %v738
      %v1106 = vunpack.c.l.b16 %v739
      %v1107 = vunpack.c.l.b16 %v740
      %v1108 = vunpack.c.l.b16 %v741
      %v1109 = vunpack.c.l.b16 %v742
      %v1110 = vunpack.c.l.b16 %v743
      %v1111 = vunpack.c.l.b16 %v744
      %v1112 = vunpack.c.l.b16 %v745
      %v1113 = vunpack.c.l.b16 %v746
      %v1114 = vunpack.c.l.b16 %v747
      %v1115 = vunpack.c.l.b16 %v748
      %v1116 = vpack.c.b16 %v992, %v991
      %v1117 = vpack.c.b16 %v994, %v993
      %v1118 = vpack.c.b16 %v996, %v995
      %v1119 = vpack.c.b16 %v998, %v997
      %v1120 = vpack.c.b16 %v1000, %v999
      %v1121 = vpack.c.b16 %v1002, %v1001
      %v1122 = vpack.c.b16 %v1004, %v1003
      %v1123 = vpack.c.b16 %v1006, %v1005
      %v1124 = vpack.c.b16 %v1008, %v1007
      %v1125 = vpack.c.b16 %v1010, %v1009
      %v1126 = vpack.c.b16 %v1012, %v1011
      %v1127 = vpack.c.b16 %v1014, %v1013
      %v1128 = vpack.c.b16 %v1016, %v1015
      %v1129 = vpack.c.b16 %v1018, %v1017
      %v1130 = vpack.c.b16 %v1020, %v1019
      %v1131 = vpack.c.b16 %v1022, %v1021
      %v1132 = vpack.c.b16 %v1024, %v1023
      %v1133 = vpack.c.b16 %v1026, %v1025
      %v1134 = vpack.c.b16 %v1028, %v1027
      %v1135 = vpack.c.b16 %v1030, %v1029
      %v1136 = vpack.c.b16 %v1032, %v1031
      %v1137 = vpack.c.b16 %v1034, %v1033
      %v1138 = vpack.c.b16 %v1036, %v1035
      %v1139 = vpack.c.b16 %v1038, %v1037
      %v1140 = vpack.c.b16 %v1040, %v1039
      %v1141 = vpack.c.b16 %v1042, %v1041
      %v1142 = vpack.c.b16 %v1044, %v1043
      %v1143 = vpack.c.b16 %v1046, %v1045
      %v1144 = vpack.c.b16 %v1048, %v1047
      %v1145 = vpack.c.b16 %v1050, %v1049
      %v1146 = vpack.c.b16 %v1052, %v1051
      %v1147 = vpack.c.b16 %v1054, %v1053
      %v1148 = vpack.c.b16 %v1056, %v1055
      %v1149 = vpack.c.b16 %v1058, %v1057
      %v1150 = vpack.c.b16 %v1060, %v1059
      %v1151 = vpack.c.b16 %v1062, %v1061
      %v1152 = vpack.c.b16 %v1064, %v1063
      %v1153 = vpack.c.b16 %v1066, %v1065
      %v1154 = vpack.c.b16 %v1068, %v1067
      %v1155 = vpack.c.b16 %v1070, %v1069
      %v1156 = vpack.c.b16 %v1072, %v1071
      %v1157 = vpack.c.b16 %v1074, %v1073
      %v1158 = vpack.c.b16 %v1076, %v1075
      %v1159 = vpack.c.b16 %v1078, %v1077
      %v1160 = vpack.c.b16 %v1080, %v1079
      %v1161 = vpack.c.b16 %v1082, %v1081
      %v1162 = vpack.c.b16 %v1084, %v1083
      %v1163 = vpack.c.b16 %v1086, %v1085
      %v1164 = vpack.c.b16 %v1088, %v1087
      %v1165 = vpack.c.b16 %v1090, %v1089
      %v1166 = vpack.c.b16 %v1092, %v1091
      %v1167 = vpack.c.b16 %v1094, %v1093
      %v1168 = vpack.c.b16 %v1096, %v1095
      %v1169 = vpack.c.b16 %v1098, %v1097
      %v1170 = vpack.c.b16 %v1100, %v1099
      %v1171 = vpack.c.b16 %v1102, %v1101
      %v1172 = vpack.c.b16 %v1104, %v1103
      %v1173 = vpack.c.b16 %v1106, %v1105
      %v1174 = vpack.c.b16 %v1108, %v1107
      %v1175 = vpack.c.b16 %v1110, %v1109
      %v1176 = vpack.c.b16 %v1112, %v1111
      %v1177 = vpack.c.b16 %v1114, %v1113
      %v1178 = vpack.c.b16 %v1115, %v1115
      %vm1241 = vcmask 850944
      %v1243 = vsel %vm1241, %v828, 0
      %v1246 = vsel %vm1241, %v836, 0
      %v1249 = vsel %vm1241, %v844, 0
      %vm1251 = vcmask 1043456
      %v1253 = vsel %vm1251, %v1178, 0
      %1255 = vmatprep.subr.bf16.mxu0 0
      %1256 = vmatpush1.bf16.msra.mxu0 %v1116
      %1257 = vmatprep.subr.bf16.mxu0 0
      %1258 = vmatpush1.bf16.msra.mxu0 %v1117
      %1259 = vmatprep.subr.bf16.mxu0 0
      %1260 = vmatpush1.bf16.msra.mxu0 %v1118
      %1261 = vmatprep.subr.bf16.mxu0 0
      %1262 = vmatpush1.bf16.msra.mxu0 %v1119
      %1263 = vmatprep.subr.bf16.mxu0 0
      %1264 = vmatpush1.bf16.msra.mxu0 %v1120
      %1265 = vmatprep.subr.bf16.mxu0 0
      %1266 = vmatpush1.bf16.msra.mxu0 %v1121
      %1267 = vmatprep.subr.bf16.mxu0 0
      %1268 = vmatpush1.bf16.msra.mxu0 %v1122
      %1269 = vmatprep.subr.bf16.mxu0 0
      %1270 = vmatpush1.bf16.msra.mxu0 %v1123
      %1271 = vmatprep.subr.bf16.mxu0 0
      %1272 = vmatpush1.bf16.msra.mxu0 %v1124
      %1273 = vmatprep.subr.bf16.mxu0 0
      %1274 = vmatpush1.bf16.msra.mxu0 %v1125
      %1275 = vmatprep.subr.bf16.mxu0 0
      %1276 = vmatpush1.bf16.msra.mxu0 %v1126
      %1277 = vmatprep.subr.bf16.mxu0 0
      %1278 = vmatpush1.bf16.msra.mxu0 %v1127
      %1279 = vmatprep.subr.bf16.mxu0 0
      %1280 = vmatpush1.bf16.msra.mxu0 %v1128
      %1281 = vmatprep.subr.bf16.mxu0 0
      %1282 = vmatpush1.bf16.msra.mxu0 %v1129
      %1283 = vmatprep.subr.bf16.mxu0 0
      %1284 = vmatpush1.bf16.msra.mxu0 %v1130
      %1285 = vmatprep.subr.bf16.mxu0 0
      %1286 = vmatpush1.bf16.msra.mxu0 %v1131
      %1287 = vmatprep.mubr.bf16.mxu0 %v822
      %1288 = vmatmul.mubr.bf16.gmra.mrb[0].mxu0 %v821
      %v1289 = vpop.f32.mrb[0].mxu0
      %v1290 = vadd.f32 0.0, %v1289
      %v1291 = vpop.f32.mrb[0].mxu0
      %v1292 = vpop.f32.mrb[0].mxu0
      %v1293 = vadd.f32 0.0, %v1292
      %v1294 = vpop.f32.mrb[0].mxu0
      %1295 = vmatprep.mubr.bf16.mxu0 %v830
      %1296 = vmatmul.mubr.bf16.gmra.mrb[0].mxu0 %v829
      %v1297 = vpop.f32.mrb[0].mxu0
      %v1298 = vadd.f32 0.0, %v1297
      %v1299 = vpop.f32.mrb[0].mxu0
      %v1300 = vpop.f32.mrb[0].mxu0
      %v1301 = vadd.f32 0.0, %v1300
      %v1302 = vpop.f32.mrb[0].mxu0
      %1303 = vmatprep.mubr.bf16.mxu0 %v838
      %1304 = vmatmul.mubr.bf16.gmra.mrb[0].mxu0 %v837
      %v1305 = vpop.f32.mrb[0].mxu0
      %v1306 = vadd.f32 0.0, %v1305
      %v1307 = vpop.f32.mrb[0].mxu0
      %v1308 = vpop.f32.mrb[0].mxu0
      %v1309 = vadd.f32 0.0, %v1308
      %v1310 = vpop.f32.mrb[0].mxu0
      %1311 = vdwg.mxu0
      %1312 = vmatprep.subr.bf16.mxu0 0
      %1313 = vmatpush1.bf16.msra.mxu0 %v1132
      %1314 = vmatprep.subr.bf16.mxu0 0
      %1315 = vmatpush1.bf16.msra.mxu0 %v1133
      %1316 = vmatprep.subr.bf16.mxu0 0
      %1317 = vmatpush1.bf16.msra.mxu0 %v1134
      %1318 = vmatprep.subr.bf16.mxu0 0
      %1319 = vmatpush1.bf16.msra.mxu0 %v1135
      %1320 = vmatprep.subr.bf16.mxu0 0
      %1321 = vmatpush1.bf16.msra.mxu0 %v1136
      %1322 = vmatprep.subr.bf16.mxu0 0
      %1323 = vmatpush1.bf16.msra.mxu0 %v1137
      %1324 = vmatprep.subr.bf16.mxu0 0
      %1325 = vmatpush1.bf16.msra.mxu0 %v1138
      %1326 = vmatprep.subr.bf16.mxu0 0
      %1327 = vmatpush1.bf16.msra.mxu0 %v1139
      %1328 = vmatprep.subr.bf16.mxu0 0
      %1329 = vmatpush1.bf16.msra.mxu0 %v1140
      %1330 = vmatprep.subr.bf16.mxu0 0
      %1331 = vmatpush1.bf16.msra.mxu0 %v1141
      %1332 = vmatprep.subr.bf16.mxu0 0
      %1333 = vmatpush1.bf16.msra.mxu0 %v1142
      %1334 = vmatprep.subr.bf16.mxu0 0
      %1335 = vmatpush1.bf16.msra.mxu0 %v1143
      %1336 = vmatprep.subr.bf16.mxu0 0
      %1337 = vmatpush1.bf16.msra.mxu0 %v1144
      %1338 = vmatprep.subr.bf16.mxu0 0
      %1339 = vmatpush1.bf16.msra.mxu0 %v1145
      %1340 = vmatprep.subr.bf16.mxu0 0
      %1341 = vmatpush1.bf16.msra.mxu0 %v1146
      %1342 = vmatprep.subr.bf16.mxu0 0
      %1343 = vmatpush1.bf16.msra.mxu0 %v1147
      %1344 = vmatprep.mubr.bf16.mxu0 %v824
      %1345 = vmatmul.mubr.bf16.gmra.mrb[0].mxu0 %v823
      %v1346 = vpop.f32.mrb[0].mxu0
      %v1347 = vadd.f32 %v1290, %v1346
      %v1348 = vpop.f32.mrb[0].mxu0
      %v1349 = vpop.f32.mrb[0].mxu0
      %v1350 = vadd.f32 %v1293, %v1349
      %v1351 = vpop.f32.mrb[0].mxu0
      %1352 = vmatprep.mubr.bf16.mxu0 %v832
      %1353 = vmatmul.mubr.bf16.gmra.mrb[0].mxu0 %v831
      %v1354 = vpop.f32.mrb[0].mxu0
      %v1355 = vadd.f32 %v1298, %v1354
      %v1356 = vpop.f32.mrb[0].mxu0
      %v1357 = vpop.f32.mrb[0].mxu0
      %v1358 = vadd.f32 %v1301, %v1357
      %v1359 = vpop.f32.mrb[0].mxu0
      %1360 = vmatprep.mubr.bf16.mxu0 %v840
      %1361 = vmatmul.mubr.bf16.gmra.mrb[0].mxu0 %v839
      %v1362 = vpop.f32.mrb[0].mxu0
      %v1363 = vadd.f32 %v1306, %v1362
      %v1364 = vpop.f32.mrb[0].mxu0
      %v1365 = vpop.f32.mrb[0].mxu0
      %v1366 = vadd.f32 %v1309, %v1365
      %v1367 = vpop.f32.mrb[0].mxu0
      %1368 = vdwg.mxu0
      %1369 = vmatprep.subr.bf16.mxu0 0
      %1370 = vmatpush1.bf16.msra.mxu0 %v1148
      %1371 = vmatprep.subr.bf16.mxu0 0
      %1372 = vmatpush1.bf16.msra.mxu0 %v1149
      %1373 = vmatprep.subr.bf16.mxu0 0
      %1374 = vmatpush1.bf16.msra.mxu0 %v1150
      %1375 = vmatprep.subr.bf16.mxu0 0
      %1376 = vmatpush1.bf16.msra.mxu0 %v1151
      %1377 = vmatprep.subr.bf16.mxu0 0
      %1378 = vmatpush1.bf16.msra.mxu0 %v1152
      %1379 = vmatprep.subr.bf16.mxu0 0
      %1380 = vmatpush1.bf16.msra.mxu0 %v1153
      %1381 = vmatprep.subr.bf16.mxu0 0
      %1382 = vmatpush1.bf16.msra.mxu0 %v1154
      %1383 = vmatprep.subr.bf16.mxu0 0
      %1384 = vmatpush1.bf16.msra.mxu0 %v1155
      %1385 = vmatprep.subr.bf16.mxu0 0
      %1386 = vmatpush1.bf16.msra.mxu0 %v1156
      %1387 = vmatprep.subr.bf16.mxu0 0
      %1388 = vmatpush1.bf16.msra.mxu0 %v1157
      %1389 = vmatprep.subr.bf16.mxu0 0
      %1390 = vmatpush1.bf16.msra.mxu0 %v1158
      %1391 = vmatprep.subr.bf16.mxu0 0
      %1392 = vmatpush1.bf16.msra.mxu0 %v1159
      %1393 = vmatprep.subr.bf16.mxu0 0
      %1394 = vmatpush1.bf16.msra.mxu0 %v1160
      %1395 = vmatprep.subr.bf16.mxu0 0
      %1396 = vmatpush1.bf16.msra.mxu0 %v1161
      %1397 = vmatprep.subr.bf16.mxu0 0
      %1398 = vmatpush1.bf16.msra.mxu0 %v1162
      %1399 = vmatprep.subr.bf16.mxu0 0
      %1400 = vmatpush1.bf16.msra.mxu0 %v1163
      %1401 = vmatprep.mubr.bf16.mxu0 %v826
      %1402 = vmatmul.mubr.bf16.gmra.mrb[0].mxu0 %v825
      %v1403 = vpop.f32.mrb[0].mxu0
      %v1404 = vadd.f32 %v1347, %v1403
      %v1405 = vpop.f32.mrb[0].mxu0
      %v1406 = vpop.f32.mrb[0].mxu0
      %v1407 = vadd.f32 %v1350, %v1406
      %v1408 = vpop.f32.mrb[0].mxu0
      %1409 = vmatprep.mubr.bf16.mxu0 %v834
      %1410 = vmatmul.mubr.bf16.gmra.mrb[0].mxu0 %v833
      %v1411 = vpop.f32.mrb[0].mxu0
      %v1412 = vadd.f32 %v1355, %v1411
      %v1413 = vpop.f32.mrb[0].mxu0
      %v1414 = vpop.f32.mrb[0].mxu0
      %v1415 = vadd.f32 %v1358, %v1414
      %v1416 = vpop.f32.mrb[0].mxu0
      %1417 = vmatprep.mubr.bf16.mxu0 %v842
      %1418 = vmatmul.mubr.bf16.gmra.mrb[0].mxu0 %v841
      %v1419 = vpop.f32.mrb[0].mxu0
      %v1420 = vadd.f32 %v1363, %v1419
      %v1421 = vpop.f32.mrb[0].mxu0
      %v1422 = vpop.f32.mrb[0].mxu0
      %v1423 = vadd.f32 %v1366, %v1422
      %v1424 = vpop.f32.mrb[0].mxu0
      %1425 = vdwg.mxu0
      %1426 = vmatprep.subr.bf16.mxu0 0
      %1427 = vmatpush1.bf16.msra.mxu0 %v1164
      %1428 = vmatprep.subr.bf16.mxu0 0
      %1429 = vmatpush1.bf16.msra.mxu0 %v1165
      %1430 = vmatprep.subr.bf16.mxu0 0
      %1431 = vmatpush1.bf16.msra.mxu0 %v1166
      %1432 = vmatprep.subr.bf16.mxu0 0
      %1433 = vmatpush1.bf16.msra.mxu0 %v1167
      %1434 = vmatprep.subr.bf16.mxu0 0
      %1435 = vmatpush1.bf16.msra.mxu0 %v1168
      %1436 = vmatprep.subr.bf16.mxu0 0
      %1437 = vmatpush1.bf16.msra.mxu0 %v1169
      %1438 = vmatprep.subr.bf16.mxu0 0
      %1439 = vmatpush1.bf16.msra.mxu0 %v1170
      %1440 = vmatprep.subr.bf16.mxu0 0
      %1441 = vmatpush1.bf16.msra.mxu0 %v1171
      %1442 = vmatprep.subr.bf16.mxu0 0
      %1443 = vmatpush1.bf16.msra.mxu0 %v1172
      %1444 = vmatprep.subr.bf16.mxu0 0
      %1445 = vmatpush1.bf16.msra.mxu0 %v1173
      %1446 = vmatprep.subr.bf16.mxu0 0
      %1447 = vmatpush1.bf16.msra.mxu0 %v1174
      %1448 = vmatprep.subr.bf16.mxu0 0
      %1449 = vmatpush1.bf16.msra.mxu0 %v1175
      %1450 = vmatprep.subr.bf16.mxu0 0
      %1451 = vmatpush1.bf16.msra.mxu0 %v1176
      %1452 = vmatprep.subr.bf16.mxu0 0
      %1453 = vmatpush1.bf16.msra.mxu0 %v1177
      %1454 = vmatprep.subr.bf16.mxu0 0
      %1455 = vmatpush1.bf16.msra.mxu0 %v1253
      %1456 = vmatprep.subr.bf16.mxu0 0
      %1457 = vmatpush1.bf16.msra.mxu0 0
      %1458 = vmatprep.mubr.bf16.mxu0 %v1243
      %1459 = vmatmul.mubr.bf16.gmra.mrb[0].mxu0 %v827
      %v1460 = vpop.f32.mrb[0].mxu0
      %v1461 = vadd.f32 %v1404, %v1460
      %v1462 = vpop.f32.mrb[0].mxu0
      %v1463 = vpop.f32.mrb[0].mxu0
      %v1464 = vadd.f32 %v1407, %v1463
      %v1465 = vpop.f32.mrb[0].mxu0
      %1466 = vmatprep.mubr.bf16.mxu0 %v1246
      %1467 = vmatmul.mubr.bf16.gmra.mrb[0].mxu0 %v835
      %v1468 = vpop.f32.mrb[0].mxu0
      %v1469 = vadd.f32 %v1412, %v1468
      %v1470 = vpop.f32.mrb[0].mxu0
      %v1471 = vpop.f32.mrb[0].mxu0
      %v1472 = vadd.f32 %v1415, %v1471
      %v1473 = vpop.f32.mrb[0].mxu0
      %1474 = vmatprep.mubr.bf16.mxu0 %v1249
      %1475 = vmatmul.mubr.bf16.gmra.mrb[0].mxu0 %v843
      %v1476 = vpop.f32.mrb[0].mxu0
      %v1477 = vadd.f32 %v1420, %v1476
      %v1478 = vpop.f32.mrb[0].mxu0
      %v1479 = vpop.f32.mrb[0].mxu0
      %v1480 = vadd.f32 %v1423, %v1479
      %v1481 = vpop.f32.mrb[0].mxu0
      %1482 = vdwg.mxu0
      %v1483 = vmax.f32 %v1461, %v1472
      %v1484 = vmax.f32 %v1464, %v1477
      %v1485 = vmax.f32 %v1469, %v1480
      %v1486 = vld [vmem:[%s558] sm:$0x1]
      %v1488 = vlaneseq
      %v1489 = vshrl.u32 %v1488, 7
      %v1490 = vsub.s32 0, %v1489
      %v1491 = vrot.slane %v1486, %v1490
      %v1493 = vadd.f32 %v1483, %v1491
      %v1494 = vadd.f32 %v1484, %v1491
      %v1495 = vadd.f32 %v1485, %v1491
      %v1496 = vmax.f32 %v1493, 0.0
      %v1497 = vmax.f32 %v1494, 0.0
      %v1498 = vmax.f32 %v1495, 0.0
      %v1499 = vpack.c.bf16 %v1497, %v1496
      %v1500 = vpack.c.bf16 %v1498, %v1498
      %v1501 = vld [vmem:[%s563] sm:$0xff]
      %v1502 = vld [vmem:[%s563 + $0x8] sm:$0xff]
      %v1503 = vld [vmem:[%s563 + $0x10] sm:$0xff]
      %v1504 = vld [vmem:[%s563 + $0x18] sm:$0xff]
      %v1505 = vld [vmem:[%s563 + $0x20] sm:$0xff]
      %v1506 = vld [vmem:[%s563 + $0x28] sm:$0xff]
      %v1507 = vld [vmem:[%s563 + $0x30] sm:$0xff]
      %v1508 = vld [vmem:[%s563 + $0x38] sm:$0xff]
      %v1509 = vld [vmem:[%s563 + $0x40] sm:$0xff]
      %v1510 = vld [vmem:[%s563 + $0x48] sm:$0xff]
      %v1511 = vld [vmem:[%s563 + $0x50] sm:$0xff]
      %v1512 = vld [vmem:[%s563 + $0x58] sm:$0xff]
      %v1513 = vld [vmem:[%s563 + $0x60] sm:$0x33]
      %v1514 = vld [vmem:[%s563 + $0x60] sm:$0xcc]
      %v1515 = vld [vmem:[%s563 + $0x68] sm:$0xff]
      %v1516 = vld [vmem:[%s563 + $0x70] sm:$0xff]
      %v1517 = vld [vmem:[%s563 + $0x78] sm:$0xff]
      %v1518 = vld [vmem:[%s563 + $0x80] sm:$0xff]
      %v1519 = vld [vmem:[%s563 + $0x88] sm:$0xff]
      %v1520 = vld [vmem:[%s563 + $0x90] sm:$0xff]
      %v1521 = vld [vmem:[%s563 + $0x98] sm:$0xff]
      %v1522 = vld [vmem:[%s563 + $0xa0] sm:$0xff]
      %v1523 = vld [vmem:[%s563 + $0xa8] sm:$0xff]
      %v1524 = vld [vmem:[%s563 + $0xb0] sm:$0xff]
      %v1525 = vld [vmem:[%s563 + $0xb8] sm:$0xff]
      %v1526 = vld [vmem:[%s563 + $0xc0] sm:$0xff]
      %v1528 = vrot.slane %v1499, 2
      %v1542 = vunpack.c.l.b16 %v1514
      %v1543 = vunpack.c.h.b16 %v1514
      %v1544 = vunpack.c.l.b16 %v1515
      %v1545 = vunpack.c.h.b16 %v1515
      %v1546 = vunpack.c.l.b16 %v1516
      %v1547 = vunpack.c.h.b16 %v1516
      %v1548 = vunpack.c.l.b16 %v1517
      %v1549 = vunpack.c.h.b16 %v1517
      %v1550 = vunpack.c.l.b16 %v1518
      %v1551 = vunpack.c.h.b16 %v1518
      %v1552 = vunpack.c.l.b16 %v1519
      %v1553 = vunpack.c.h.b16 %v1519
      %v1554 = vunpack.c.l.b16 %v1520
      %v1555 = vunpack.c.h.b16 %v1520
      %v1556 = vunpack.c.l.b16 %v1521
      %v1557 = vunpack.c.h.b16 %v1521
      %v1558 = vunpack.c.l.b16 %v1522
      %v1559 = vunpack.c.h.b16 %v1522
      %v1560 = vunpack.c.l.b16 %v1523
      %v1561 = vunpack.c.h.b16 %v1523
      %v1562 = vunpack.c.l.b16 %v1524
      %v1563 = vunpack.c.h.b16 %v1524
      %v1564 = vunpack.c.l.b16 %v1525
      %v1565 = vunpack.c.h.b16 %v1525
      %v1566 = vunpack.c.l.b16 %v1526
      %v1567 = vunpack.c.h.b16 %v1526
      %v1568 = vpack.c.b16 %v1544, %v1542
      %v1569 = vpack.c.b16 %v1545, %v1543
      %v1570 = vpack.c.b16 %v1548, %v1546
      %v1571 = vpack.c.b16 %v1549, %v1547
      %v1572 = vpack.c.b16 %v1552, %v1550
      %v1573 = vpack.c.b16 %v1553, %v1551
      %v1574 = vpack.c.b16 %v1556, %v1554
      %v1575 = vpack.c.b16 %v1557, %v1555
      %v1576 = vpack.c.b16 %v1560, %v1558
      %v1577 = vpack.c.b16 %v1561, %v1559
      %v1578 = vpack.c.b16 %v1564, %v1562
      %v1579 = vpack.c.b16 %v1565, %v1563
      %v1580 = vpack.c.b16 %v1566, %v1566
      %v1581 = vpack.c.b16 %v1567, %v1567
      %vm1582 = vcmask 1045504
      %v1583 = vrot.slane %v1568, 2
      %v1584 = vrot.slane %v1570, 2
      %v1585 = vsel %vm1582, %v1583, %v1584
      %v1586 = vrot.slane %v1569, 2
      %v1587 = vrot.slane %v1571, 2
      %v1588 = vsel %vm1582, %v1586, %v1587
      %v1589 = vrot.slane %v1572, 2
      %v1590 = vsel %vm1582, %v1584, %v1589
      %v1591 = vrot.slane %v1573, 2
      %v1592 = vsel %vm1582, %v1587, %v1591
      %v1593 = vrot.slane %v1574, 2
      %v1594 = vsel %vm1582, %v1589, %v1593
      %v1595 = vrot.slane %v1575, 2
      %v1596 = vsel %vm1582, %v1591, %v1595
      %v1597 = vrot.slane %v1576, 2
      %v1598 = vsel %vm1582, %v1593, %v1597
      %v1599 = vrot.slane %v1577, 2
      %v1600 = vsel %vm1582, %v1595, %v1599
      %v1601 = vrot.slane %v1578, 2
      %v1602 = vsel %vm1582, %v1597, %v1601
      %v1603 = vrot.slane %v1579, 2
      %v1604 = vsel %vm1582, %v1599, %v1603
      %v1605 = vrot.slane %v1580, 2
      %v1606 = vsel %vm1582, %v1601, %v1605
      %v1607 = vrot.slane %v1581, 2
      %v1608 = vsel %vm1582, %v1603, %v1607
      %vm1621 = vcmask 818176
      %v1623 = vsel %vm1621, %v1528, 0
      %vm1625 = vcmask 1041408
      %v1627 = vsel %vm1625, %v1605, 0
      %v1630 = vsel %vm1625, %v1607, 0
      %1632 = vmatprep.subr.bf16.mxu0 %v1588
      %1633 = vmatpush1.bf16.msra.mxu0 %v1585
      %1634 = vmatprep.subr.bf16.mxu0 %v1592
      %1635 = vmatpush1.bf16.msra.mxu0 %v1590
      %1636 = vmatprep.subr.bf16.mxu0 %v1596
      %1637 = vmatpush1.bf16.msra.mxu0 %v1594
      %1638 = vmatprep.subr.bf16.mxu0 %v1600
      %1639 = vmatpush1.bf16.msra.mxu0 %v1598
      %1640 = vmatprep.subr.bf16.mxu0 %v1604
      %1641 = vmatpush1.bf16.msra.mxu0 %v1602
      %1642 = vmatprep.subr.bf16.mxu0 %v1608
      %1643 = vmatpush1.bf16.msra.mxu0 %v1606
      %1644 = vmatprep.subr.bf16.mxu0 %v1630
      %1645 = vmatpush1.bf16.msra.mxu0 %v1627
      %1646 = vmatprep.subr.bf16.mxu0 0
      %1647 = vmatpush1.bf16.msra.mxu0 0
      %1648 = vmatprep.subr.bf16.mxu0 0
      %1649 = vmatpush1.bf16.msra.mxu0 0
      %1650 = vmatprep.subr.bf16.mxu0 0
      %1651 = vmatpush1.bf16.msra.mxu0 0
      %1652 = vmatprep.subr.bf16.mxu0 0
      %1653 = vmatpush1.bf16.msra.mxu0 0
      %1654 = vmatprep.subr.bf16.mxu0 0
      %1655 = vmatpush1.bf16.msra.mxu0 0
      %1656 = vmatprep.subr.bf16.mxu0 0
      %1657 = vmatpush1.bf16.msra.mxu0 0
      %1658 = vmatprep.subr.bf16.mxu0 0
      %1659 = vmatpush1.bf16.msra.mxu0 0
      %1660 = vmatprep.subr.bf16.mxu0 0
      %1661 = vmatpush1.bf16.msra.mxu0 0
      %1662 = vmatprep.subr.bf16.mxu0 0
      %1663 = vmatpush1.bf16.msra.mxu0 0
      %1664 = vmatprep.mubr.bf16.mxu0 0
      %1665 = vmatmul.mubr.bf16.gmra.mrb[0].mxu0 %v1623
      %v1666 = vpop.f32.mrb[0].mxu0
      %v1667 = vadd.f32 0.0, %v1666
      %v1668 = vpop.f32.mrb[0].mxu0
      %v1669 = vadd.f32 0.0, %v1668
      %v1670 = vpop.f32.mrb[0].mxu0
      %v1671 = vpop.f32.mrb[0].mxu0
      %1672 = vdwg.mxu0
      %v1686 = vunpack.c.l.b16 %v1501
      %v1687 = vunpack.c.h.b16 %v1501
      %v1688 = vunpack.c.l.b16 %v1502
      %v1689 = vunpack.c.h.b16 %v1502
      %v1690 = vunpack.c.l.b16 %v1503
      %v1691 = vunpack.c.h.b16 %v1503
      %v1692 = vunpack.c.l.b16 %v1504
      %v1693 = vunpack.c.h.b16 %v1504
      %v1694 = vunpack.c.l.b16 %v1505
      %v1695 = vunpack.c.h.b16 %v1505
      %v1696 = vunpack.c.l.b16 %v1506
      %v1697 = vunpack.c.h.b16 %v1506
      %v1698 = vunpack.c.l.b16 %v1507
      %v1699 = vunpack.c.h.b16 %v1507
      %v1700 = vunpack.c.l.b16 %v1508
      %v1701 = vunpack.c.h.b16 %v1508
      %v1702 = vunpack.c.l.b16 %v1509
      %v1703 = vunpack.c.h.b16 %v1509
      %v1704 = vunpack.c.l.b16 %v1510
      %v1705 = vunpack.c.h.b16 %v1510
      %v1706 = vunpack.c.l.b16 %v1511
      %v1707 = vunpack.c.h.b16 %v1511
      %v1708 = vunpack.c.l.b16 %v1512
      %v1709 = vunpack.c.h.b16 %v1512
      %v1710 = vunpack.c.l.b16 %v1513
      %v1711 = vunpack.c.h.b16 %v1513
      %v1712 = vpack.c.b16 %v1688, %v1686
      %v1713 = vpack.c.b16 %v1689, %v1687
      %v1714 = vpack.c.b16 %v1692, %v1690
      %v1715 = vpack.c.b16 %v1693, %v1691
      %v1716 = vpack.c.b16 %v1696, %v1694
      %v1717 = vpack.c.b16 %v1697, %v1695
      %v1718 = vpack.c.b16 %v1700, %v1698
      %v1719 = vpack.c.b16 %v1701, %v1699
      %v1720 = vpack.c.b16 %v1704, %v1702
      %v1721 = vpack.c.b16 %v1705, %v1703
      %v1722 = vpack.c.b16 %v1708, %v1706
      %v1723 = vpack.c.b16 %v1709, %v1707
      %v1724 = vpack.c.b16 %v1710, %v1710
      %v1725 = vpack.c.b16 %v1711, %v1711
      %v1739 = vsel %vm1621, %v1499, 0
      %v1742 = vsel %vm1625, %v1724, 0
      %v1745 = vsel %vm1625, %v1725, 0
      %1747 = vmatprep.subr.bf16.mxu0 %v1713
      %1748 = vmatpush1.bf16.msra.mxu0 %v1712
      %1749 = vmatprep.subr.bf16.mxu0 %v1715
      %1750 = vmatpush1.bf16.msra.mxu0 %v1714
      %1751 = vmatprep.subr.bf16.mxu0 %v1717
      %1752 = vmatpush1.bf16.msra.mxu0 %v1716
      %1753 = vmatprep.subr.bf16.mxu0 %v1719
      %1754 = vmatpush1.bf16.msra.mxu0 %v1718
      %1755 = vmatprep.subr.bf16.mxu0 %v1721
      %1756 = vmatpush1.bf16.msra.mxu0 %v1720
      %1757 = vmatprep.subr.bf16.mxu0 %v1723
      %1758 = vmatpush1.bf16.msra.mxu0 %v1722
      %1759 = vmatprep.subr.bf16.mxu0 %v1745
      %1760 = vmatpush1.bf16.msra.mxu0 %v1742
      %1761 = vmatprep.subr.bf16.mxu0 0
      %1762 = vmatpush1.bf16.msra.mxu0 0
      %1763 = vmatprep.subr.bf16.mxu0 0
      %1764 = vmatpush1.bf16.msra.mxu0 0
      %1765 = vmatprep.subr.bf16.mxu0 0
      %1766 = vmatpush1.bf16.msra.mxu0 0
      %1767 = vmatprep.subr.bf16.mxu0 0
      %1768 = vmatpush1.bf16.msra.mxu0 0
      %1769 = vmatprep.subr.bf16.mxu0 0
      %1770 = vmatpush1.bf16.msra.mxu0 0
      %1771 = vmatprep.subr.bf16.mxu0 0
      %1772 = vmatpush1.bf16.msra.mxu0 0
      %1773 = vmatprep.subr.bf16.mxu0 0
      %1774 = vmatpush1.bf16.msra.mxu0 0
      %1775 = vmatprep.subr.bf16.mxu0 0
      %1776 = vmatpush1.bf16.msra.mxu0 0
      %1777 = vmatprep.subr.bf16.mxu0 0
      %1778 = vmatpush1.bf16.msra.mxu0 0
      %1779 = vmatprep.mubr.bf16.mxu0 0
      %1780 = vmatmul.mubr.bf16.gmra.mrb[0].mxu0 %v1739
      %v1781 = vpop.f32.mrb[0].mxu0
      %v1782 = vadd.f32 %v1667, %v1781
      %v1783 = vpop.f32.mrb[0].mxu0
      %v1784 = vadd.f32 %v1669, %v1783
      %v1785 = vpop.f32.mrb[0].mxu0
      %v1786 = vpop.f32.mrb[0].mxu0
      %1787 = vdwg.mxu0
      %v1788 = vld [vmem:[%s563 + $0xc8] sm:$0xff]
      %v1789 = vld [vmem:[%s563 + $0xd0] sm:$0xff]
      %v1790 = vld [vmem:[%s563 + $0xd8] sm:$0xff]
      %v1791 = vld [vmem:[%s563 + $0xe0] sm:$0xff]
      %v1792 = vld [vmem:[%s563 + $0xe8] sm:$0xff]
      %v1793 = vld [vmem:[%s563 + $0xf0] sm:$0xff]
      %v1794 = vld [vmem:[%s563 + $0xf8] sm:$0xff]
      %v1795 = vld [vmem:[%s563 + $0x100] sm:$0xff]
      %v1796 = vld [vmem:[%s563 + $0x108] sm:$0xff]
      %v1797 = vld [vmem:[%s563 + $0x110] sm:$0xff]
      %v1798 = vld [vmem:[%s563 + $0x118] sm:$0xff]
      %v1799 = vld [vmem:[%s563 + $0x120] sm:$0xff]
      %v1800 = vld [vmem:[%s563 + $0x128] sm:$0x33]
      %v1801 = vrot.slane %v1499, 4
      %v1815 = vunpack.c.l.b16 %v1788
      %v1816 = vunpack.c.h.b16 %v1788
      %v1817 = vunpack.c.l.b16 %v1789
      %v1818 = vunpack.c.h.b16 %v1789
      %v1819 = vunpack.c.l.b16 %v1790
      %v1820 = vunpack.c.h.b16 %v1790
      %v1821 = vunpack.c.l.b16 %v1791
      %v1822 = vunpack.c.h.b16 %v1791
      %v1823 = vunpack.c.l.b16 %v1792
      %v1824 = vunpack.c.h.b16 %v1792
      %v1825 = vunpack.c.l.b16 %v1793
      %v1826 = vunpack.c.h.b16 %v1793
      %v1827 = vunpack.c.l.b16 %v1794
      %v1828 = vunpack.c.h.b16 %v1794
      %v1829 = vunpack.c.l.b16 %v1795
      %v1830 = vunpack.c.h.b16 %v1795
      %v1831 = vunpack.c.l.b16 %v1796
      %v1832 = vunpack.c.h.b16 %v1796
      %v1833 = vunpack.c.l.b16 %v1797
      %v1834 = vunpack.c.h.b16 %v1797
      %v1835 = vunpack.c.l.b16 %v1798
      %v1836 = vunpack.c.h.b16 %v1798
      %v1837 = vunpack.c.l.b16 %v1799
      %v1838 = vunpack.c.h.b16 %v1799
      %v1839 = vunpack.c.l.b16 %v1800
      %v1840 = vunpack.c.h.b16 %v1800
      %v1841 = vpack.c.b16 %v1817, %v1815
      %v1842 = vpack.c.b16 %v1818, %v1816
      %v1843 = vpack.c.b16 %v1821, %v1819
      %v1844 = vpack.c.b16 %v1822, %v1820
      %v1845 = vpack.c.b16 %v1825, %v1823
      %v1846 = vpack.c.b16 %v1826, %v1824
      %v1847 = vpack.c.b16 %v1829, %v1827
      %v1848 = vpack.c.b16 %v1830, %v1828
      %v1849 = vpack.c.b16 %v1833, %v1831
      %v1850 = vpack.c.b16 %v1834, %v1832
      %v1851 = vpack.c.b16 %v1837, %v1835
      %v1852 = vpack.c.b16 %v1838, %v1836
      %v1853 = vpack.c.b16 %v1839, %v1839
      %v1854 = vpack.c.b16 %v1840, %v1840
      %v1868 = vsel %vm1621, %v1801, 0
      %v1871 = vsel %vm1625, %v1853, 0
      %v1874 = vsel %vm1625, %v1854, 0
      %1876 = vmatprep.subr.bf16.mxu0 %v1842
      %1877 = vmatpush1.bf16.msra.mxu0 %v1841
      %1878 = vmatprep.subr.bf16.mxu0 %v1844
      %1879 = vmatpush1.bf16.msra.mxu0 %v1843
      %1880 = vmatprep.subr.bf16.mxu0 %v1846
      %1881 = vmatpush1.bf16.msra.mxu0 %v1845
      %1882 = vmatprep.subr.bf16.mxu0 %v1848
      %1883 = vmatpush1.bf16.msra.mxu0 %v1847
      %1884 = vmatprep.subr.bf16.mxu0 %v1850
      %1885 = vmatpush1.bf16.msra.mxu0 %v1849
      %1886 = vmatprep.subr.bf16.mxu0 %v1852
      %1887 = vmatpush1.bf16.msra.mxu0 %v1851
      %1888 = vmatprep.subr.bf16.mxu0 %v1874
      %1889 = vmatpush1.bf16.msra.mxu0 %v1871
      %1890 = vmatprep.subr.bf16.mxu0 0
      %1891 = vmatpush1.bf16.msra.mxu0 0
      %1892 = vmatprep.subr.bf16.mxu0 0
      %1893 = vmatpush1.bf16.msra.mxu0 0
      %1894 = vmatprep.subr.bf16.mxu0 0
      %1895 = vmatpush1.bf16.msra.mxu0 0
      %1896 = vmatprep.subr.bf16.mxu0 0
      %1897 = vmatpush1.bf16.msra.mxu0 0
      %1898 = vmatprep.subr.bf16.mxu0 0
      %1899 = vmatpush1.bf16.msra.mxu0 0
      %1900 = vmatprep.subr.bf16.mxu0 0
      %1901 = vmatpush1.bf16.msra.mxu0 0
      %1902 = vmatprep.subr.bf16.mxu0 0
      %1903 = vmatpush1.bf16.msra.mxu0 0
      %1904 = vmatprep.subr.bf16.mxu0 0
      %1905 = vmatpush1.bf16.msra.mxu0 0
      %1906 = vmatprep.subr.bf16.mxu0 0
      %1907 = vmatpush1.bf16.msra.mxu0 0
      %1908 = vmatprep.mubr.bf16.mxu0 0
      %1909 = vmatmul.mubr.bf16.gmra.mrb[0].mxu0 %v1868
      %v1910 = vpop.f32.mrb[0].mxu0
      %v1911 = vadd.f32 0.0, %v1910
      %v1912 = vpop.f32.mrb[0].mxu0
      %v1913 = vadd.f32 0.0, %v1912
      %v1914 = vpop.f32.mrb[0].mxu0
      %v1915 = vpop.f32.mrb[0].mxu0
      %1916 = vdwg.mxu0
      %v1917 = vadd.f32 %v1782, %v1911
      %v1918 = vadd.f32 %v1784, %v1913
      %v1919 = vld [vmem:[%s563 + $0x128] sm:$0xcc]
      %v1920 = vld [vmem:[%s563 + $0x130] sm:$0xff]
      %v1921 = vld [vmem:[%s563 + $0x138] sm:$0xff]
      %v1922 = vld [vmem:[%s563 + $0x140] sm:$0xff]
      %v1923 = vld [vmem:[%s563 + $0x148] sm:$0xff]
      %v1924 = vld [vmem:[%s563 + $0x150] sm:$0xff]
      %v1925 = vld [vmem:[%s563 + $0x158] sm:$0xff]
      %v1926 = vld [vmem:[%s563 + $0x160] sm:$0xff]
      %v1927 = vld [vmem:[%s563 + $0x168] sm:$0xff]
      %v1928 = vld [vmem:[%s563 + $0x170] sm:$0xff]
      %v1929 = vld [vmem:[%s563 + $0x178] sm:$0xff]
      %v1930 = vld [vmem:[%s563 + $0x180] sm:$0xff]
      %v1931 = vld [vmem:[%s563 + $0x188] sm:$0xff]
      %v1932 = vrot.slane %v1499, 6
      %v1946 = vunpack.c.l.b16 %v1919
      %v1947 = vunpack.c.h.b16 %v1919
      %v1948 = vunpack.c.l.b16 %v1920
      %v1949 = vunpack.c.h.b16 %v1920
      %v1950 = vunpack.c.l.b16 %v1921
      %v1951 = vunpack.c.h.b16 %v1921
      %v1952 = vunpack.c.l.b16 %v1922
      %v1953 = vunpack.c.h.b16 %v1922
      %v1954 = vunpack.c.l.b16 %v1923
      %v1955 = vunpack.c.h.b16 %v1923
      %v1956 = vunpack.c.l.b16 %v1924
      %v1957 = vunpack.c.h.b16 %v1924
      %v1958 = vunpack.c.l.b16 %v1925
      %v1959 = vunpack.c.h.b16 %v1925
      %v1960 = vunpack.c.l.b16 %v1926
      %v1961 = vunpack.c.h.b16 %v1926
      %v1962 = vunpack.c.l.b16 %v1927
      %v1963 = vunpack.c.h.b16 %v1927
      %v1964 = vunpack.c.l.b16 %v1928
      %v1965 = vunpack.c.h.b16 %v1928
      %v1966 = vunpack.c.l.b16 %v1929
      %v1967 = vunpack.c.h.b16 %v1929
      %v1968 = vunpack.c.l.b16 %v1930
      %v1969 = vunpack.c.h.b16 %v1930
      %v1970 = vunpack.c.l.b16 %v1931
      %v1971 = vunpack.c.h.b16 %v1931
      %v1972 = vpack.c.b16 %v1948, %v1946
      %v1973 = vpack.c.b16 %v1949, %v1947
      %v1974 = vpack.c.b16 %v1952, %v1950
      %v1975 = vpack.c.b16 %v1953, %v1951
      %v1976 = vpack.c.b16 %v1956, %v1954
      %v1977 = vpack.c.b16 %v1957, %v1955
      %v1978 = vpack.c.b16 %v1960, %v1958
      %v1979 = vpack.c.b16 %v1961, %v1959
      %v1980 = vpack.c.b16 %v1964, %v1962
      %v1981 = vpack.c.b16 %v1965, %v1963
      %v1982 = vpack.c.b16 %v1968, %v1966
      %v1983 = vpack.c.b16 %v1969, %v1967
      %v1984 = vpack.c.b16 %v1970, %v1970
      %v1985 = vpack.c.b16 %v1971, %v1971
      %v1986 = vrot.slane %v1972, 2
      %v1987 = vrot.slane %v1974, 2
      %v1988 = vsel %vm1582, %v1986, %v1987
      %v1989 = vrot.slane %v1973, 2
      %v1990 = vrot.slane %v1975, 2
      %v1991 = vsel %vm1582, %v1989, %v1990
      %v1992 = vrot.slane %v1976, 2
      %v1993 = vsel %vm1582, %v1987, %v1992
      %v1994 = vrot.slane %v1977, 2
      %v1995 = vsel %vm1582, %v1990, %v1994
      %v1996 = vrot.slane %v1978, 2
      %v1997 = vsel %vm1582, %v1992, %v1996
      %v1998 = vrot.slane %v1979, 2
      %v1999 = vsel %vm1582, %v1994, %v1998
      %v2000 = vrot.slane %v1980, 2
      %v2001 = vsel %vm1582, %v1996, %v2000
      %v2002 = vrot.slane %v1981, 2
      %v2003 = vsel %vm1582, %v1998, %v2002
      %v2004 = vrot.slane %v1982, 2
      %v2005 = vsel %vm1582, %v2000, %v2004
      %v2006 = vrot.slane %v1983, 2
      %v2007 = vsel %vm1582, %v2002, %v2006
      %v2008 = vrot.slane %v1984, 2
      %v2009 = vsel %vm1582, %v2004, %v2008
      %v2010 = vrot.slane %v1985, 2
      %v2011 = vsel %vm1582, %v2006, %v2010
      %v2025 = vsel %vm1621, %v1932, 0
      %v2028 = vsel %vm1625, %v2008, 0
      %v2031 = vsel %vm1625, %v2010, 0
      %2033 = vmatprep.subr.bf16.mxu0 %v1991
      %2034 = vmatpush1.bf16.msra.mxu0 %v1988
      %2035 = vmatprep.subr.bf16.mxu0 %v1995
      %2036 = vmatpush1.bf16.msra.mxu0 %v1993
      %2037 = vmatprep.subr.bf16.mxu0 %v1999
      %2038 = vmatpush1.bf16.msra.mxu0 %v1997
      %2039 = vmatprep.subr.bf16.mxu0 %v2003
      %2040 = vmatpush1.bf16.msra.mxu0 %v2001
      %2041 = vmatprep.subr.bf16.mxu0 %v2007
      %2042 = vmatpush1.bf16.msra.mxu0 %v2005
      %2043 = vmatprep.subr.bf16.mxu0 %v2011
      %2044 = vmatpush1.bf16.msra.mxu0 %v2009
      %2045 = vmatprep.subr.bf16.mxu0 %v2031
      %2046 = vmatpush1.bf16.msra.mxu0 %v2028
      %2047 = vmatprep.subr.bf16.mxu0 0
      %2048 = vmatpush1.bf16.msra.mxu0 0
      %2049 = vmatprep.subr.bf16.mxu0 0
      %2050 = vmatpush1.bf16.msra.mxu0 0
      %2051 = vmatprep.subr.bf16.mxu0 0
      %2052 = vmatpush1.bf16.msra.mxu0 0
      %2053 = vmatprep.subr.bf16.mxu0 0
      %2054 = vmatpush1.bf16.msra.mxu0 0
      %2055 = vmatprep.subr.bf16.mxu0 0
      %2056 = vmatpush1.bf16.msra.mxu0 0
      %2057 = vmatprep.subr.bf16.mxu0 0
      %2058 = vmatpush1.bf16.msra.mxu0 0
      %2059 = vmatprep.subr.bf16.mxu0 0
      %2060 = vmatpush1.bf16.msra.mxu0 0
      %2061 = vmatprep.subr.bf16.mxu0 0
      %2062 = vmatpush1.bf16.msra.mxu0 0
      %2063 = vmatprep.subr.bf16.mxu0 0
      %2064 = vmatpush1.bf16.msra.mxu0 0
      %2065 = vmatprep.mubr.bf16.mxu0 0
      %2066 = vmatmul.mubr.bf16.gmra.mrb[0].mxu0 %v2025
      %v2067 = vpop.f32.mrb[0].mxu0
      %v2068 = vadd.f32 0.0, %v2067
      %v2069 = vpop.f32.mrb[0].mxu0
      %v2070 = vadd.f32 0.0, %v2069
      %v2071 = vpop.f32.mrb[0].mxu0
      %v2072 = vpop.f32.mrb[0].mxu0
      %2073 = vdwg.mxu0
      %v2074 = vadd.f32 %v1917, %v2068
      %v2075 = vadd.f32 %v1918, %v2070
      %v2076 = vld [vmem:[%s563 + $0x190] sm:$0xff]
      %v2077 = vld [vmem:[%s563 + $0x198] sm:$0xff]
      %v2078 = vld [vmem:[%s563 + $0x1a0] sm:$0xff]
      %v2079 = vld [vmem:[%s563 + $0x1a8] sm:$0xff]
      %v2080 = vld [vmem:[%s563 + $0x1b0] sm:$0xff]
      %v2081 = vld [vmem:[%s563 + $0x1b8] sm:$0xff]
      %v2082 = vld [vmem:[%s563 + $0x1c0] sm:$0xff]
      %v2083 = vld [vmem:[%s563 + $0x1c8] sm:$0xff]
      %v2084 = vld [vmem:[%s563 + $0x1d0] sm:$0xff]
      %v2085 = vld [vmem:[%s563 + $0x1d8] sm:$0xff]
      %v2086 = vld [vmem:[%s563 + $0x1e0] sm:$0xff]
      %v2087 = vld [vmem:[%s563 + $0x1e8] sm:$0xff]
      %v2088 = vld [vmem:[%s563 + $0x1f0] sm:$0x33]
      %v2102 = vunpack.c.l.b16 %v2076
      %v2103 = vunpack.c.h.b16 %v2076
      %v2104 = vunpack.c.l.b16 %v2077
      %v2105 = vunpack.c.h.b16 %v2077
      %v2106 = vunpack.c.l.b16 %v2078
      %v2107 = vunpack.c.h.b16 %v2078
      %v2108 = vunpack.c.l.b16 %v2079
      %v2109 = vunpack.c.h.b16 %v2079
      %v2110 = vunpack.c.l.b16 %v2080
      %v2111 = vunpack.c.h.b16 %v2080
      %v2112 = vunpack.c.l.b16 %v2081
      %v2113 = vunpack.c.h.b16 %v2081
      %v2114 = vunpack.c.l.b16 %v2082
      %v2115 = vunpack.c.h.b16 %v2082
      %v2116 = vunpack.c.l.b16 %v2083
      %v2117 = vunpack.c.h.b16 %v2083
      %v2118 = vunpack.c.l.b16 %v2084
      %v2119 = vunpack.c.h.b16 %v2084
      %v2120 = vunpack.c.l.b16 %v2085
      %v2121 = vunpack.c.h.b16 %v2085
      %v2122 = vunpack.c.l.b16 %v2086
      %v2123 = vunpack.c.h.b16 %v2086
      %v2124 = vunpack.c.l.b16 %v2087
      %v2125 = vunpack.c.h.b16 %v2087
      %v2126 = vunpack.c.l.b16 %v2088
      %v2127 = vunpack.c.h.b16 %v2088
      %v2128 = vpack.c.b16 %v2104, %v2102
      %v2129 = vpack.c.b16 %v2105, %v2103
      %v2130 = vpack.c.b16 %v2108, %v2106
      %v2131 = vpack.c.b16 %v2109, %v2107
      %v2132 = vpack.c.b16 %v2112, %v2110
      %v2133 = vpack.c.b16 %v2113, %v2111
      %v2134 = vpack.c.b16 %v2116, %v2114
      %v2135 = vpack.c.b16 %v2117, %v2115
      %v2136 = vpack.c.b16 %v2120, %v2118
      %v2137 = vpack.c.b16 %v2121, %v2119
      %v2138 = vpack.c.b16 %v2124, %v2122
      %v2139 = vpack.c.b16 %v2125, %v2123
      %v2140 = vpack.c.b16 %v2126, %v2126
      %v2141 = vpack.c.b16 %v2127, %v2127
      %v2155 = vsel %vm1621, %v1500, 0
      %v2158 = vsel %vm1625, %v2140, 0
      %v2161 = vsel %vm1625, %v2141, 0
      %2163 = vmatprep.subr.bf16.mxu0 %v2129
      %2164 = vmatpush1.bf16.msra.mxu0 %v2128
      %2165 = vmatprep.subr.bf16.mxu0 %v2131
      %2166 = vmatpush1.bf16.msra.mxu0 %v2130
      %2167 = vmatprep.subr.bf16.mxu0 %v2133
      %2168 = vmatpush1.bf16.msra.mxu0 %v2132
      %2169 = vmatprep.subr.bf16.mxu0 %v2135
      %2170 = vmatpush1.bf16.msra.mxu0 %v2134
      %2171 = vmatprep.subr.bf16.mxu0 %v2137
      %2172 = vmatpush1.bf16.msra.mxu0 %v2136
      %2173 = vmatprep.subr.bf16.mxu0 %v2139
      %2174 = vmatpush1.bf16.msra.mxu0 %v2138
      %2175 = vmatprep.subr.bf16.mxu0 %v2161
      %2176 = vmatpush1.bf16.msra.mxu0 %v2158
      %2177 = vmatprep.subr.bf16.mxu0 0
      %2178 = vmatpush1.bf16.msra.mxu0 0
      %2179 = vmatprep.subr.bf16.mxu0 0
      %2180 = vmatpush1.bf16.msra.mxu0 0
      %2181 = vmatprep.subr.bf16.mxu0 0
      %2182 = vmatpush1.bf16.msra.mxu0 0
      %2183 = vmatprep.subr.bf16.mxu0 0
      %2184 = vmatpush1.bf16.msra.mxu0 0
      %2185 = vmatprep.subr.bf16.mxu0 0
      %2186 = vmatpush1.bf16.msra.mxu0 0
      %2187 = vmatprep.subr.bf16.mxu0 0
      %2188 = vmatpush1.bf16.msra.mxu0 0
      %2189 = vmatprep.subr.bf16.mxu0 0
      %2190 = vmatpush1.bf16.msra.mxu0 0
      %2191 = vmatprep.subr.bf16.mxu0 0
      %2192 = vmatpush1.bf16.msra.mxu0 0
      %2193 = vmatprep.subr.bf16.mxu0 0
      %2194 = vmatpush1.bf16.msra.mxu0 0
      %2195 = vmatprep.mubr.bf16.mxu0 0
      %2196 = vmatmul.mubr.bf16.gmra.mrb[0].mxu0 %v2155
      %v2197 = vpop.f32.mrb[0].mxu0
      %v2198 = vadd.f32 0.0, %v2197
      %v2199 = vpop.f32.mrb[0].mxu0
      %v2200 = vadd.f32 0.0, %v2199
      %v2201 = vpop.f32.mrb[0].mxu0
      %v2202 = vpop.f32.mrb[0].mxu0
      %2203 = vdwg.mxu0
      %v2204 = vadd.f32 %v2074, %v2198
      %v2205 = vadd.f32 %v2075, %v2200
      %v2206 = vld [vmem:[%s563 + $0x1f0] sm:$0xcc]
      %v2207 = vld [vmem:[%s563 + $0x1f8] sm:$0xff]
      %v2208 = vld [vmem:[%s563 + $0x200] sm:$0xff]
      %v2209 = vld [vmem:[%s563 + $0x208] sm:$0xff]
      %v2210 = vld [vmem:[%s563 + $0x210] sm:$0xff]
      %v2211 = vld [vmem:[%s563 + $0x218] sm:$0xff]
      %v2212 = vld [vmem:[%s563 + $0x220] sm:$0xff]
      %v2213 = vld [vmem:[%s563 + $0x228] sm:$0xff]
      %v2214 = vld [vmem:[%s563 + $0x230] sm:$0xff]
      %v2215 = vld [vmem:[%s563 + $0x238] sm:$0xff]
      %v2216 = vld [vmem:[%s563 + $0x240] sm:$0xff]
      %v2217 = vld [vmem:[%s563 + $0x248] sm:$0xff]
      %v2218 = vld [vmem:[%s563 + $0x250] sm:$0xff]
      %v2220 = vrot.slane %v1500, 2
      %v2234 = vunpack.c.l.b16 %v2206
      %v2235 = vunpack.c.h.b16 %v2206
      %v2236 = vunpack.c.l.b16 %v2207
      %v2237 = vunpack.c.h.b16 %v2207
      %v2238 = vunpack.c.l.b16 %v2208
      %v2239 = vunpack.c.h.b16 %v2208
      %v2240 = vunpack.c.l.b16 %v2209
      %v2241 = vunpack.c.h.b16 %v2209
      %v2242 = vunpack.c.l.b16 %v2210
      %v2243 = vunpack.c.h.b16 %v2210
      %v2244 = vunpack.c.l.b16 %v2211
      %v2245 = vunpack.c.h.b16 %v2211
      %v2246 = vunpack.c.l.b16 %v2212
      %v2247 = vunpack.c.h.b16 %v2212
      %v2248 = vunpack.c.l.b16 %v2213
      %v2249 = vunpack.c.h.b16 %v2213
      %v2250 = vunpack.c.l.b16 %v2214
      %v2251 = vunpack.c.h.b16 %v2214
      %v2252 = vunpack.c.l.b16 %v2215
      %v2253 = vunpack.c.h.b16 %v2215
      %v2254 = vunpack.c.l.b16 %v2216
      %v2255 = vunpack.c.h.b16 %v2216
      %v2256 = vunpack.c.l.b16 %v2217
      %v2257 = vunpack.c.h.b16 %v2217
      %v2258 = vunpack.c.l.b16 %v2218
      %v2259 = vunpack.c.h.b16 %v2218
      %v2260 = vpack.c.b16 %v2236, %v2234
      %v2261 = vpack.c.b16 %v2237, %v2235
      %v2262 = vpack.c.b16 %v2240, %v2238
      %v2263 = vpack.c.b16 %v2241, %v2239
      %v2264 = vpack.c.b16 %v2244, %v2242
      %v2265 = vpack.c.b16 %v2245, %v2243
      %v2266 = vpack.c.b16 %v2248, %v2246
      %v2267 = vpack.c.b16 %v2249, %v2247
      %v2268 = vpack.c.b16 %v2252, %v2250
      %v2269 = vpack.c.b16 %v2253, %v2251
      %v2270 = vpack.c.b16 %v2256, %v2254
      %v2271 = vpack.c.b16 %v2257, %v2255
      %v2272 = vpack.c.b16 %v2258, %v2258
      %v2273 = vpack.c.b16 %v2259, %v2259
      %v2274 = vrot.slane %v2260, 2
      %v2275 = vrot.slane %v2262, 2
      %v2276 = vsel %vm1582, %v2274, %v2275
      %v2277 = vrot.slane %v2261, 2
      %v2278 = vrot.slane %v2263, 2
      %v2279 = vsel %vm1582, %v2277, %v2278
      %v2280 = vrot.slane %v2264, 2
      %v2281 = vsel %vm1582, %v2275, %v2280
      %v2282 = vrot.slane %v2265, 2
      %v2283 = vsel %vm1582, %v2278, %v2282
      %v2284 = vrot.slane %v2266, 2
      %v2285 = vsel %vm1582, %v2280, %v2284
      %v2286 = vrot.slane %v2267, 2
      %v2287 = vsel %vm1582, %v2282, %v2286
      %v2288 = vrot.slane %v2268, 2
      %v2289 = vsel %vm1582, %v2284, %v2288
      %v2290 = vrot.slane %v2269, 2
      %v2291 = vsel %vm1582, %v2286, %v2290
      %v2292 = vrot.slane %v2270, 2
      %v2293 = vsel %vm1582, %v2288, %v2292
      %v2294 = vrot.slane %v2271, 2
      %v2295 = vsel %vm1582, %v2290, %v2294
      %v2296 = vrot.slane %v2272, 2
      %v2297 = vsel %vm1582, %v2292, %v2296
      %v2298 = vrot.slane %v2273, 2
      %v2299 = vsel %vm1582, %v2294, %v2298
      %v2313 = vsel %vm1621, %v2220, 0
      %v2316 = vsel %vm1625, %v2296, 0
      %v2319 = vsel %vm1625, %v2298, 0
      %2321 = vmatprep.subr.bf16.mxu0 %v2279
      %2322 = vmatpush1.bf16.msra.mxu0 %v2276
      %2323 = vmatprep.subr.bf16.mxu0 %v2283
      %2324 = vmatpush1.bf16.msra.mxu0 %v2281
      %2325 = vmatprep.subr.bf16.mxu0 %v2287
      %2326 = vmatpush1.bf16.msra.mxu0 %v2285
      %2327 = vmatprep.subr.bf16.mxu0 %v2291
      %2328 = vmatpush1.bf16.msra.mxu0 %v2289
      %2329 = vmatprep.subr.bf16.mxu0 %v2295
      %2330 = vmatpush1.bf16.msra.mxu0 %v2293
      %2331 = vmatprep.subr.bf16.mxu0 %v2299
      %2332 = vmatpush1.bf16.msra.mxu0 %v2297
      %2333 = vmatprep.subr.bf16.mxu0 %v2319
      %2334 = vmatpush1.bf16.msra.mxu0 %v2316
      %2335 = vmatprep.subr.bf16.mxu0 0
      %2336 = vmatpush1.bf16.msra.mxu0 0
      %2337 = vmatprep.subr.bf16.mxu0 0
      %2338 = vmatpush1.bf16.msra.mxu0 0
      %2339 = vmatprep.subr.bf16.mxu0 0
      %2340 = vmatpush1.bf16.msra.mxu0 0
      %2341 = vmatprep.subr.bf16.mxu0 0
      %2342 = vmatpush1.bf16.msra.mxu0 0
      %2343 = vmatprep.subr.bf16.mxu0 0
      %2344 = vmatpush1.bf16.msra.mxu0 0
      %2345 = vmatprep.subr.bf16.mxu0 0
      %2346 = vmatpush1.bf16.msra.mxu0 0
      %2347 = vmatprep.subr.bf16.mxu0 0
      %2348 = vmatpush1.bf16.msra.mxu0 0
      %2349 = vmatprep.subr.bf16.mxu0 0
      %2350 = vmatpush1.bf16.msra.mxu0 0
      %2351 = vmatprep.subr.bf16.mxu0 0
      %2352 = vmatpush1.bf16.msra.mxu0 0
      %2353 = vmatprep.mubr.bf16.mxu0 0
      %2354 = vmatmul.mubr.bf16.gmra.mrb[0].mxu0 %v2313
      %v2355 = vpop.f32.mrb[0].mxu0
      %v2356 = vadd.f32 0.0, %v2355
      %v2357 = vpop.f32.mrb[0].mxu0
      %v2358 = vadd.f32 0.0, %v2357
      %v2359 = vpop.f32.mrb[0].mxu0
      %v2360 = vpop.f32.mrb[0].mxu0
      %2361 = vdwg.mxu0
      %v2362 = vadd.f32 %v2204, %v2356
      %v2363 = vadd.f32 %v2205, %v2358
      %v2364 = vld [vmem:[%s567] sm:$0x3]
      %v2366 = vlaneseq
      %v2367 = vshrl.u32 %v2366, 7
      %v2368 = vsub.s32 0, %v2367
      %v2369 = vrot.slane %v2364, %v2368
      %v2370 = vlaneseq
      %v2371 = vshrl.u32 %v2370, 7
      %v2372 = vsub.s32 1, %v2371
      %v2373 = vrot.slane %v2364, %v2372
      %v2376 = vadd.f32 %v2362, %v2369
      %v2377 = vadd.f32 %v2363, %v2373
      %v2378 = vmax.f32 %v2376, 0.0
      %v2379 = vmax.f32 %v2377, 0.0
      %v2380 = vld [vmem:[%s571] sm:$0x3]
      %v2381 = vld [vmem:[%s575] sm:$0x3]
      %v2382 = vsel %vm1251, %v2378, 0.0
      %v2383 = vrot.slane %v2382, 4
      %v2384 = vadd.f32 %v2382, %v2383
      %v2385 = vrot.slane %v2384, 2
      %v2386 = vadd.f32 %v2384, %v2385
      %v2387 = vrot.slane %v2386, 1
      %v2388 = vadd.f32 %v2386, %v2387
      %v2389 = vsel %vm1251, %v2379, 0.0
      %v2390 = vrot.slane %v2389, 4
      %v2391 = vadd.f32 %v2389, %v2390
      %v2392 = vrot.slane %v2391, 2
      %v2393 = vadd.f32 %v2391, %v2392
      %v2394 = vrot.slane %v2393, 1
      %v2395 = vadd.f32 %v2393, %v2394
      %v2396 = vrcp.pop 4.0
      %v2397 = vmul.f32 %v2388, %v2396
      %v2398 = vmul.f32 %v2395, %v2396
      %v2399 = vsub.f32 %v2378, %v2397
      %v2400 = vsub.f32 %v2379, %v2398
      %v2401 = vmul.f32 %v2399, %v2399
      %v2402 = vmul.f32 %v2400, %v2400
      %v2403 = vsel %vm1251, %v2401, 0.0
      %v2404 = vrot.slane %v2403, 4
      %v2405 = vadd.f32 %v2403, %v2404
      %v2406 = vrot.slane %v2405, 2
      %v2407 = vadd.f32 %v2405, %v2406
      %v2408 = vrot.slane %v2407, 1
      %v2409 = vadd.f32 %v2407, %v2408
      %v2410 = vsel %vm1251, %v2402, 0.0
      %v2411 = vrot.slane %v2410, 4
      %v2412 = vadd.f32 %v2410, %v2411
      %v2413 = vrot.slane %v2412, 2
      %v2414 = vadd.f32 %v2412, %v2413
      %v2415 = vrot.slane %v2414, 1
      %v2416 = vadd.f32 %v2414, %v2415
      %v2417 = vmul.f32 %v2409, %v2396
      %v2418 = vmul.f32 %v2416, %v2396
      %v2419 = vadd.f32 %v2417, 1e-05
      %v2420 = vadd.f32 %v2418, 1e-05
      %v2421 = vrsqrt.pop %v2419
      %v2422 = vrsqrt.pop %v2420
      %v2423 = vmul.f32 %v2399, %v2421
      %v2424 = vmul.f32 %v2400, %v2422
      %v2426 = vlaneseq
      %v2427 = vshrl.u32 %v2426, 7
      %v2428 = vsub.s32 0, %v2427
      %v2429 = vrot.slane %v2380, %v2428
      %v2430 = vlaneseq
      %v2431 = vshrl.u32 %v2430, 7
      %v2432 = vsub.s32 1, %v2431
      %v2433 = vrot.slane %v2380, %v2432
      %v2436 = vmul.f32 %v2423, %v2429
      %v2437 = vmul.f32 %v2424, %v2433
      %v2439 = vlaneseq
      %v2440 = vshrl.u32 %v2439, 7
      %v2441 = vsub.s32 0, %v2440
      %v2442 = vrot.slane %v2381, %v2441
      %v2443 = vlaneseq
      %v2444 = vshrl.u32 %v2443, 7
      %v2445 = vsub.s32 1, %v2444
      %v2446 = vrot.slane %v2381, %v2445
      %v2449 = vadd.f32 %v2436, %v2442
      %v2450 = vadd.f32 %v2437, %v2446
      %v2451 = vpack.c.bf16 %v2449, %v2449
      %v2452 = vpack.c.bf16 %v2450, %v2450
      %v2453 = vld [vmem:[%s580] sm:$0xf]
      %v2454 = vld [vmem:[%s580 + $0x4] sm:$0xf]
      %v2455 = vld [vmem:[%s580 + $0x8] sm:$0xf]
      %v2456 = vld [vmem:[%s580 + $0xc] sm:$0xf]
      %v2457 = vld [vmem:[%s580 + $0x10] sm:$0xf]
      %v2458 = vld [vmem:[%s580 + $0x14] sm:$0xf]
      %v2459 = vld [vmem:[%s580 + $0x18] sm:$0xf]
      %v2460 = vld [vmem:[%s580 + $0x1c] sm:$0xf]
      %v2461 = vld [vmem:[%s580 + $0x20] sm:$0xf]
      %v2462 = vld [vmem:[%s580 + $0x24] sm:$0xf]
      %v2463 = vld [vmem:[%s580 + $0x28] sm:$0xf]
      %v2464 = vld [vmem:[%s580 + $0x2c] sm:$0xf]
      %v2465 = vld [vmem:[%s580 + $0x30] sm:$0xf]
      %v2466 = vld [vmem:[%s580 + $0x34] sm:$0xf]
      %v2467 = vld [vmem:[%s580 + $0x38] sm:$0xf]
      %v2468 = vld [vmem:[%s580 + $0x3c] sm:$0xf]
      %v2469 = vld [vmem:[%s580 + $0x40] sm:$0xf]
      %v2470 = vld [vmem:[%s580 + $0x44] sm:$0xf]
      %v2471 = vld [vmem:[%s580 + $0x48] sm:$0xf]
      %v2472 = vld [vmem:[%s580 + $0x4c] sm:$0xf]
      %v2473 = vld [vmem:[%s580 + $0x50] sm:$0xf]
      %v2474 = vld [vmem:[%s580 + $0x54] sm:$0xf]
      %v2475 = vld [vmem:[%s580 + $0x58] sm:$0xf]
      %v2476 = vld [vmem:[%s580 + $0x5c] sm:$0xf]
      %v2477 = vld [vmem:[%s580 + $0x60] sm:$0xf]
      %v2478 = vld [vmem:[%s580 + $0x64] sm:$0xf]
      %v2479 = vld [vmem:[%s580 + $0x68] sm:$0xf]
      %v2480 = vld [vmem:[%s580 + $0x6c] sm:$0xf]
      %v2481 = vld [vmem:[%s580 + $0x70] sm:$0xf]
      %v2482 = vld [vmem:[%s580 + $0x74] sm:$0xf]
      %v2483 = vld [vmem:[%s580 + $0x78] sm:$0xf]
      %v2484 = vld [vmem:[%s580 + $0x7c] sm:$0xf]
      %v2485 = vld [vmem:[%s583] sm:$0x1]
      %v2487 = vlaneseq
      %v2488 = vshrl.u32 %v2487, 7
      %v2489 = vsub.s32 0, %v2488
      %v2490 = vrot.slane %v2485, %v2489
      %v2524 = vunpack.c.l.b16 %v2453
      %v2525 = vunpack.c.l.b16 %v2454
      %v2526 = vunpack.c.l.b16 %v2455
      %v2527 = vunpack.c.l.b16 %v2456
      %v2528 = vunpack.c.l.b16 %v2457
      %v2529 = vunpack.c.l.b16 %v2458
      %v2530 = vunpack.c.l.b16 %v2459
      %v2531 = vunpack.c.l.b16 %v2460
      %v2532 = vunpack.c.l.b16 %v2461
      %v2533 = vunpack.c.l.b16 %v2462
      %v2534 = vunpack.c.l.b16 %v2463
      %v2535 = vunpack.c.l.b16 %v2464
      %v2536 = vunpack.c.l.b16 %v2465
      %v2537 = vunpack.c.l.b16 %v2466
      %v2538 = vunpack.c.l.b16 %v2467
      %v2539 = vunpack.c.l.b16 %v2468
      %v2540 = vunpack.c.l.b16 %v2469
      %v2541 = vunpack.c.l.b16 %v2470
      %v2542 = vunpack.c.l.b16 %v2471
      %v2543 = vunpack.c.l.b16 %v2472
      %v2544 = vunpack.c.l.b16 %v2473
      %v2545 = vunpack.c.l.b16 %v2474
      %v2546 = vunpack.c.l.b16 %v2475
      %v2547 = vunpack.c.l.b16 %v2476
      %v2548 = vunpack.c.l.b16 %v2477
      %v2549 = vunpack.c.l.b16 %v2478
      %v2550 = vunpack.c.l.b16 %v2479
      %v2551 = vunpack.c.l.b16 %v2480
      %v2552 = vunpack.c.l.b16 %v2481
      %v2553 = vunpack.c.l.b16 %v2482
      %v2554 = vunpack.c.l.b16 %v2483
      %v2555 = vunpack.c.l.b16 %v2484
      %v2556 = vpack.c.b16 %v2525, %v2524
      %v2557 = vpack.c.b16 %v2527, %v2526
      %v2558 = vpack.c.b16 %v2529, %v2528
      %v2559 = vpack.c.b16 %v2531, %v2530
      %v2560 = vpack.c.b16 %v2533, %v2532
      %v2561 = vpack.c.b16 %v2535, %v2534
      %v2562 = vpack.c.b16 %v2537, %v2536
      %v2563 = vpack.c.b16 %v2539, %v2538
      %v2564 = vpack.c.b16 %v2541, %v2540
      %v2565 = vpack.c.b16 %v2543, %v2542
      %v2566 = vpack.c.b16 %v2545, %v2544
      %v2567 = vpack.c.b16 %v2547, %v2546
      %v2568 = vpack.c.b16 %v2549, %v2548
      %v2569 = vpack.c.b16 %v2551, %v2550
      %v2570 = vpack.c.b16 %v2553, %v2552
      %v2571 = vpack.c.b16 %v2555, %v2554
      %2588 = vmatprep.subr.bf16.mxu0 0
      %2589 = vmatpush1.bf16.msra.mxu0 %v2556
      %2590 = vmatprep.subr.bf16.mxu0 0
      %2591 = vmatpush1.bf16.msra.mxu0 %v2557
      %2592 = vmatprep.subr.bf16.mxu0 0
      %2593 = vmatpush1.bf16.msra.mxu0 %v2558
      %2594 = vmatprep.subr.bf16.mxu0 0
      %2595 = vmatpush1.bf16.msra.mxu0 %v2559
      %2596 = vmatprep.subr.bf16.mxu0 0
      %2597 = vmatpush1.bf16.msra.mxu0 %v2560
      %2598 = vmatprep.subr.bf16.mxu0 0
      %2599 = vmatpush1.bf16.msra.mxu0 %v2561
      %2600 = vmatprep.subr.bf16.mxu0 0
      %2601 = vmatpush1.bf16.msra.mxu0 %v2562
      %2602 = vmatprep.subr.bf16.mxu0 0
      %2603 = vmatpush1.bf16.msra.mxu0 %v2563
      %2604 = vmatprep.subr.bf16.mxu0 0
      %2605 = vmatpush1.bf16.msra.mxu0 %v2564
      %2606 = vmatprep.subr.bf16.mxu0 0
      %2607 = vmatpush1.bf16.msra.mxu0 %v2565
      %2608 = vmatprep.subr.bf16.mxu0 0
      %2609 = vmatpush1.bf16.msra.mxu0 %v2566
      %2610 = vmatprep.subr.bf16.mxu0 0
      %2611 = vmatpush1.bf16.msra.mxu0 %v2567
      %2612 = vmatprep.subr.bf16.mxu0 0
      %2613 = vmatpush1.bf16.msra.mxu0 %v2568
      %2614 = vmatprep.subr.bf16.mxu0 0
      %2615 = vmatpush1.bf16.msra.mxu0 %v2569
      %2616 = vmatprep.subr.bf16.mxu0 0
      %2617 = vmatpush1.bf16.msra.mxu0 %v2570
      %2618 = vmatprep.subr.bf16.mxu0 0
      %2619 = vmatpush1.bf16.msra.mxu0 %v2571
      %2620 = vmatprep.mubr.bf16.mxu0 %v2452
      %2621 = vmatmul.mubr.bf16.gmra.mrb[0].mxu0 %v2451
      %v2622 = vpop.f32.mrb[0].mxu0
      %v2623 = vadd.f32 %v2490, %v2622
      %v2624 = vpop.f32.mrb[0].mxu0
      %v2625 = vpop.f32.mrb[0].mxu0
      %v2626 = vpop.f32.mrb[0].mxu0
      %2627 = vdwg.mxu0
      %v2628 = vmax.f32 %v2623, 0.0
      %v2629 = vld [vmem:[%s586] sm:$0x1]
      %v2630 = vld [vmem:[%s589] sm:$0x1]
      %vm2631 = vcmask 519168
      %v2632 = vsel %vm2631, %v2628, 0.0
      %v2633 = vrot.slane %v2632, 4
      %v2634 = vadd.f32 %v2632, %v2633
      %v2635 = vrot.slane %v2634, 2
      %v2636 = vadd.f32 %v2634, %v2635
      %v2637 = vrot.slane %v2636, 1
      %v2638 = vadd.f32 %v2636, %v2637
      %v2639 = vmul.f32 %v2638, %v2396
      %v2640 = vsub.f32 %v2628, %v2639
      %v2641 = vmul.f32 %v2640, %v2640
      %v2642 = vsel %vm2631, %v2641, 0.0
      %v2643 = vrot.slane %v2642, 4
      %v2644 = vadd.f32 %v2642, %v2643
      %v2645 = vrot.slane %v2644, 2
      %v2646 = vadd.f32 %v2644, %v2645
      %v2647 = vrot.slane %v2646, 1
      %v2648 = vadd.f32 %v2646, %v2647
      %v2649 = vmul.f32 %v2648, %v2396
      %v2650 = vadd.f32 %v2649, 1e-05
      %v2651 = vrsqrt.pop %v2650
      %v2652 = vmul.f32 %v2640, %v2651
      %v2654 = vlaneseq
      %v2655 = vshrl.u32 %v2654, 7
      %v2656 = vsub.s32 0, %v2655
      %v2657 = vrot.slane %v2629, %v2656
      %v2659 = vmul.f32 %v2652, %v2657
      %v2661 = vlaneseq
      %v2662 = vshrl.u32 %v2661, 7
      %v2663 = vsub.s32 0, %v2662
      %v2664 = vrot.slane %v2630, %v2663
      %v2666 = vadd.f32 %v2659, %v2664
      %v2667 = vpack.c.bf16 %v2666, %v2666
      %v2668 = vld [vmem:[%s594] sm:$0xf]
      %v2669 = vld [vmem:[%s594 + $0x4] sm:$0xf]
      %v2670 = vld [vmem:[%s594 + $0x8] sm:$0xf]
      %v2671 = vld [vmem:[%s594 + $0xc] sm:$0xf]
      %v2672 = vld [vmem:[%s594 + $0x10] sm:$0xf]
      %v2673 = vld [vmem:[%s594 + $0x14] sm:$0xf]
      %v2674 = vld [vmem:[%s594 + $0x18] sm:$0xf]
      %v2675 = vld [vmem:[%s594 + $0x1c] sm:$0xf]
      %v2684 = vunpack.c.l.b16 %v2668
      %v2685 = vunpack.c.l.b16 %v2669
      %v2686 = vunpack.c.l.b16 %v2670
      %v2687 = vunpack.c.l.b16 %v2671
      %v2688 = vunpack.c.l.b16 %v2672
      %v2689 = vunpack.c.l.b16 %v2673
      %v2690 = vunpack.c.l.b16 %v2674
      %v2691 = vunpack.c.l.b16 %v2675
      %v2692 = vpack.c.b16 %v2685, %v2684
      %v2693 = vpack.c.b16 %v2687, %v2686
      %v2694 = vpack.c.b16 %v2689, %v2688
      %v2695 = vpack.c.b16 %v2691, %v2690
      %vm2700 = vcmask 523264
      %v2702 = vsel %vm2700, %v2667, 0
      %2704 = vmatprep.subr.bf16.mxu0 0
      %2705 = vmatpush1.bf16.msra.mxu0 %v2692
      %2706 = vmatprep.subr.bf16.mxu0 0
      %2707 = vmatpush1.bf16.msra.mxu0 %v2693
      %2708 = vmatprep.subr.bf16.mxu0 0
      %2709 = vmatpush1.bf16.msra.mxu0 %v2694
      %2710 = vmatprep.subr.bf16.mxu0 0
      %2711 = vmatpush1.bf16.msra.mxu0 %v2695
      %2712 = vmatprep.subr.bf16.mxu0 0
      %2713 = vmatpush1.bf16.msra.mxu0 0
      %2714 = vmatprep.subr.bf16.mxu0 0
      %2715 = vmatpush1.bf16.msra.mxu0 0
      %2716 = vmatprep.subr.bf16.mxu0 0
      %2717 = vmatpush1.bf16.msra.mxu0 0
      %2718 = vmatprep.subr.bf16.mxu0 0
      %2719 = vmatpush1.bf16.msra.mxu0 0
      %2720 = vmatprep.subr.bf16.mxu0 0
      %2721 = vmatpush1.bf16.msra.mxu0 0
      %2722 = vmatprep.subr.bf16.mxu0 0
      %2723 = vmatpush1.bf16.msra.mxu0 0
      %2724 = vmatprep.subr.bf16.mxu0 0
      %2725 = vmatpush1.bf16.msra.mxu0 0
      %2726 = vmatprep.subr.bf16.mxu0 0
      %2727 = vmatpush1.bf16.msra.mxu0 0
      %2728 = vmatprep.subr.bf16.mxu0 0
      %2729 = vmatpush1.bf16.msra.mxu0 0
      %2730 = vmatprep.subr.bf16.mxu0 0
      %2731 = vmatpush1.bf16.msra.mxu0 0
      %2732 = vmatprep.subr.bf16.mxu0 0
      %2733 = vmatpush1.bf16.msra.mxu0 0
      %2734 = vmatprep.subr.bf16.mxu0 0
      %2735 = vmatpush1.bf16.msra.mxu0 0
      %2736 = vmatprep.mubr.bf16.mxu0 0
      %2737 = vmatmul.mubr.bf16.gmra.mrb[0].mxu0 %v2702
      %v2738 = vpop.f32.mrb[0].mxu0
      %v2739 = vadd.f32 0.0, %v2738
      %v2740 = vpop.f32.mrb[0].mxu0
      %v2741 = vpop.f32.mrb[0].mxu0
      %v2742 = vpop.f32.mrb[0].mxu0
      %2743 = vdwg.mxu0
      %vm2744 = vcmask 27648
      %2745 = vst.msk [vmem:[%s598] sm:$0xf] %vm2744, %v2739
      %p2746 = scmp.lt.s32.totalorder %s23, 1
      %s2747 = scalar_select %p2746, %s23, 1
      %s2748 = smul.addr %s2747, 4
      %s2749 = scalar_lea.vmem %s12, %s2748
      // Predicated region
      $region69: #{teacher_forward.3} parent=67 // pred_check
        %p2750 = pneg %p353
      $region70: #{teacher_forward.3} parent=67 // pred_check_branch
        %2752 = sbr.rel (%p2750) target = $region72
      $region71: #{teacher_forward.3} parent=67 // pred_region
        _
      $region72: #{teacher_forward.3} parent=67 // pred_fallthru
        _
    $region68: #{teacher_forward.3} parent=5 // pred_fallthru
      _
    %p2753 = scmp.le.s32.totalorder 2, %s18
    // Predicated region
    $region73: #{teacher_forward.3} parent=5 // pred_check
      %p2754 = pneg %p2753
    $region74: #{teacher_forward.3} parent=5 // pred_check_branch
      %2756 = sbr.rel (%p2754) target = $region76
    $region75: #{teacher_forward.3} parent=5 // pred_region
      %s2757 = ssub.s32 %s18, 2
      // Predicated region
      $region77: #{teacher_forward.3} parent=75 // pred_check
        %p2758 = pneg %p359
      $region78: #{teacher_forward.3} parent=75 // pred_check_branch
        %2760 = sbr.rel (%p2758) target = $region80
      $region79: #{teacher_forward.3} parent=75 // pred_region
        %p2761 = scmp.lt.s32.totalorder %s24, 1
        %s2762 = scalar_select %p2761, %s24, 1
        %s2763 = smul.addr %s2762, 4
        %s2764 = scalar_lea.vmem %s12, %s2763
      $region80: #{teacher_forward.3} parent=75 // pred_fallthru
        _
    $region76: #{teacher_forward.3} parent=5 // pred_fallthru
      _
  $region6: #{teacher_forward.3} parent=0 // loop_footer
    %s22 = sadd.s32 1, %s18
  $region7: #{teacher_forward.3} parent=0 // loop_footer_branch
    %17 = sbr.rel target = $region3
  $region8: #{teacher_forward.3} parent=0 // loop_exit
    _

</llo_original>
